<compile_context>
chip_gen: v7x
topology: tpu7x:2x2x1
jax: 0.10.0
libtpu: 0.0.40
codegen_flags: <defaults>
</compile_context>

<pallas_src>
import math
from functools import partial

import jax
import jax.numpy as jnp
from jax.experimental import pallas as pl
from jax.experimental.pallas import tpu as pltpu


def _make_kernel(num_heads, exp_dtype):
    bf16 = jnp.bfloat16

    def kernel(x_ref, pos_ref, wqkv_ref, bqkv_ref, wo_ref, bo_ref,
               a1_ref, c1_ref, a2_ref, c2_ref,
               w1_ref, b1_ref, w2_ref, b2_ref, out_ref):
        C, N = x_ref.shape                                   # per-batch block, lanes = N
        hd = C // num_heads

        # matches torch's in-place `tgt += self.position_encoding`
        x = x_ref[...] + pos_ref[...]                        # (C, N) f32
        x_b = x.astype(bf16)

        # fused q/k/v projection, weight-stationary: (3C, C) @ (C, N) -> (3C, N)
        # (1/sqrt(hd) already folded into the q rows of wqkv/bqkv at init)
        qkv = jnp.dot(wqkv_ref[...], x_b,
                      preferred_element_type=jnp.float32) + bqkv_ref[...]   # (3C, N) f32

        q = qkv[0 * C:1 * C, :].reshape(num_heads, hd, N).astype(bf16)
        k = qkv[1 * C:2 * C, :].reshape(num_heads, hd, N).astype(bf16)
        v = qkv[2 * C:3 * C, :].reshape(num_heads, hd, N).astype(bf16)

        # scores: contract over head-dim directly in (h, hd, N) layout (no q transpose)
        s = jnp.einsum('hdq,hdk->hqk', q, k,
                       preferred_element_type=jnp.float32)                  # (h, N, N)
        s = s.astype(exp_dtype)                              # bf16 exp path on v6e/v7x
        p = jnp.exp(s - jnp.max(s, axis=-1, keepdims=True))
        l = jnp.sum(p, axis=-1, dtype=jnp.float32)                           # (h, N) f32

        # PV first, normalize after (row scale commutes with the linear PV matmul)
        pv = jnp.einsum('hdk,hqk->hdq', v, p.astype(bf16),
                        preferred_element_type=jnp.float32)                 # (h, hd, N)
        inv_l = pl.reciprocal(l, approx=True).reshape(num_heads, 1, N)
        attn = (pv * inv_l).reshape(C, N)                                   # (C, N) f32

        # out projection + residual (x already carries the positional encoding)
        y = jnp.dot(wo_ref[...], attn.astype(bf16),
                    preferred_element_type=jnp.float32) + bo_ref[...] + x   # (C, N)

        # eval-mode BatchNorm1 folded to per-channel affine
        n1 = y * a1_ref[...] + c1_ref[...]

        # conv1 (1x1) -> ReLU -> (dropout = identity) -> conv2 (1x1)
        h1 = jnp.dot(w1_ref[...], n1.astype(bf16),
                     preferred_element_type=jnp.float32) + b1_ref[...]      # (F, N)
        h1 = jnp.maximum(h1, 0.0)
        out = jnp.dot(w2_ref[...], h1.astype(bf16),
                      preferred_element_type=jnp.float32) + b2_ref[...]     # (C, N)

        # norm2 residual computed here (not earlier) to keep the live footprint small
        out_ref[...] = out + (y * a2_ref[...] + c2_ref[...])

    return kernel


def memory_attention_forward(tgt_nchw, params, num_heads):
    """tgt_nchw: (B, C, H, W) float32."""
    B, C, H, W = tgt_nchw.shape
    assert C % num_heads == 0
    N = H * W
    Fd = params["w1"].shape[0]

    # free reshape only (no HBM transpose): channel-major (B, C, N) end-to-end
    x_cn = tgt_nchw.reshape(B, C, N)

    # bf16 exp only on chips with bf16 VPU/EUP (v6e / v7x); f32 elsewhere (v5e etc.)
    dk = jax.devices()[0].device_kind.lower()
    exp_dtype = (jnp.bfloat16
                 if any(t in dk for t in ("v6", "v7", "tpu7", "trillium"))
                 else jnp.float32)

    kernel = _make_kernel(num_heads, exp_dtype)

    def _full(shape):  # full-array block, resident across all grid steps
        return pl.BlockSpec(shape, lambda b: (0,) * len(shape))

    grid_spec = pltpu.PrefetchScalarGridSpec(
        num_scalar_prefetch=0,
        grid=(B,),
        in_specs=[
            pl.BlockSpec((None, C, N), lambda b: (b, 0, 0)),   # x: per-batch block
            _full((C, 1)),                                     # pos
            _full((3 * C, C)), _full((3 * C, 1)),              # wqkv (bf16), bqkv
            _full((C, C)), _full((C, 1)),                      # wo (bf16), bo
            _full((C, 1)), _full((C, 1)),                      # a1, c1
            _full((C, 1)), _full((C, 1)),                      # a2, c2
            _full((Fd, C)), _full((Fd, 1)),                    # w1 (bf16), b1
            _full((C, Fd)), _full((C, 1)),                     # w2 (bf16), b2
        ],
        out_specs=pl.BlockSpec((None, C, N), lambda b: (b, 0, 0)),
    )

    out_cn = pl.pallas_call(
        kernel,
        grid_spec=grid_spec,
        out_shape=jax.ShapeDtypeStruct((B, C, N), jnp.float32),
        input_output_aliases={0: 0},                           # reuse x's HBM buffer
        compiler_params=pltpu.CompilerParams(
            dimension_semantics=("parallel",)),                # both TCs on v7x
    )(
        x_cn,
        params["pos"],
        params["wqkv"], params["bqkv"],
        params["wo"], params["bo"],
        params["a1"], params["c1"], params["a2"], params["c2"],
        params["w1"], params["b1"],
        params["w2"], params["b2"],
    )

    return out_cn.reshape(B, C, H, W)   # free reshape


def init_params(key, channel_size, dim_feedforward, num_heads):
    C, F = channel_size, dim_feedforward
    hd = C // num_heads
    scale = 1.0 / math.sqrt(hd)
    ks = jax.random.split(key, 16)
    s = 0.05  # small deterministic scale

    # nn.MultiheadAttention in_proj layout (3C, C); fold q-scale into q rows/bias
    wqkv = s * jax.random.normal(ks[1], (3 * C, C), jnp.float32)
    bqkv = s * jax.random.normal(ks[2], (3 * C, 1), jnp.float32)
    wqkv = wqkv.at[:C].multiply(scale)
    bqkv = bqkv.at[:C].multiply(scale)

    # eval-mode BatchNorm folded to per-channel affine (C, 1)
    gamma1 = 1.0 + s * jax.random.normal(ks[10], (C, 1), jnp.float32)
    beta1 = s * jax.random.normal(ks[11], (C, 1), jnp.float32)
    mean1 = s * jax.random.normal(ks[12], (C, 1), jnp.float32)
    var1 = jnp.abs(1.0 + s * jax.random.normal(ks[13], (C, 1), jnp.float32))
    gamma2 = 1.0 + s * jax.random.normal(ks[14], (C, 1), jnp.float32)
    beta2 = s * jax.random.normal(ks[15], (C, 1), jnp.float32)
    mean2 = jnp.zeros((C, 1), jnp.float32)
    var2 = jnp.ones((C, 1), jnp.float32)
    eps = 1e-5
    a1 = gamma1 / jnp.sqrt(var1 + eps)
    c1 = beta1 - a1 * mean1
    a2 = gamma2 / jnp.sqrt(var2 + eps)
    c2 = beta2 - a2 * mean2

    bf16 = jnp.bfloat16
    return {
        "pos": s * jax.random.normal(ks[0], (C, 1), jnp.float32),
        "wqkv": wqkv.astype(bf16),                       # (3C, C) bf16 (MXU operand)
        "bqkv": bqkv,                                    # (3C, 1) f32
        "wo": (s * jax.random.normal(ks[3], (C, C), jnp.float32)).astype(bf16),
        "bo": s * jax.random.normal(ks[4], (C, 1), jnp.float32),
        # 1x1 convs stored weight-stationary as (Cout, Cin)
        "w1": (s * jax.random.normal(ks[5], (F, C), jnp.float32)).astype(bf16),
        "b1": s * jax.random.normal(ks[6], (F, 1), jnp.float32),
        "w2": (s * jax.random.normal(ks[7], (C, F), jnp.float32)).astype(bf16),
        "b2": s * jax.random.normal(ks[8], (C, 1), jnp.float32),
        "a1": a1, "c1": c1, "a2": a2, "c2": c2,
    }


if __name__ == "__main__":
    B, C, H, W = 2, 32, 16, 16   # N = H*W = 256 -> lane-dense over N
    dim_feedforward = 64
    num_heads = 2                # channel_size must be divisible by num_heads

    key = jax.random.PRNGKey(0)
    k_x, k_p = jax.random.split(key)
    tgt = jax.random.normal(k_x, (B, C, H, W), jnp.float32)
    params = init_params(k_p, C, dim_feedforward, num_heads)

    fwd = jax.jit(partial(memory_attention_forward, num_heads=num_heads))
    out = fwd(tgt, params)
    jax.block_until_ready(out)
    assert out.shape == (B, C, H, W) and out.dtype == jnp.float32
    assert bool(jnp.isfinite(out).all())
    print("KERNEL_OK")
</pallas_src>

<mosaic_0001>
module attributes {stable_mosaic.version = 11 : i64} {
  func.func @kernel(%arg0: i32, %arg1: memref<1x32x256xf32, #tpu.memory_space<vmem>>, %arg2: memref<32x1xf32, #tpu.memory_space<vmem>>, %arg3: memref<96x32xbf16, #tpu.memory_space<vmem>>, %arg4: memref<96x1xf32, #tpu.memory_space<vmem>>, %arg5: memref<32x32xbf16, #tpu.memory_space<vmem>>, %arg6: memref<32x1xf32, #tpu.memory_space<vmem>>, %arg7: memref<32x1xf32, #tpu.memory_space<vmem>>, %arg8: memref<32x1xf32, #tpu.memory_space<vmem>>, %arg9: memref<32x1xf32, #tpu.memory_space<vmem>>, %arg10: memref<32x1xf32, #tpu.memory_space<vmem>>, %arg11: memref<64x32xbf16, #tpu.memory_space<vmem>>, %arg12: memref<64x1xf32, #tpu.memory_space<vmem>>, %arg13: memref<32x64xbf16, #tpu.memory_space<vmem>>, %arg14: memref<32x1xf32, #tpu.memory_space<vmem>>, %arg15: memref<1x32x256xf32, #tpu.memory_space<vmem>>) attributes {dimension_semantics = [#tpu.dimension_semantics<parallel>], iteration_bounds = array<i64: 2>, scalar_prefetch = 0 : i64, scratch_operands = 0 : i64, tpu.core_type = #tpu.core_type<tc>, window_params = [{transform_indices = @transform_0, window_bounds = array<i64: 1, 32, 256>}, {pipeline_mode = #tpu.pipeline_mode<synchronous>, transform_indices = @transform_1, window_bounds = array<i64: 32, 1>}, {pipeline_mode = #tpu.pipeline_mode<synchronous>, transform_indices = @transform_2, window_bounds = array<i64: 96, 32>}, {pipeline_mode = #tpu.pipeline_mode<synchronous>, transform_indices = @transform_3, window_bounds = array<i64: 96, 1>}, {pipeline_mode = #tpu.pipeline_mode<synchronous>, transform_indices = @transform_4, window_bounds = array<i64: 32, 32>}, {pipeline_mode = #tpu.pipeline_mode<synchronous>, transform_indices = @transform_5, window_bounds = array<i64: 32, 1>}, {pipeline_mode = #tpu.pipeline_mode<synchronous>, transform_indices = @transform_6, window_bounds = array<i64: 32, 1>}, {pipeline_mode = #tpu.pipeline_mode<synchronous>, transform_indices = @transform_7, window_bounds = array<i64: 32, 1>}, {pipeline_mode = #tpu.pipeline_mode<synchronous>, transform_indices = @transform_8, window_bounds = array<i64: 32, 1>}, {pipeline_mode = #tpu.pipeline_mode<synchronous>, transform_indices = @transform_9, window_bounds = array<i64: 32, 1>}, {pipeline_mode = #tpu.pipeline_mode<synchronous>, transform_indices = @transform_10, window_bounds = array<i64: 64, 32>}, {pipeline_mode = #tpu.pipeline_mode<synchronous>, transform_indices = @transform_11, window_bounds = array<i64: 64, 1>}, {pipeline_mode = #tpu.pipeline_mode<synchronous>, transform_indices = @transform_12, window_bounds = array<i64: 32, 64>}, {pipeline_mode = #tpu.pipeline_mode<synchronous>, transform_indices = @transform_13, window_bounds = array<i64: 32, 1>}, {transform_indices = @transform_14, window_bounds = array<i64: 1, 32, 256>}]} {
    %c0 = arith.constant 0 : index
    %c0_0 = arith.constant 0 : index
    %c0_1 = arith.constant 0 : index
    %0 = vector.load %arg1[%c0, %c0_0, %c0_1] : memref<1x32x256xf32, #tpu.memory_space<vmem>>, vector<1x32x256xf32>
    %1 = vector.shape_cast %0 : vector<1x32x256xf32> to vector<32x256xf32>
    %c0_2 = arith.constant 0 : index
    %c0_3 = arith.constant 0 : index
    %2 = vector.load %arg2[%c0_2, %c0_3] : memref<32x1xf32, #tpu.memory_space<vmem>>, vector<32x1xf32>
    %3 = vector.broadcast %2 : vector<32x1xf32> to vector<32x256xf32>
    %4 = arith.addf %1, %3 : vector<32x256xf32>
    %5 = arith.truncf %4 : vector<32x256xf32> to vector<32x256xbf16>
    %c0_4 = arith.constant 0 : index
    %c0_5 = arith.constant 0 : index
    %6 = vector.load %arg3[%c0_4, %c0_5] : memref<96x32xbf16, #tpu.memory_space<vmem>>, vector<96x32xbf16>
    %cst = arith.constant dense<0.000000e+00> : vector<96x256xf32>
    %7 = tpu.matmul %6, %5, %cst {dimension_numbers = #tpu.dot_dimension_numbers<[1], [0], [0], [1], [0, 0, 1, 1], [], []>} : vector<96x32xbf16>, vector<32x256xbf16>, vector<96x256xf32> -> vector<96x256xf32>
    %c0_6 = arith.constant 0 : index
    %c0_7 = arith.constant 0 : index
    %8 = vector.load %arg4[%c0_6, %c0_7] : memref<96x1xf32, #tpu.memory_space<vmem>>, vector<96x1xf32>
    %9 = vector.broadcast %8 : vector<96x1xf32> to vector<96x256xf32>
    %10 = arith.addf %7, %9 : vector<96x256xf32>
    %11 = vector.extract_strided_slice %10 {offsets = [0, 0], sizes = [32, 256], strides = [1, 1]} : vector<96x256xf32> to vector<32x256xf32>
    %12 = vector.shape_cast %11 : vector<32x256xf32> to vector<2x16x256xf32>
    %13 = arith.truncf %12 : vector<2x16x256xf32> to vector<2x16x256xbf16>
    %14 = vector.extract_strided_slice %10 {offsets = [32, 0], sizes = [32, 256], strides = [1, 1]} : vector<96x256xf32> to vector<32x256xf32>
    %15 = vector.shape_cast %14 : vector<32x256xf32> to vector<2x16x256xf32>
    %16 = arith.truncf %15 : vector<2x16x256xf32> to vector<2x16x256xbf16>
    %17 = vector.extract_strided_slice %10 {offsets = [64, 0], sizes = [32, 256], strides = [1, 1]} : vector<96x256xf32> to vector<32x256xf32>
    %18 = vector.shape_cast %17 : vector<32x256xf32> to vector<2x16x256xf32>
    %19 = arith.truncf %18 : vector<2x16x256xf32> to vector<2x16x256xbf16>
    "tpu.trace_start"() <{level = 10 : i32, message = "hdq,hdk->hqk"}> : () -> ()
    %cst_8 = arith.constant dense<0.000000e+00> : vector<2x256x256xf32>
    %20 = tpu.matmul %13, %16, %cst_8 {dimension_numbers = #tpu.dot_dimension_numbers<[1], [1], [2], [2], [0, 0, 0, 2, 1, 2], [0], [0]>} : vector<2x16x256xbf16>, vector<2x16x256xbf16>, vector<2x256x256xf32> -> vector<2x256x256xf32>
    "tpu.trace_stop"() : () -> ()
    %cst_9 = arith.constant dense<0xFF800000> : vector<2x256xf32>
    %21 = vector.multi_reduction <maximumf>, %20, %cst_9 [2] : vector<2x256x256xf32> to vector<2x256xf32>
    %22 = vector.shape_cast %21 : vector<2x256xf32> to vector<2x256x1xf32>
    %23 = vector.broadcast %22 : vector<2x256x1xf32> to vector<2x256x256xf32>
    %24 = arith.subf %20, %23 : vector<2x256x256xf32>
    %25 = math.exp %24 : vector<2x256x256xf32>
    %cst_10 = arith.constant dense<0.000000e+00> : vector<2x256xf32>
    %26 = vector.multi_reduction <add>, %25, %cst_10 [2] : vector<2x256x256xf32> to vector<2x256xf32>
    %27 = arith.truncf %25 : vector<2x256x256xf32> to vector<2x256x256xbf16>
    "tpu.trace_start"() <{level = 10 : i32, message = "hdk,hqk->hdq"}> : () -> ()
    %cst_11 = arith.constant dense<0.000000e+00> : vector<2x16x256xf32>
    %28 = tpu.matmul %19, %27, %cst_11 {dimension_numbers = #tpu.dot_dimension_numbers<[2], [2], [1], [1], [0, 0, 0, 1, 1, 1], [0], [0]>} : vector<2x16x256xbf16>, vector<2x256x256xbf16>, vector<2x16x256xf32> -> vector<2x16x256xf32>
    "tpu.trace_stop"() : () -> ()
    %29 = tpu.reciprocal %26 {approx = true} : vector<2x256xf32> -> vector<2x256xf32>
    %30 = vector.shape_cast %29 : vector<2x256xf32> to vector<2x1x256xf32>
    %31 = vector.broadcast %30 : vector<2x1x256xf32> to vector<2x16x256xf32>
    %32 = arith.mulf %28, %31 : vector<2x16x256xf32>
    %33 = vector.shape_cast %32 : vector<2x16x256xf32> to vector<32x256xf32>
    %c0_12 = arith.constant 0 : index
    %c0_13 = arith.constant 0 : index
    %34 = vector.load %arg5[%c0_12, %c0_13] : memref<32x32xbf16, #tpu.memory_space<vmem>>, vector<32x32xbf16>
    %35 = arith.truncf %33 : vector<32x256xf32> to vector<32x256xbf16>
    %cst_14 = arith.constant dense<0.000000e+00> : vector<32x256xf32>
    %36 = tpu.matmul %34, %35, %cst_14 {dimension_numbers = #tpu.dot_dimension_numbers<[1], [0], [0], [1], [0, 0, 1, 1], [], []>} : vector<32x32xbf16>, vector<32x256xbf16>, vector<32x256xf32> -> vector<32x256xf32>
    %c0_15 = arith.constant 0 : index
    %c0_16 = arith.constant 0 : index
    %37 = vector.load %arg6[%c0_15, %c0_16] : memref<32x1xf32, #tpu.memory_space<vmem>>, vector<32x1xf32>
    %38 = vector.broadcast %37 : vector<32x1xf32> to vector<32x256xf32>
    %39 = arith.addf %36, %38 : vector<32x256xf32>
    %40 = arith.addf %39, %4 : vector<32x256xf32>
    %c0_17 = arith.constant 0 : index
    %c0_18 = arith.constant 0 : index
    %41 = vector.load %arg7[%c0_17, %c0_18] : memref<32x1xf32, #tpu.memory_space<vmem>>, vector<32x1xf32>
    %42 = vector.broadcast %41 : vector<32x1xf32> to vector<32x256xf32>
    %43 = arith.mulf %40, %42 : vector<32x256xf32>
    %c0_19 = arith.constant 0 : index
    %c0_20 = arith.constant 0 : index
    %44 = vector.load %arg8[%c0_19, %c0_20] : memref<32x1xf32, #tpu.memory_space<vmem>>, vector<32x1xf32>
    %45 = vector.broadcast %44 : vector<32x1xf32> to vector<32x256xf32>
    %46 = arith.addf %43, %45 : vector<32x256xf32>
    %c0_21 = arith.constant 0 : index
    %c0_22 = arith.constant 0 : index
    %47 = vector.load %arg11[%c0_21, %c0_22] : memref<64x32xbf16, #tpu.memory_space<vmem>>, vector<64x32xbf16>
    %48 = arith.truncf %46 : vector<32x256xf32> to vector<32x256xbf16>
    %cst_23 = arith.constant dense<0.000000e+00> : vector<64x256xf32>
    %49 = tpu.matmul %47, %48, %cst_23 {dimension_numbers = #tpu.dot_dimension_numbers<[1], [0], [0], [1], [0, 0, 1, 1], [], []>} : vector<64x32xbf16>, vector<32x256xbf16>, vector<64x256xf32> -> vector<64x256xf32>
    %c0_24 = arith.constant 0 : index
    %c0_25 = arith.constant 0 : index
    %50 = vector.load %arg12[%c0_24, %c0_25] : memref<64x1xf32, #tpu.memory_space<vmem>>, vector<64x1xf32>
    %51 = vector.broadcast %50 : vector<64x1xf32> to vector<64x256xf32>
    %52 = arith.addf %49, %51 : vector<64x256xf32>
    %cst_26 = arith.constant 0.000000e+00 : f32
    %53 = vector.broadcast %cst_26 : f32 to vector<64x256xf32>
    %54 = arith.maximumf %52, %53 : vector<64x256xf32>
    %c0_27 = arith.constant 0 : index
    %c0_28 = arith.constant 0 : index
    %55 = vector.load %arg13[%c0_27, %c0_28] : memref<32x64xbf16, #tpu.memory_space<vmem>>, vector<32x64xbf16>
    %56 = arith.truncf %54 : vector<64x256xf32> to vector<64x256xbf16>
    %cst_29 = arith.constant dense<0.000000e+00> : vector<32x256xf32>
    %57 = tpu.matmul %55, %56, %cst_29 {dimension_numbers = #tpu.dot_dimension_numbers<[1], [0], [0], [1], [0, 0, 1, 1], [], []>} : vector<32x64xbf16>, vector<64x256xbf16>, vector<32x256xf32> -> vector<32x256xf32>
    %c0_30 = arith.constant 0 : index
    %c0_31 = arith.constant 0 : index
    %58 = vector.load %arg14[%c0_30, %c0_31] : memref<32x1xf32, #tpu.memory_space<vmem>>, vector<32x1xf32>
    %59 = vector.broadcast %58 : vector<32x1xf32> to vector<32x256xf32>
    %60 = arith.addf %57, %59 : vector<32x256xf32>
    %c0_32 = arith.constant 0 : index
    %c0_33 = arith.constant 0 : index
    %61 = vector.load %arg9[%c0_32, %c0_33] : memref<32x1xf32, #tpu.memory_space<vmem>>, vector<32x1xf32>
    %62 = vector.broadcast %61 : vector<32x1xf32> to vector<32x256xf32>
    %63 = arith.mulf %40, %62 : vector<32x256xf32>
    %c0_34 = arith.constant 0 : index
    %c0_35 = arith.constant 0 : index
    %64 = vector.load %arg10[%c0_34, %c0_35] : memref<32x1xf32, #tpu.memory_space<vmem>>, vector<32x1xf32>
    %65 = vector.broadcast %64 : vector<32x1xf32> to vector<32x256xf32>
    %66 = arith.addf %63, %65 : vector<32x256xf32>
    %67 = arith.addf %60, %66 : vector<32x256xf32>
    %c0_36 = arith.constant 0 : index
    %c0_37 = arith.constant 0 : index
    %c0_38 = arith.constant 0 : index
    %68 = vector.load %arg15[%c0_36, %c0_37, %c0_38] : memref<1x32x256xf32, #tpu.memory_space<vmem>>, vector<1x32x256xf32>
    %69 = vector.shape_cast %68 : vector<1x32x256xf32> to vector<32x256xf32>
    %70 = vector.shape_cast %67 : vector<32x256xf32> to vector<1x32x256xf32>
    tpu.vector_store %arg15[%c0_36, %c0_37, %c0_38], %70 {strides = array<i32>} : memref<1x32x256xf32, #tpu.memory_space<vmem>>, vector<1x32x256xf32>,
    return
  }
  func.func @transform_0(%arg0: i32) -> (i32, i32, i32) {
    %c0_i32 = arith.constant 0 : i32
    %c0_i32_0 = arith.constant 0 : i32
    %c0_i32_1 = arith.constant 0 : i32
    return %arg0, %c0_i32, %c0_i32_0 : i32, i32, i32
  }
  func.func @transform_1(%arg0: i32) -> (i32, i32) {
    %c0_i32 = arith.constant 0 : i32
    %c0_i32_0 = arith.constant 0 : i32
    %c0_i32_1 = arith.constant 0 : i32
    return %c0_i32, %c0_i32_0 : i32, i32
  }
  func.func @transform_2(%arg0: i32) -> (i32, i32) {
    %c0_i32 = arith.constant 0 : i32
    %c0_i32_0 = arith.constant 0 : i32
    %c0_i32_1 = arith.constant 0 : i32
    return %c0_i32, %c0_i32_0 : i32, i32
  }
  func.func @transform_3(%arg0: i32) -> (i32, i32) {
    %c0_i32 = arith.constant 0 : i32
    %c0_i32_0 = arith.constant 0 : i32
    %c0_i32_1 = arith.constant 0 : i32
    return %c0_i32, %c0_i32_0 : i32, i32
  }
  func.func @transform_4(%arg0: i32) -> (i32, i32) {
    %c0_i32 = arith.constant 0 : i32
    %c0_i32_0 = arith.constant 0 : i32
    %c0_i32_1 = arith.constant 0 : i32
    return %c0_i32, %c0_i32_0 : i32, i32
  }
  func.func @transform_5(%arg0: i32) -> (i32, i32) {
    %c0_i32 = arith.constant 0 : i32
    %c0_i32_0 = arith.constant 0 : i32
    %c0_i32_1 = arith.constant 0 : i32
    return %c0_i32, %c0_i32_0 : i32, i32
  }
  func.func @transform_6(%arg0: i32) -> (i32, i32) {
    %c0_i32 = arith.constant 0 : i32
    %c0_i32_0 = arith.constant 0 : i32
    %c0_i32_1 = arith.constant 0 : i32
    return %c0_i32, %c0_i32_0 : i32, i32
  }
  func.func @transform_7(%arg0: i32) -> (i32, i32) {
    %c0_i32 = arith.constant 0 : i32
    %c0_i32_0 = arith.constant 0 : i32
    %c0_i32_1 = arith.constant 0 : i32
    return %c0_i32, %c0_i32_0 : i32, i32
  }
  func.func @transform_8(%arg0: i32) -> (i32, i32) {
    %c0_i32 = arith.constant 0 : i32
    %c0_i32_0 = arith.constant 0 : i32
    %c0_i32_1 = arith.constant 0 : i32
    return %c0_i32, %c0_i32_0 : i32, i32
  }
  func.func @transform_9(%arg0: i32) -> (i32, i32) {
    %c0_i32 = arith.constant 0 : i32
    %c0_i32_0 = arith.constant 0 : i32
    %c0_i32_1 = arith.constant 0 : i32
    return %c0_i32, %c0_i32_0 : i32, i32
  }
  func.func @transform_10(%arg0: i32) -> (i32, i32) {
    %c0_i32 = arith.constant 0 : i32
    %c0_i32_0 = arith.constant 0 : i32
    %c0_i32_1 = arith.constant 0 : i32
    return %c0_i32, %c0_i32_0 : i32, i32
  }
  func.func @transform_11(%arg0: i32) -> (i32, i32) {
    %c0_i32 = arith.constant 0 : i32
    %c0_i32_0 = arith.constant 0 : i32
    %c0_i32_1 = arith.constant 0 : i32
    return %c0_i32, %c0_i32_0 : i32, i32
  }
  func.func @transform_12(%arg0: i32) -> (i32, i32) {
    %c0_i32 = arith.constant 0 : i32
    %c0_i32_0 = arith.constant 0 : i32
    %c0_i32_1 = arith.constant 0 : i32
    return %c0_i32, %c0_i32_0 : i32, i32
  }
  func.func @transform_13(%arg0: i32) -> (i32, i32) {
    %c0_i32 = arith.constant 0 : i32
    %c0_i32_0 = arith.constant 0 : i32
    %c0_i32_1 = arith.constant 0 : i32
    return %c0_i32, %c0_i32_0 : i32, i32
  }
  func.func @transform_14(%arg0: i32) -> (i32, i32, i32) {
    %c0_i32 = arith.constant 0 : i32
    %c0_i32_0 = arith.constant 0 : i32
    %c0_i32_1 = arith.constant 0 : i32
    return %arg0, %c0_i32, %c0_i32_0 : i32, i32, i32
  }
}

</mosaic_0001>

<llo_original>
// kernel: memory_attention_forward.1
$region0: #{memory_attention_forward.1}
  #allocation0 [shape = 'u32[]', space=smem, size = 0x4, offset = 0x4, fixed_abs, tag = 'smem constant byte address 0x4 - core index']
  #allocation1 [shape = 'u32[144,128]{1,0:T(1,128)}', space=vmem, size = 0x12000, scoped, tag = 'internal scratch']
  %s0 = inlined_call_operand.vmem [shape: f32[2,32,256], index: 0, kind: input, shape index: {}, may-alias: {0,14}]
  %s1 = inlined_call_operand.vmem [shape: f32[32,1], index: 1, kind: input, shape index: {}]
  %s2 = inlined_call_operand.vmem [shape: bf16[96,32], index: 2, kind: input, shape index: {}]
  %s3 = inlined_call_operand.vmem [shape: f32[96,1], index: 3, kind: input, shape index: {}]
  %s4 = inlined_call_operand.vmem [shape: bf16[32,32], index: 4, kind: input, shape index: {}]
  %s5 = inlined_call_operand.vmem [shape: f32[32,1], index: 5, kind: input, shape index: {}]
  %s6 = inlined_call_operand.vmem [shape: f32[32,1], index: 6, kind: input, shape index: {}]
  %s7 = inlined_call_operand.vmem [shape: f32[32,1], index: 7, kind: input, shape index: {}]
  %s8 = inlined_call_operand.vmem [shape: f32[32,1], index: 8, kind: input, shape index: {}]
  %s9 = inlined_call_operand.vmem [shape: f32[32,1], index: 9, kind: input, shape index: {}]
  %s10 = inlined_call_operand.vmem [shape: bf16[64,32], index: 10, kind: input, shape index: {}]
  %s11 = inlined_call_operand.vmem [shape: f32[64,1], index: 11, kind: input, shape index: {}]
  %s12 = inlined_call_operand.vmem [shape: bf16[32,64], index: 12, kind: input, shape index: {}]
  %s13 = inlined_call_operand.vmem [shape: f32[32,1], index: 13, kind: input, shape index: {}]
  %s14 = inlined_call_operand.vmem [shape: f32[2,32,256], index: 14, kind: output, shape index: {}, may-alias: {0,14}]
  %s15 = sld [smem:[#allocation0]]
  $region89: #{memory_attention_forward.1} parent=0
    _
  %s17 = ssub.s32 1, %s15
  %s18 = scalar_select 0, %s17, %s15
  loop: start=0, step=1, limit=4
  $region2: #{memory_attention_forward.1} parent=0 // loop_pre_header
    _
  $region3: #{memory_attention_forward.1} parent=0 // loop_header
    %s20 = sphi 0, %s24
    %p21 = scmp.ge.s32.totalorder %s20, 4
    %s30 = sphi 0, %s32
    %s33 = sphi 0, %s30
    %s34 = sphi 0, %s33
    %s50 = sphi 0, %s34
    %s54 = sphi 0, %s54
    %s56 = sphi 0, %s54
    %s57 = sphi 0, %s56
    %s71 = sphi 0, %s57
    %s75 = sphi 0, %s75
    %s77 = sphi 0, %s75
    %s78 = sphi 0, %s77
    %s92 = sphi 0, %s78
    %s96 = sphi 0, %s96
    %s98 = sphi 0, %s96
    %s99 = sphi 0, %s98
    %s113 = sphi 0, %s99
    %s117 = sphi 0, %s117
    %s119 = sphi 0, %s117
    %s120 = sphi 0, %s119
    %s134 = sphi 0, %s120
    %s138 = sphi 0, %s138
    %s140 = sphi 0, %s138
    %s141 = sphi 0, %s140
    %s155 = sphi 0, %s141
    %s159 = sphi 0, %s159
    %s161 = sphi 0, %s159
    %s162 = sphi 0, %s161
    %s176 = sphi 0, %s162
    %s180 = sphi 0, %s180
    %s182 = sphi 0, %s180
    %s183 = sphi 0, %s182
    %s197 = sphi 0, %s183
    %s201 = sphi 0, %s201
    %s203 = sphi 0, %s201
    %s204 = sphi 0, %s203
    %s218 = sphi 0, %s204
    %s222 = sphi 0, %s222
    %s224 = sphi 0, %s222
    %s225 = sphi 0, %s224
    %s239 = sphi 0, %s225
    %s243 = sphi 0, %s243
    %s245 = sphi 0, %s243
    %s246 = sphi 0, %s245
    %s260 = sphi 0, %s246
    %s264 = sphi 0, %s264
    %s266 = sphi 0, %s264
    %s267 = sphi 0, %s266
    %s281 = sphi 0, %s267
    %s285 = sphi 0, %s285
    %s287 = sphi 0, %s285
    %s288 = sphi 0, %s287
    %s302 = sphi 0, %s288
    %s306 = sphi 0, %s306
    %s308 = sphi 0, %s306
    %s309 = sphi 0, %s308
    %s323 = sphi 0, %s309
    %s329 = sphi 0, %s331
    %s332 = sphi 0, %s329
    %s333 = sphi 0, %s332
    %s349 = sphi 0, %s333
  $region4: #{memory_attention_forward.1} parent=0 // loop_header_branch
    %23 = sbr.rel (%p21) target = $region8
  $region5: #{memory_attention_forward.1} parent=0 // loop_body
    %s25 = ssub.s32 %s20, 1
    %s26 = ssub.s32 %s20, 2
    %s27 = sadd.s32 %s20, 1
    %s28 = ssub.s32 %s20, %s27
    %p29 = scmp.eq.s32.totalorder %s28, 0
    %s31 = sadd.s32 %s30, 1
    %s32 = scalar_select %p29, %s30, %s31
    %p35 = pneg %p29
    %p36 = scmp.eq.s32.totalorder %s20, 1
    %p37 = por %p35, %p36
    %p38 = scmp.ne.s32.totalorder %s30, %s33
    %p39 = scmp.eq.s32.totalorder %s20, 0
    %p40 = por %p38, %p39
    %p41 = scmp.ne.s32.totalorder %s30, %s33
    %p42 = scmp.eq.s32.totalorder %s25, 1
    %p43 = por %p41, %p42
    %p44 = scmp.ne.s32.totalorder %s33, %s34
    %p45 = scmp.eq.s32.totalorder %s25, 0
    %p46 = por %p44, %p45
    %p47 = scmp.ne.s32.totalorder %s33, %s34
    %p48 = scmp.eq.s32.totalorder %s26, 1
    %p49 = por %p47, %p48
    %p51 = scmp.ne.s32.totalorder %s34, %s50
    %p52 = scmp.eq.s32.totalorder %s26, 0
    %p53 = por %p51, %p52
    %s55 = sadd.s32 %s54, 1
    %p58 = scmp.eq.s32.totalorder %s20, 1
    %p59 = scmp.ne.s32.totalorder %s54, %s56
    %p60 = scmp.eq.s32.totalorder %s20, 0
    %p61 = por %p59, %p60
    %p62 = scmp.ne.s32.totalorder %s54, %s56
    %p63 = scmp.eq.s32.totalorder %s25, 1
    %p64 = por %p62, %p63
    %p65 = scmp.ne.s32.totalorder %s56, %s57
    %p66 = scmp.eq.s32.totalorder %s25, 0
    %p67 = por %p65, %p66
    %p68 = scmp.ne.s32.totalorder %s56, %s57
    %p69 = scmp.eq.s32.totalorder %s26, 1
    %p70 = por %p68, %p69
    %p72 = scmp.ne.s32.totalorder %s57, %s71
    %p73 = scmp.eq.s32.totalorder %s26, 0
    %p74 = por %p72, %p73
    %s76 = sadd.s32 %s75, 1
    %p79 = scmp.eq.s32.totalorder %s20, 1
    %p80 = scmp.ne.s32.totalorder %s75, %s77
    %p81 = scmp.eq.s32.totalorder %s20, 0
    %p82 = por %p80, %p81
    %p83 = scmp.ne.s32.totalorder %s75, %s77
    %p84 = scmp.eq.s32.totalorder %s25, 1
    %p85 = por %p83, %p84
    %p86 = scmp.ne.s32.totalorder %s77, %s78
    %p87 = scmp.eq.s32.totalorder %s25, 0
    %p88 = por %p86, %p87
    %p89 = scmp.ne.s32.totalorder %s77, %s78
    %p90 = scmp.eq.s32.totalorder %s26, 1
    %p91 = por %p89, %p90
    %p93 = scmp.ne.s32.totalorder %s78, %s92
    %p94 = scmp.eq.s32.totalorder %s26, 0
    %p95 = por %p93, %p94
    %s97 = sadd.s32 %s96, 1
    %p100 = scmp.eq.s32.totalorder %s20, 1
    %p101 = scmp.ne.s32.totalorder %s96, %s98
    %p102 = scmp.eq.s32.totalorder %s20, 0
    %p103 = por %p101, %p102
    %p104 = scmp.ne.s32.totalorder %s96, %s98
    %p105 = scmp.eq.s32.totalorder %s25, 1
    %p106 = por %p104, %p105
    %p107 = scmp.ne.s32.totalorder %s98, %s99
    %p108 = scmp.eq.s32.totalorder %s25, 0
    %p109 = por %p107, %p108
    %p110 = scmp.ne.s32.totalorder %s98, %s99
    %p111 = scmp.eq.s32.totalorder %s26, 1
    %p112 = por %p110, %p111
    %p114 = scmp.ne.s32.totalorder %s99, %s113
    %p115 = scmp.eq.s32.totalorder %s26, 0
    %p116 = por %p114, %p115
    %s118 = sadd.s32 %s117, 1
    %p121 = scmp.eq.s32.totalorder %s20, 1
    %p122 = scmp.ne.s32.totalorder %s117, %s119
    %p123 = scmp.eq.s32.totalorder %s20, 0
    %p124 = por %p122, %p123
    %p125 = scmp.ne.s32.totalorder %s117, %s119
    %p126 = scmp.eq.s32.totalorder %s25, 1
    %p127 = por %p125, %p126
    %p128 = scmp.ne.s32.totalorder %s119, %s120
    %p129 = scmp.eq.s32.totalorder %s25, 0
    %p130 = por %p128, %p129
    %p131 = scmp.ne.s32.totalorder %s119, %s120
    %p132 = scmp.eq.s32.totalorder %s26, 1
    %p133 = por %p131, %p132
    %p135 = scmp.ne.s32.totalorder %s120, %s134
    %p136 = scmp.eq.s32.totalorder %s26, 0
    %p137 = por %p135, %p136
    %s139 = sadd.s32 %s138, 1
    %p142 = scmp.eq.s32.totalorder %s20, 1
    %p143 = scmp.ne.s32.totalorder %s138, %s140
    %p144 = scmp.eq.s32.totalorder %s20, 0
    %p145 = por %p143, %p144
    %p146 = scmp.ne.s32.totalorder %s138, %s140
    %p147 = scmp.eq.s32.totalorder %s25, 1
    %p148 = por %p146, %p147
    %p149 = scmp.ne.s32.totalorder %s140, %s141
    %p150 = scmp.eq.s32.totalorder %s25, 0
    %p151 = por %p149, %p150
    %p152 = scmp.ne.s32.totalorder %s140, %s141
    %p153 = scmp.eq.s32.totalorder %s26, 1
    %p154 = por %p152, %p153
    %p156 = scmp.ne.s32.totalorder %s141, %s155
    %p157 = scmp.eq.s32.totalorder %s26, 0
    %p158 = por %p156, %p157
    %s160 = sadd.s32 %s159, 1
    %p163 = scmp.eq.s32.totalorder %s20, 1
    %p164 = scmp.ne.s32.totalorder %s159, %s161
    %p165 = scmp.eq.s32.totalorder %s20, 0
    %p166 = por %p164, %p165
    %p167 = scmp.ne.s32.totalorder %s159, %s161
    %p168 = scmp.eq.s32.totalorder %s25, 1
    %p169 = por %p167, %p168
    %p170 = scmp.ne.s32.totalorder %s161, %s162
    %p171 = scmp.eq.s32.totalorder %s25, 0
    %p172 = por %p170, %p171
    %p173 = scmp.ne.s32.totalorder %s161, %s162
    %p174 = scmp.eq.s32.totalorder %s26, 1
    %p175 = por %p173, %p174
    %p177 = scmp.ne.s32.totalorder %s162, %s176
    %p178 = scmp.eq.s32.totalorder %s26, 0
    %p179 = por %p177, %p178
    %s181 = sadd.s32 %s180, 1
    %p184 = scmp.eq.s32.totalorder %s20, 1
    %p185 = scmp.ne.s32.totalorder %s180, %s182
    %p186 = scmp.eq.s32.totalorder %s20, 0
    %p187 = por %p185, %p186
    %p188 = scmp.ne.s32.totalorder %s180, %s182
    %p189 = scmp.eq.s32.totalorder %s25, 1
    %p190 = por %p188, %p189
    %p191 = scmp.ne.s32.totalorder %s182, %s183
    %p192 = scmp.eq.s32.totalorder %s25, 0
    %p193 = por %p191, %p192
    %p194 = scmp.ne.s32.totalorder %s182, %s183
    %p195 = scmp.eq.s32.totalorder %s26, 1
    %p196 = por %p194, %p195
    %p198 = scmp.ne.s32.totalorder %s183, %s197
    %p199 = scmp.eq.s32.totalorder %s26, 0
    %p200 = por %p198, %p199
    %s202 = sadd.s32 %s201, 1
    %p205 = scmp.eq.s32.totalorder %s20, 1
    %p206 = scmp.ne.s32.totalorder %s201, %s203
    %p207 = scmp.eq.s32.totalorder %s20, 0
    %p208 = por %p206, %p207
    %p209 = scmp.ne.s32.totalorder %s201, %s203
    %p210 = scmp.eq.s32.totalorder %s25, 1
    %p211 = por %p209, %p210
    %p212 = scmp.ne.s32.totalorder %s203, %s204
    %p213 = scmp.eq.s32.totalorder %s25, 0
    %p214 = por %p212, %p213
    %p215 = scmp.ne.s32.totalorder %s203, %s204
    %p216 = scmp.eq.s32.totalorder %s26, 1
    %p217 = por %p215, %p216
    %p219 = scmp.ne.s32.totalorder %s204, %s218
    %p220 = scmp.eq.s32.totalorder %s26, 0
    %p221 = por %p219, %p220
    %s223 = sadd.s32 %s222, 1
    %p226 = scmp.eq.s32.totalorder %s20, 1
    %p227 = scmp.ne.s32.totalorder %s222, %s224
    %p228 = scmp.eq.s32.totalorder %s20, 0
    %p229 = por %p227, %p228
    %p230 = scmp.ne.s32.totalorder %s222, %s224
    %p231 = scmp.eq.s32.totalorder %s25, 1
    %p232 = por %p230, %p231
    %p233 = scmp.ne.s32.totalorder %s224, %s225
    %p234 = scmp.eq.s32.totalorder %s25, 0
    %p235 = por %p233, %p234
    %p236 = scmp.ne.s32.totalorder %s224, %s225
    %p237 = scmp.eq.s32.totalorder %s26, 1
    %p238 = por %p236, %p237
    %p240 = scmp.ne.s32.totalorder %s225, %s239
    %p241 = scmp.eq.s32.totalorder %s26, 0
    %p242 = por %p240, %p241
    %s244 = sadd.s32 %s243, 1
    %p247 = scmp.eq.s32.totalorder %s20, 1
    %p248 = scmp.ne.s32.totalorder %s243, %s245
    %p249 = scmp.eq.s32.totalorder %s20, 0
    %p250 = por %p248, %p249
    %p251 = scmp.ne.s32.totalorder %s243, %s245
    %p252 = scmp.eq.s32.totalorder %s25, 1
    %p253 = por %p251, %p252
    %p254 = scmp.ne.s32.totalorder %s245, %s246
    %p255 = scmp.eq.s32.totalorder %s25, 0
    %p256 = por %p254, %p255
    %p257 = scmp.ne.s32.totalorder %s245, %s246
    %p258 = scmp.eq.s32.totalorder %s26, 1
    %p259 = por %p257, %p258
    %p261 = scmp.ne.s32.totalorder %s246, %s260
    %p262 = scmp.eq.s32.totalorder %s26, 0
    %p263 = por %p261, %p262
    %s265 = sadd.s32 %s264, 1
    %p268 = scmp.eq.s32.totalorder %s20, 1
    %p269 = scmp.ne.s32.totalorder %s264, %s266
    %p270 = scmp.eq.s32.totalorder %s20, 0
    %p271 = por %p269, %p270
    %p272 = scmp.ne.s32.totalorder %s264, %s266
    %p273 = scmp.eq.s32.totalorder %s25, 1
    %p274 = por %p272, %p273
    %p275 = scmp.ne.s32.totalorder %s266, %s267
    %p276 = scmp.eq.s32.totalorder %s25, 0
    %p277 = por %p275, %p276
    %p278 = scmp.ne.s32.totalorder %s266, %s267
    %p279 = scmp.eq.s32.totalorder %s26, 1
    %p280 = por %p278, %p279
    %p282 = scmp.ne.s32.totalorder %s267, %s281
    %p283 = scmp.eq.s32.totalorder %s26, 0
    %p284 = por %p282, %p283
    %s286 = sadd.s32 %s285, 1
    %p289 = scmp.eq.s32.totalorder %s20, 1
    %p290 = scmp.ne.s32.totalorder %s285, %s287
    %p291 = scmp.eq.s32.totalorder %s20, 0
    %p292 = por %p290, %p291
    %p293 = scmp.ne.s32.totalorder %s285, %s287
    %p294 = scmp.eq.s32.totalorder %s25, 1
    %p295 = por %p293, %p294
    %p296 = scmp.ne.s32.totalorder %s287, %s288
    %p297 = scmp.eq.s32.totalorder %s25, 0
    %p298 = por %p296, %p297
    %p299 = scmp.ne.s32.totalorder %s287, %s288
    %p300 = scmp.eq.s32.totalorder %s26, 1
    %p301 = por %p299, %p300
    %p303 = scmp.ne.s32.totalorder %s288, %s302
    %p304 = scmp.eq.s32.totalorder %s26, 0
    %p305 = por %p303, %p304
    %s307 = sadd.s32 %s306, 1
    %p310 = scmp.eq.s32.totalorder %s20, 1
    %p311 = scmp.ne.s32.totalorder %s306, %s308
    %p312 = scmp.eq.s32.totalorder %s20, 0
    %p313 = por %p311, %p312
    %p314 = scmp.ne.s32.totalorder %s306, %s308
    %p315 = scmp.eq.s32.totalorder %s25, 1
    %p316 = por %p314, %p315
    %p317 = scmp.ne.s32.totalorder %s308, %s309
    %p318 = scmp.eq.s32.totalorder %s25, 0
    %p319 = por %p317, %p318
    %p320 = scmp.ne.s32.totalorder %s308, %s309
    %p321 = scmp.eq.s32.totalorder %s26, 1
    %p322 = por %p320, %p321
    %p324 = scmp.ne.s32.totalorder %s309, %s323
    %p325 = scmp.eq.s32.totalorder %s26, 0
    %p326 = por %p324, %p325
    %s327 = ssub.s32 %s20, %s27
    %p328 = scmp.eq.s32.totalorder %s327, 0
    %s330 = sadd.s32 %s329, 1
    %s331 = scalar_select %p328, %s329, %s330
    %p334 = pneg %p328
    %p335 = scmp.eq.s32.totalorder %s20, 1
    %p336 = por %p334, %p335
    %p337 = scmp.ne.s32.totalorder %s329, %s332
    %p338 = scmp.eq.s32.totalorder %s20, 0
    %p339 = por %p337, %p338
    %p340 = scmp.ne.s32.totalorder %s329, %s332
    %p341 = scmp.eq.s32.totalorder %s25, 1
    %p342 = por %p340, %p341
    %p343 = scmp.ne.s32.totalorder %s332, %s333
    %p344 = scmp.eq.s32.totalorder %s25, 0
    %p345 = por %p343, %p344
    %p346 = scmp.ne.s32.totalorder %s332, %s333
    %p347 = scmp.eq.s32.totalorder %s26, 1
    %p348 = por %p346, %p347
    %p350 = scmp.ne.s32.totalorder %s333, %s349
    %p351 = scmp.eq.s32.totalorder %s26, 0
    %p352 = por %p350, %p351
    %p353 = scmp.le.s32.totalorder 1, %s20
    %p354 = scmp.lt.s32.totalorder %s20, 3
    %p355 = pnand %p353, %p354
    %p356 = pneg %p355
    // Predicated region
    $region9: #{memory_attention_forward.1} parent=5 // pred_check
      _
    $region10: #{memory_attention_forward.1} parent=5 // pred_check_branch
      %358 = sbr.rel (%p355) target = $region12
    $region11: #{memory_attention_forward.1} parent=5 // pred_region
      %s359 = ssub.s32 %s20, 1
      // Predicated region
      $region13: #{memory_attention_forward.1} parent=11 // pred_check
        %p360 = pneg %p67
      $region14: #{memory_attention_forward.1} parent=11 // pred_check_branch
        %362 = sbr.rel (%p360) target = $region16
      $region15: #{memory_attention_forward.1} parent=11 // pred_region
        _
      $region16: #{memory_attention_forward.1} parent=11 // pred_fallthru
        _
      // Predicated region
      $region17: #{memory_attention_forward.1} parent=11 // pred_check
        %p363 = pneg %p88
      $region18: #{memory_attention_forward.1} parent=11 // pred_check_branch
        %365 = sbr.rel (%p363) target = $region20
      $region19: #{memory_attention_forward.1} parent=11 // pred_region
        _
      $region20: #{memory_attention_forward.1} parent=11 // pred_fallthru
        _
      // Predicated region
      $region21: #{memory_attention_forward.1} parent=11 // pred_check
        %p366 = pneg %p109
      $region22: #{memory_attention_forward.1} parent=11 // pred_check_branch
        %368 = sbr.rel (%p366) target = $region24
      $region23: #{memory_attention_forward.1} parent=11 // pred_region
        _
      $region24: #{memory_attention_forward.1} parent=11 // pred_fallthru
        _
      // Predicated region
      $region25: #{memory_attention_forward.1} parent=11 // pred_check
        %p369 = pneg %p130
      $region26: #{memory_attention_forward.1} parent=11 // pred_check_branch
        %371 = sbr.rel (%p369) target = $region28
      $region27: #{memory_attention_forward.1} parent=11 // pred_region
        _
      $region28: #{memory_attention_forward.1} parent=11 // pred_fallthru
        _
      // Predicated region
      $region29: #{memory_attention_forward.1} parent=11 // pred_check
        %p372 = pneg %p151
      $region30: #{memory_attention_forward.1} parent=11 // pred_check_branch
        %374 = sbr.rel (%p372) target = $region32
      $region31: #{memory_attention_forward.1} parent=11 // pred_region
        _
      $region32: #{memory_attention_forward.1} parent=11 // pred_fallthru
        _
      // Predicated region
      $region33: #{memory_attention_forward.1} parent=11 // pred_check
        %p375 = pneg %p172
      $region34: #{memory_attention_forward.1} parent=11 // pred_check_branch
        %377 = sbr.rel (%p375) target = $region36
      $region35: #{memory_attention_forward.1} parent=11 // pred_region
        _
      $region36: #{memory_attention_forward.1} parent=11 // pred_fallthru
        _
      // Predicated region
      $region37: #{memory_attention_forward.1} parent=11 // pred_check
        %p378 = pneg %p193
      $region38: #{memory_attention_forward.1} parent=11 // pred_check_branch
        %380 = sbr.rel (%p378) target = $region40
      $region39: #{memory_attention_forward.1} parent=11 // pred_region
        _
      $region40: #{memory_attention_forward.1} parent=11 // pred_fallthru
        _
      // Predicated region
      $region41: #{memory_attention_forward.1} parent=11 // pred_check
        %p381 = pneg %p214
      $region42: #{memory_attention_forward.1} parent=11 // pred_check_branch
        %383 = sbr.rel (%p381) target = $region44
      $region43: #{memory_attention_forward.1} parent=11 // pred_region
        _
      $region44: #{memory_attention_forward.1} parent=11 // pred_fallthru
        _
      // Predicated region
      $region45: #{memory_attention_forward.1} parent=11 // pred_check
        %p384 = pneg %p235
      $region46: #{memory_attention_forward.1} parent=11 // pred_check_branch
        %386 = sbr.rel (%p384) target = $region48
      $region47: #{memory_attention_forward.1} parent=11 // pred_region
        _
      $region48: #{memory_attention_forward.1} parent=11 // pred_fallthru
        _
      // Predicated region
      $region49: #{memory_attention_forward.1} parent=11 // pred_check
        %p387 = pneg %p256
      $region50: #{memory_attention_forward.1} parent=11 // pred_check_branch
        %389 = sbr.rel (%p387) target = $region52
      $region51: #{memory_attention_forward.1} parent=11 // pred_region
        _
      $region52: #{memory_attention_forward.1} parent=11 // pred_fallthru
        _
      // Predicated region
      $region53: #{memory_attention_forward.1} parent=11 // pred_check
        %p390 = pneg %p277
      $region54: #{memory_attention_forward.1} parent=11 // pred_check_branch
        %392 = sbr.rel (%p390) target = $region56
      $region55: #{memory_attention_forward.1} parent=11 // pred_region
        _
      $region56: #{memory_attention_forward.1} parent=11 // pred_fallthru
        _
      // Predicated region
      $region57: #{memory_attention_forward.1} parent=11 // pred_check
        %p393 = pneg %p298
      $region58: #{memory_attention_forward.1} parent=11 // pred_check_branch
        %395 = sbr.rel (%p393) target = $region60
      $region59: #{memory_attention_forward.1} parent=11 // pred_region
        _
      $region60: #{memory_attention_forward.1} parent=11 // pred_fallthru
        _
      // Predicated region
      $region61: #{memory_attention_forward.1} parent=11 // pred_check
        %p396 = pneg %p319
      $region62: #{memory_attention_forward.1} parent=11 // pred_check_branch
        %398 = sbr.rel (%p396) target = $region64
      $region63: #{memory_attention_forward.1} parent=11 // pred_region
        _
      $region64: #{memory_attention_forward.1} parent=11 // pred_fallthru
        _
    $region12: #{memory_attention_forward.1} parent=5 // pred_fallthru
      _
    %p399 = scmp.lt.s32.totalorder %s20, 2
    // Predicated region
    $region65: #{memory_attention_forward.1} parent=5 // pred_check
      %p400 = pneg %p399
    $region66: #{memory_attention_forward.1} parent=5 // pred_check_branch
      %402 = sbr.rel (%p400) target = $region68
    $region67: #{memory_attention_forward.1} parent=5 // pred_region
      // Predicated region
      $region69: #{memory_attention_forward.1} parent=67 // pred_check
        %p403 = pneg %p40
      $region70: #{memory_attention_forward.1} parent=67 // pred_check_branch
        %405 = sbr.rel (%p403) target = $region72
      $region71: #{memory_attention_forward.1} parent=67 // pred_region
        %p406 = scmp.lt.s32.totalorder %s20, 1
        %s407 = scalar_select %p406, %s20, 1
        %s408 = smul.addr %s407, 8
        %s409 = smul.addr %s408, 8
        %s410 = scalar_lea.vmem %s0, %s409
      $region72: #{memory_attention_forward.1} parent=67 // pred_fallthru
        _
    $region68: #{memory_attention_forward.1} parent=5 // pred_fallthru
      _
    %p411 = scmp.le.s32.totalorder 1, %s20
    %p412 = scmp.lt.s32.totalorder %s20, 3
    %p413 = pnand %p411, %p412
    %p414 = pneg %p413
    // Predicated region
    $region73: #{memory_attention_forward.1} parent=5 // pred_check
      _
    $region74: #{memory_attention_forward.1} parent=5 // pred_check_branch
      %416 = sbr.rel (%p413) target = $region76
    $region75: #{memory_attention_forward.1} parent=5 // pred_region
      %s417 = ssub.s32 %s20, 1
      %p418 = scmp.lt.s32.totalorder %s25, 1
      %s419 = scalar_select %p418, %s25, 1
      %s420 = smul.addr %s419, 8
      %s421 = smul.addr %s420, 8
      %s422 = scalar_lea.vmem %s0, %s421
      %p423 = pneg %p46
      %p424 = pneg %p43
      %p425 = pneg %p67
      %p426 = pneg %p64
      %p427 = pneg %p88
      %p428 = pneg %p85
      %p429 = pneg %p109
      %p430 = pneg %p106
      %p431 = pneg %p130
      %p432 = pneg %p127
      %p433 = pneg %p151
      %p434 = pneg %p148
      %p435 = pneg %p172
      %p436 = pneg %p169
      %p437 = pneg %p193
      %p438 = pneg %p190
      %p439 = pneg %p214
      %p440 = pneg %p211
      %p441 = pneg %p235
      %p442 = pneg %p232
      %p443 = pneg %p256
      %p444 = pneg %p253
      %p445 = pneg %p277
      %p446 = pneg %p274
      %p447 = pneg %p298
      %p448 = pneg %p295
      %p449 = pneg %p319
      %p450 = pneg %p316
      %p451 = pneg %p345
      %p452 = pneg %p342
      %p453 = scmp.lt.s32.totalorder %s25, 1
      %s454 = scalar_select %p453, %s25, 1
      %s455 = smul.addr %s454, 8
      %s456 = smul.addr %s455, 8
      %s457 = scalar_lea.vmem %s14, %s456
      %p458 = scmp.lt.s32.totalorder %s25, 1
      %s459 = scalar_select %p458, %s25, 1
      %s460 = smul.addr %s459, 8
      %s461 = smul.addr %s460, 8
      %s462 = scalar_lea.vmem %s0, %s461
      %p463 = scmp.lt.s32.totalorder %s25, 1
      %s464 = scalar_select %p463, %s25, 1
      %s465 = smul.addr %s464, 8
      %s466 = smul.addr %s465, 8
      %s467 = scalar_lea.vmem %s14, %s466
      %v469 = vld [vmem:[%s462] sm:$0xff]
      %v470 = vld [vmem:[%s462 + $0x8] sm:$0xff]
      %v471 = vld [vmem:[%s462 + $0x10] sm:$0xff]
      %v472 = vld [vmem:[%s462 + $0x18] sm:$0xff]
      %v473 = vld [vmem:[%s462 + $0x20] sm:$0xff]
      %v474 = vld [vmem:[%s462 + $0x28] sm:$0xff]
      %v475 = vld [vmem:[%s462 + $0x30] sm:$0xff]
      %v476 = vld [vmem:[%s462 + $0x38] sm:$0xff]
      %v477 = vld [vmem:[%s1] sm:$0xff]
      %v478 = vld [vmem:[%s1 + $0x8] sm:$0xff]
      %v479 = vld [vmem:[%s1 + $0x10] sm:$0xff]
      %v480 = vld [vmem:[%s1 + $0x18] sm:$0xff]
      %482 = vset.pattern.permute.xlu0 0
      %483 = vperm.xlu0 %482, %v477
      %v484 = vpop.permute.xlu0 %483
      %487 = vset.pattern.permute.xlu0 0
      %488 = vperm.xlu0 %487, %v478
      %v489 = vpop.permute.xlu0 %488
      %492 = vset.pattern.permute.xlu0 0
      %493 = vperm.xlu0 %492, %v479
      %v494 = vpop.permute.xlu0 %493
      %497 = vset.pattern.permute.xlu0 0
      %498 = vperm.xlu0 %497, %v480
      %v499 = vpop.permute.xlu0 %498
      %v501 = vadd.f32 %v469, %v484
      %v502 = vadd.f32 %v470, %v484
      %v503 = vadd.f32 %v471, %v489
      %v504 = vadd.f32 %v472, %v489
      %v505 = vadd.f32 %v473, %v494
      %v506 = vadd.f32 %v474, %v494
      %v507 = vadd.f32 %v475, %v499
      %v508 = vadd.f32 %v476, %v499
      %v509 = vpack.c.bf16 %v503, %v501
      %v510 = vpack.c.bf16 %v504, %v502
      %v511 = vpack.c.bf16 %v507, %v505
      %v512 = vpack.c.bf16 %v508, %v506
      %v513 = vld [vmem:[%s2] sm:$0xf]
      %v514 = vld [vmem:[%s2 + $0x4] sm:$0xf]
      %v515 = vld [vmem:[%s2 + $0x8] sm:$0xf]
      %v516 = vld [vmem:[%s2 + $0xc] sm:$0xf]
      %v517 = vld [vmem:[%s2 + $0x10] sm:$0xf]
      %v518 = vld [vmem:[%s2 + $0x14] sm:$0xf]
      %v519 = vld [vmem:[%s2 + $0x18] sm:$0xf]
      %v520 = vld [vmem:[%s2 + $0x1c] sm:$0xf]
      %v521 = vld [vmem:[%s2 + $0x20] sm:$0xf]
      %v522 = vld [vmem:[%s2 + $0x24] sm:$0xf]
      %v523 = vld [vmem:[%s2 + $0x28] sm:$0xf]
      %v524 = vld [vmem:[%s2 + $0x2c] sm:$0xf]
      %v525 = vld [vmem:[%s3] sm:$0xff]
      %v526 = vld [vmem:[%s3 + $0x8] sm:$0xff]
      %v527 = vld [vmem:[%s3 + $0x10] sm:$0xff]
      %v528 = vld [vmem:[%s3 + $0x18] sm:$0xff]
      %v529 = vld [vmem:[%s3 + $0x20] sm:$0xff]
      %v530 = vld [vmem:[%s3 + $0x28] sm:$0xff]
      %v531 = vld [vmem:[%s3 + $0x30] sm:$0xff]
      %v532 = vld [vmem:[%s3 + $0x38] sm:$0xff]
      %v533 = vld [vmem:[%s3 + $0x40] sm:$0xff]
      %v534 = vld [vmem:[%s3 + $0x48] sm:$0xff]
      %v535 = vld [vmem:[%s3 + $0x50] sm:$0xff]
      %v536 = vld [vmem:[%s3 + $0x58] sm:$0xff]
      %538 = vset.pattern.permute.xlu0 0
      %539 = vperm.xlu0 %538, %v525
      %v540 = vpop.permute.xlu0 %539
      %543 = vset.pattern.permute.xlu0 0
      %544 = vperm.xlu0 %543, %v526
      %v545 = vpop.permute.xlu0 %544
      %548 = vset.pattern.permute.xlu0 0
      %549 = vperm.xlu0 %548, %v527
      %v550 = vpop.permute.xlu0 %549
      %553 = vset.pattern.permute.xlu0 0
      %554 = vperm.xlu0 %553, %v528
      %v555 = vpop.permute.xlu0 %554
      %558 = vset.pattern.permute.xlu0 0
      %559 = vperm.xlu0 %558, %v529
      %v560 = vpop.permute.xlu0 %559
      %563 = vset.pattern.permute.xlu0 0
      %564 = vperm.xlu0 %563, %v530
      %v565 = vpop.permute.xlu0 %564
      %568 = vset.pattern.permute.xlu0 0
      %569 = vperm.xlu0 %568, %v531
      %v570 = vpop.permute.xlu0 %569
      %573 = vset.pattern.permute.xlu0 0
      %574 = vperm.xlu0 %573, %v532
      %v575 = vpop.permute.xlu0 %574
      %578 = vset.pattern.permute.xlu0 0
      %579 = vperm.xlu0 %578, %v533
      %v580 = vpop.permute.xlu0 %579
      %583 = vset.pattern.permute.xlu0 0
      %584 = vperm.xlu0 %583, %v534
      %v585 = vpop.permute.xlu0 %584
      %588 = vset.pattern.permute.xlu0 0
      %589 = vperm.xlu0 %588, %v535
      %v590 = vpop.permute.xlu0 %589
      %593 = vset.pattern.permute.xlu0 0
      %594 = vperm.xlu0 %593, %v536
      %v595 = vpop.permute.xlu0 %594
      %v609 = vunpack.c.l.b16 %v513
      %v610 = vunpack.c.l.b16 %v514
      %v611 = vunpack.c.l.b16 %v515
      %v612 = vunpack.c.l.b16 %v516
      %v613 = vunpack.c.l.b16 %v517
      %v614 = vunpack.c.l.b16 %v518
      %v615 = vunpack.c.l.b16 %v519
      %v616 = vunpack.c.l.b16 %v520
      %v617 = vunpack.c.l.b16 %v521
      %v618 = vunpack.c.l.b16 %v522
      %v619 = vunpack.c.l.b16 %v523
      %v620 = vunpack.c.l.b16 %v524
      %v621 = vpack.c.b16 %v610, %v609
      %v622 = vpack.c.b16 %v612, %v611
      %v623 = vpack.c.b16 %v614, %v613
      %v624 = vpack.c.b16 %v616, %v615
      %v625 = vpack.c.b16 %v618, %v617
      %v626 = vpack.c.b16 %v620, %v619
      %vm627 = vcmask 261120
      %v629 = vsel %vm627, %v621, 0
      %v632 = vsel %vm627, %v622, 0
      %v635 = vsel %vm627, %v623, 0
      %v638 = vsel %vm627, %v624, 0
      %v641 = vsel %vm627, %v625, 0
      %v644 = vsel %vm627, %v626, 0
      %646 = vmatprep.subr.bf16.mxu0 %v510
      %647 = vmatpush1.bf16.msra.mxu0 %v509
      %648 = vmatprep.subr.bf16.mxu0 %v512
      %649 = vmatpush1.bf16.msra.mxu0 %v511
      %650 = vmatprep.subr.bf16.mxu0 0
      %651 = vmatpush1.bf16.msra.mxu0 0
      %652 = vmatprep.subr.bf16.mxu0 0
      %653 = vmatpush1.bf16.msra.mxu0 0
      %654 = vmatprep.subr.bf16.mxu0 0
      %655 = vmatpush1.bf16.msra.mxu0 0
      %656 = vmatprep.subr.bf16.mxu0 0
      %657 = vmatpush1.bf16.msra.mxu0 0
      %658 = vmatprep.subr.bf16.mxu0 0
      %659 = vmatpush1.bf16.msra.mxu0 0
      %660 = vmatprep.subr.bf16.mxu0 0
      %661 = vmatpush1.bf16.msra.mxu0 0
      %662 = vmatprep.subr.bf16.mxu0 0
      %663 = vmatpush1.bf16.msra.mxu0 0
      %664 = vmatprep.subr.bf16.mxu0 0
      %665 = vmatpush1.bf16.msra.mxu0 0
      %666 = vmatprep.subr.bf16.mxu0 0
      %667 = vmatpush1.bf16.msra.mxu0 0
      %668 = vmatprep.subr.bf16.mxu0 0
      %669 = vmatpush1.bf16.msra.mxu0 0
      %670 = vmatprep.subr.bf16.mxu0 0
      %671 = vmatpush1.bf16.msra.mxu0 0
      %672 = vmatprep.subr.bf16.mxu0 0
      %673 = vmatpush1.bf16.msra.mxu0 0
      %674 = vmatprep.subr.bf16.mxu0 0
      %675 = vmatpush1.bf16.msra.mxu0 0
      %676 = vmatprep.subr.bf16.mxu0 0
      %677 = vmatpush1.bf16.msra.mxu0 0
      %678 = vmatprep.mubr.bf16.mxu0 0
      %679 = vmatmul.mubr.bf16.gmra.mrb[0].mxu0 %v629
      %v680 = vpop.f32.mrb[0].mxu0
      %v681 = vadd.f32 %v540, %v680
      %v682 = vpop.f32.mrb[0].mxu0
      %v683 = vadd.f32 %v540, %v682
      %v684 = vpop.f32.mrb[0].mxu0
      %v685 = vadd.f32 %v545, %v684
      %v686 = vpop.f32.mrb[0].mxu0
      %v687 = vadd.f32 %v545, %v686
      %688 = vmatprep.mubr.bf16.mxu0 0
      %689 = vmatmul.mubr.bf16.gmra.mrb[0].mxu0 %v632
      %v690 = vpop.f32.mrb[0].mxu0
      %v691 = vadd.f32 %v550, %v690
      %v692 = vpop.f32.mrb[0].mxu0
      %v693 = vadd.f32 %v550, %v692
      %v694 = vpop.f32.mrb[0].mxu0
      %v695 = vadd.f32 %v555, %v694
      %v696 = vpop.f32.mrb[0].mxu0
      %v697 = vadd.f32 %v555, %v696
      %698 = vmatprep.mubr.bf16.mxu0 0
      %699 = vmatmul.mubr.bf16.gmra.mrb[0].mxu0 %v635
      %v700 = vpop.f32.mrb[0].mxu0
      %v701 = vadd.f32 %v560, %v700
      %v702 = vpop.f32.mrb[0].mxu0
      %v703 = vadd.f32 %v560, %v702
      %v704 = vpop.f32.mrb[0].mxu0
      %v705 = vadd.f32 %v565, %v704
      %v706 = vpop.f32.mrb[0].mxu0
      %v707 = vadd.f32 %v565, %v706
      %708 = vmatprep.mubr.bf16.mxu0 0
      %709 = vmatmul.mubr.bf16.gmra.mrb[0].mxu0 %v638
      %v710 = vpop.f32.mrb[0].mxu0
      %v711 = vadd.f32 %v570, %v710
      %v712 = vpop.f32.mrb[0].mxu0
      %v713 = vadd.f32 %v570, %v712
      %v714 = vpop.f32.mrb[0].mxu0
      %v715 = vadd.f32 %v575, %v714
      %v716 = vpop.f32.mrb[0].mxu0
      %v717 = vadd.f32 %v575, %v716
      %718 = vmatprep.mubr.bf16.mxu0 0
      %719 = vmatmul.mubr.bf16.gmra.mrb[0].mxu0 %v641
      %v720 = vpop.f32.mrb[0].mxu0
      %v721 = vadd.f32 %v580, %v720
      %v722 = vpop.f32.mrb[0].mxu0
      %v723 = vadd.f32 %v580, %v722
      %v724 = vpop.f32.mrb[0].mxu0
      %v725 = vadd.f32 %v585, %v724
      %v726 = vpop.f32.mrb[0].mxu0
      %v727 = vadd.f32 %v585, %v726
      %728 = vmatprep.mubr.bf16.mxu0 0
      %729 = vmatmul.mubr.bf16.gmra.mrb[0].mxu0 %v644
      %v730 = vpop.f32.mrb[0].mxu0
      %v731 = vadd.f32 %v590, %v730
      %v732 = vpop.f32.mrb[0].mxu0
      %v733 = vadd.f32 %v590, %v732
      %v734 = vpop.f32.mrb[0].mxu0
      %v735 = vadd.f32 %v595, %v734
      %v736 = vpop.f32.mrb[0].mxu0
      %v737 = vadd.f32 %v595, %v736
      %738 = vdwg.mxu0
      %v739 = vpack.c.bf16 %v685, %v681
      %v740 = vpack.c.bf16 %v687, %v683
      %v741 = vpack.c.bf16 %v695, %v691
      %v742 = vpack.c.bf16 %v697, %v693
      %v743 = vpack.c.bf16 %v705, %v701
      %v744 = vpack.c.bf16 %v707, %v703
      %v745 = vpack.c.bf16 %v715, %v711
      %v746 = vpack.c.bf16 %v717, %v713
      %v747 = vpack.c.bf16 %v725, %v721
      %v748 = vpack.c.bf16 %v727, %v723
      %v749 = vpack.c.bf16 %v735, %v731
      %v750 = vpack.c.bf16 %v737, %v733
      %751 = vxpose.xlu0.c.b16.start [1/8] %v739, 128
      %752 = vxpose.xlu0.c.b16.cont [2/8] 0, 128
      %753 = vxpose.xlu0.c.b16.cont [3/8] 0, 128
      %754 = vxpose.xlu0.c.b16.cont [4/8] 0, 128
      %755 = vxpose.xlu0.c.b16.cont [5/8] 0, 128
      %756 = vxpose.xlu0.c.b16.cont [6/8] 0, 128
      %757 = vxpose.xlu0.c.b16.cont [7/8] 0, 128
      %758 = vxpose.xlu0.c.b16.end [8/8] 0, 128
      %v759 = vpop.trf.xlu0
      %v760 = vpop.trf.xlu0
      %v761 = vpop.trf.xlu0
      %v762 = vpop.trf.xlu0
      %v763 = vpop.trf.xlu0
      %v764 = vpop.trf.xlu0
      %v765 = vpop.trf.xlu0
      %v766 = vpop.trf.xlu0
      %767 = vxpose.xlu0.c.b16.start [1/8] %v740, 128
      %768 = vxpose.xlu0.c.b16.cont [2/8] 0, 128
      %769 = vxpose.xlu0.c.b16.cont [3/8] 0, 128
      %770 = vxpose.xlu0.c.b16.cont [4/8] 0, 128
      %771 = vxpose.xlu0.c.b16.cont [5/8] 0, 128
      %772 = vxpose.xlu0.c.b16.cont [6/8] 0, 128
      %773 = vxpose.xlu0.c.b16.cont [7/8] 0, 128
      %774 = vxpose.xlu0.c.b16.end [8/8] 0, 128
      %v775 = vpop.trf.xlu0
      %v776 = vpop.trf.xlu0
      %v777 = vpop.trf.xlu0
      %v778 = vpop.trf.xlu0
      %v779 = vpop.trf.xlu0
      %v780 = vpop.trf.xlu0
      %v781 = vpop.trf.xlu0
      %v782 = vpop.trf.xlu0
      %vm783 = vcmask 130048
      %v785 = vsel %vm783, %v759, 0
      %v788 = vsel %vm783, %v760, 0
      %v791 = vsel %vm783, %v761, 0
      %v794 = vsel %vm783, %v762, 0
      %v797 = vsel %vm783, %v763, 0
      %v800 = vsel %vm783, %v764, 0
      %v803 = vsel %vm783, %v765, 0
      %v806 = vsel %vm783, %v766, 0
      %v809 = vsel %vm783, %v775, 0
      %v812 = vsel %vm783, %v776, 0
      %v815 = vsel %vm783, %v777, 0
      %v818 = vsel %vm783, %v778, 0
      %v821 = vsel %vm783, %v779, 0
      %v824 = vsel %vm783, %v780, 0
      %v827 = vsel %vm783, %v781, 0
      %v830 = vsel %vm783, %v782, 0
      %832 = vmatprep.subr.bf16.mxu0 %v744
      %833 = vmatpush1.bf16.msra.mxu0 %v743
      %834 = vmatprep.subr.bf16.mxu0 0
      %835 = vmatpush1.bf16.msra.mxu0 0
      %836 = vmatprep.subr.bf16.mxu0 0
      %837 = vmatpush1.bf16.msra.mxu0 0
      %838 = vmatprep.subr.bf16.mxu0 0
      %839 = vmatpush1.bf16.msra.mxu0 0
      %840 = vmatprep.subr.bf16.mxu0 0
      %841 = vmatpush1.bf16.msra.mxu0 0
      %842 = vmatprep.subr.bf16.mxu0 0
      %843 = vmatpush1.bf16.msra.mxu0 0
      %844 = vmatprep.subr.bf16.mxu0 0
      %845 = vmatpush1.bf16.msra.mxu0 0
      %846 = vmatprep.subr.bf16.mxu0 0
      %847 = vmatpush1.bf16.msra.mxu0 0
      %848 = vmatprep.subr.bf16.mxu0 0
      %849 = vmatpush1.bf16.msra.mxu0 0
      %850 = vmatprep.subr.bf16.mxu0 0
      %851 = vmatpush1.bf16.msra.mxu0 0
      %852 = vmatprep.subr.bf16.mxu0 0
      %853 = vmatpush1.bf16.msra.mxu0 0
      %854 = vmatprep.subr.bf16.mxu0 0
      %855 = vmatpush1.bf16.msra.mxu0 0
      %856 = vmatprep.subr.bf16.mxu0 0
      %857 = vmatpush1.bf16.msra.mxu0 0
      %858 = vmatprep.subr.bf16.mxu0 0
      %859 = vmatpush1.bf16.msra.mxu0 0
      %860 = vmatprep.subr.bf16.mxu0 0
      %861 = vmatpush1.bf16.msra.mxu0 0
      %862 = vmatprep.subr.bf16.mxu0 0
      %863 = vmatpush1.bf16.msra.mxu0 0
      %864 = vmatprep.mubr.bf16.mxu0 0
      %865 = vmatmul.mubr.bf16.gmra.mrb[0].mxu0 %v785
      %v866 = vpop.f32.mrb[0].mxu0
      %v867 = vadd.f32 0.0, %v866
      %v868 = vpop.f32.mrb[0].mxu0
      %v869 = vadd.f32 0.0, %v868
      %v870 = vpop.f32.mrb[0].mxu0
      %v871 = vadd.f32 0.0, %v870
      %v872 = vpop.f32.mrb[0].mxu0
      %v873 = vadd.f32 0.0, %v872
      %874 = vmatprep.mubr.bf16.mxu0 0
      %875 = vmatmul.mubr.bf16.gmra.mrb[0].mxu0 %v788
      %v876 = vpop.f32.mrb[0].mxu0
      %v877 = vadd.f32 0.0, %v876
      %v878 = vpop.f32.mrb[0].mxu0
      %v879 = vadd.f32 0.0, %v878
      %v880 = vpop.f32.mrb[0].mxu0
      %v881 = vadd.f32 0.0, %v880
      %v882 = vpop.f32.mrb[0].mxu0
      %v883 = vadd.f32 0.0, %v882
      %884 = vmatprep.mubr.bf16.mxu0 0
      %885 = vmatmul.mubr.bf16.gmra.mrb[0].mxu0 %v791
      %v886 = vpop.f32.mrb[0].mxu0
      %v887 = vadd.f32 0.0, %v886
      %v888 = vpop.f32.mrb[0].mxu0
      %v889 = vadd.f32 0.0, %v888
      %v890 = vpop.f32.mrb[0].mxu0
      %v891 = vadd.f32 0.0, %v890
      %v892 = vpop.f32.mrb[0].mxu0
      %v893 = vadd.f32 0.0, %v892
      %894 = vmatprep.mubr.bf16.mxu0 0
      %895 = vmatmul.mubr.bf16.gmra.mrb[0].mxu0 %v794
      %v896 = vpop.f32.mrb[0].mxu0
      %v897 = vadd.f32 0.0, %v896
      %v898 = vpop.f32.mrb[0].mxu0
      %v899 = vadd.f32 0.0, %v898
      %v900 = vpop.f32.mrb[0].mxu0
      %v901 = vadd.f32 0.0, %v900
      %v902 = vpop.f32.mrb[0].mxu0
      %v903 = vadd.f32 0.0, %v902
      %904 = vmatprep.mubr.bf16.mxu0 0
      %905 = vmatmul.mubr.bf16.gmra.mrb[0].mxu0 %v797
      %v906 = vpop.f32.mrb[0].mxu0
      %v907 = vadd.f32 0.0, %v906
      %v908 = vpop.f32.mrb[0].mxu0
      %v909 = vadd.f32 0.0, %v908
      %v910 = vpop.f32.mrb[0].mxu0
      %v911 = vadd.f32 0.0, %v910
      %v912 = vpop.f32.mrb[0].mxu0
      %v913 = vadd.f32 0.0, %v912
      %914 = vmatprep.mubr.bf16.mxu0 0
      %915 = vmatmul.mubr.bf16.gmra.mrb[0].mxu0 %v800
      %v916 = vpop.f32.mrb[0].mxu0
      %v917 = vadd.f32 0.0, %v916
      %v918 = vpop.f32.mrb[0].mxu0
      %v919 = vadd.f32 0.0, %v918
      %v920 = vpop.f32.mrb[0].mxu0
      %v921 = vadd.f32 0.0, %v920
      %v922 = vpop.f32.mrb[0].mxu0
      %v923 = vadd.f32 0.0, %v922
      %924 = vmatprep.mubr.bf16.mxu0 0
      %925 = vmatmul.mubr.bf16.gmra.mrb[0].mxu0 %v803
      %v926 = vpop.f32.mrb[0].mxu0
      %v927 = vadd.f32 0.0, %v926
      %v928 = vpop.f32.mrb[0].mxu0
      %v929 = vadd.f32 0.0, %v928
      %v930 = vpop.f32.mrb[0].mxu0
      %v931 = vadd.f32 0.0, %v930
      %v932 = vpop.f32.mrb[0].mxu0
      %v933 = vadd.f32 0.0, %v932
      %934 = vmatprep.mubr.bf16.mxu0 0
      %935 = vmatmul.mubr.bf16.gmra.mrb[0].mxu0 %v806
      %v936 = vpop.f32.mrb[0].mxu0
      %v937 = vadd.f32 0.0, %v936
      %v938 = vpop.f32.mrb[0].mxu0
      %v939 = vadd.f32 0.0, %v938
      %v940 = vpop.f32.mrb[0].mxu0
      %v941 = vadd.f32 0.0, %v940
      %v942 = vpop.f32.mrb[0].mxu0
      %v943 = vadd.f32 0.0, %v942
      %944 = vmatprep.mubr.bf16.mxu0 0
      %945 = vmatmul.mubr.bf16.gmra.mrb[0].mxu0 %v809
      %v946 = vpop.f32.mrb[0].mxu0
      %v947 = vadd.f32 0.0, %v946
      %v948 = vpop.f32.mrb[0].mxu0
      %v949 = vadd.f32 0.0, %v948
      %v950 = vpop.f32.mrb[0].mxu0
      %v951 = vadd.f32 0.0, %v950
      %v952 = vpop.f32.mrb[0].mxu0
      %v953 = vadd.f32 0.0, %v952
      %954 = vmatprep.mubr.bf16.mxu0 0
      %955 = vmatmul.mubr.bf16.gmra.mrb[0].mxu0 %v812
      %v956 = vpop.f32.mrb[0].mxu0
      %v957 = vadd.f32 0.0, %v956
      %v958 = vpop.f32.mrb[0].mxu0
      %v959 = vadd.f32 0.0, %v958
      %v960 = vpop.f32.mrb[0].mxu0
      %v961 = vadd.f32 0.0, %v960
      %v962 = vpop.f32.mrb[0].mxu0
      %v963 = vadd.f32 0.0, %v962
      %964 = vmatprep.mubr.bf16.mxu0 0
      %965 = vmatmul.mubr.bf16.gmra.mrb[0].mxu0 %v815
      %v966 = vpop.f32.mrb[0].mxu0
      %v967 = vadd.f32 0.0, %v966
      %v968 = vpop.f32.mrb[0].mxu0
      %v969 = vadd.f32 0.0, %v968
      %v970 = vpop.f32.mrb[0].mxu0
      %v971 = vadd.f32 0.0, %v970
      %v972 = vpop.f32.mrb[0].mxu0
      %v973 = vadd.f32 0.0, %v972
      %974 = vmatprep.mubr.bf16.mxu0 0
      %975 = vmatmul.mubr.bf16.gmra.mrb[0].mxu0 %v818
      %v976 = vpop.f32.mrb[0].mxu0
      %v977 = vadd.f32 0.0, %v976
      %v978 = vpop.f32.mrb[0].mxu0
      %v979 = vadd.f32 0.0, %v978
      %v980 = vpop.f32.mrb[0].mxu0
      %v981 = vadd.f32 0.0, %v980
      %v982 = vpop.f32.mrb[0].mxu0
      %v983 = vadd.f32 0.0, %v982
      %984 = vmatprep.mubr.bf16.mxu0 0
      %985 = vmatmul.mubr.bf16.gmra.mrb[0].mxu0 %v821
      %v986 = vpop.f32.mrb[0].mxu0
      %v987 = vadd.f32 0.0, %v986
      %v988 = vpop.f32.mrb[0].mxu0
      %v989 = vadd.f32 0.0, %v988
      %v990 = vpop.f32.mrb[0].mxu0
      %v991 = vadd.f32 0.0, %v990
      %v992 = vpop.f32.mrb[0].mxu0
      %v993 = vadd.f32 0.0, %v992
      %994 = vmatprep.mubr.bf16.mxu0 0
      %995 = vmatmul.mubr.bf16.gmra.mrb[0].mxu0 %v824
      %v996 = vpop.f32.mrb[0].mxu0
      %v997 = vadd.f32 0.0, %v996
      %v998 = vpop.f32.mrb[0].mxu0
      %v999 = vadd.f32 0.0, %v998
      %v1000 = vpop.f32.mrb[0].mxu0
      %v1001 = vadd.f32 0.0, %v1000
      %v1002 = vpop.f32.mrb[0].mxu0
      %v1003 = vadd.f32 0.0, %v1002
      %1004 = vmatprep.mubr.bf16.mxu0 0
      %1005 = vmatmul.mubr.bf16.gmra.mrb[0].mxu0 %v827
      %v1006 = vpop.f32.mrb[0].mxu0
      %v1007 = vadd.f32 0.0, %v1006
      %v1008 = vpop.f32.mrb[0].mxu0
      %v1009 = vadd.f32 0.0, %v1008
      %v1010 = vpop.f32.mrb[0].mxu0
      %v1011 = vadd.f32 0.0, %v1010
      %v1012 = vpop.f32.mrb[0].mxu0
      %v1013 = vadd.f32 0.0, %v1012
      %1014 = vmatprep.mubr.bf16.mxu0 0
      %1015 = vmatmul.mubr.bf16.gmra.mrb[0].mxu0 %v830
      %v1016 = vpop.f32.mrb[0].mxu0
      %v1017 = vadd.f32 0.0, %v1016
      %v1018 = vpop.f32.mrb[0].mxu0
      %v1019 = vadd.f32 0.0, %v1018
      %v1020 = vpop.f32.mrb[0].mxu0
      %v1021 = vadd.f32 0.0, %v1020
      %v1022 = vpop.f32.mrb[0].mxu0
      %v1023 = vadd.f32 0.0, %v1022
      %1024 = vdwg.mxu0
      %1025 = vxpose.xlu0.c.b16.start [1/8] %v741, 128
      %1026 = vxpose.xlu0.c.b16.cont [2/8] 0, 128
      %1027 = vxpose.xlu0.c.b16.cont [3/8] 0, 128
      %1028 = vxpose.xlu0.c.b16.cont [4/8] 0, 128
      %1029 = vxpose.xlu0.c.b16.cont [5/8] 0, 128
      %1030 = vxpose.xlu0.c.b16.cont [6/8] 0, 128
      %1031 = vxpose.xlu0.c.b16.cont [7/8] 0, 128
      %1032 = vxpose.xlu0.c.b16.end [8/8] 0, 128
      %v1033 = vpop.trf.xlu0
      %v1034 = vpop.trf.xlu0
      %v1035 = vpop.trf.xlu0
      %v1036 = vpop.trf.xlu0
      %v1037 = vpop.trf.xlu0
      %v1038 = vpop.trf.xlu0
      %v1039 = vpop.trf.xlu0
      %v1040 = vpop.trf.xlu0
      %1041 = vxpose.xlu0.c.b16.start [1/8] %v742, 128
      %1042 = vxpose.xlu0.c.b16.cont [2/8] 0, 128
      %1043 = vxpose.xlu0.c.b16.cont [3/8] 0, 128
      %1044 = vxpose.xlu0.c.b16.cont [4/8] 0, 128
      %1045 = vxpose.xlu0.c.b16.cont [5/8] 0, 128
      %1046 = vxpose.xlu0.c.b16.cont [6/8] 0, 128
      %1047 = vxpose.xlu0.c.b16.cont [7/8] 0, 128
      %1048 = vxpose.xlu0.c.b16.end [8/8] 0, 128
      %v1049 = vpop.trf.xlu0
      %v1050 = vpop.trf.xlu0
      %v1051 = vpop.trf.xlu0
      %v1052 = vpop.trf.xlu0
      %v1053 = vpop.trf.xlu0
      %v1054 = vpop.trf.xlu0
      %v1055 = vpop.trf.xlu0
      %v1056 = vpop.trf.xlu0
      %v1058 = vsel %vm783, %v1033, 0
      %v1061 = vsel %vm783, %v1034, 0
      %v1064 = vsel %vm783, %v1035, 0
      %v1067 = vsel %vm783, %v1036, 0
      %v1070 = vsel %vm783, %v1037, 0
      %v1073 = vsel %vm783, %v1038, 0
      %v1076 = vsel %vm783, %v1039, 0
      %v1079 = vsel %vm783, %v1040, 0
      %v1082 = vsel %vm783, %v1049, 0
      %v1085 = vsel %vm783, %v1050, 0
      %v1088 = vsel %vm783, %v1051, 0
      %v1091 = vsel %vm783, %v1052, 0
      %v1094 = vsel %vm783, %v1053, 0
      %v1097 = vsel %vm783, %v1054, 0
      %v1100 = vsel %vm783, %v1055, 0
      %v1103 = vsel %vm783, %v1056, 0
      %1105 = vmatprep.subr.bf16.mxu0 %v746
      %1106 = vmatpush1.bf16.msra.mxu0 %v745
      %1107 = vmatprep.subr.bf16.mxu0 0
      %1108 = vmatpush1.bf16.msra.mxu0 0
      %1109 = vmatprep.subr.bf16.mxu0 0
      %1110 = vmatpush1.bf16.msra.mxu0 0
      %1111 = vmatprep.subr.bf16.mxu0 0
      %1112 = vmatpush1.bf16.msra.mxu0 0
      %1113 = vmatprep.subr.bf16.mxu0 0
      %1114 = vmatpush1.bf16.msra.mxu0 0
      %1115 = vmatprep.subr.bf16.mxu0 0
      %1116 = vmatpush1.bf16.msra.mxu0 0
      %1117 = vmatprep.subr.bf16.mxu0 0
      %1118 = vmatpush1.bf16.msra.mxu0 0
      %1119 = vmatprep.subr.bf16.mxu0 0
      %1120 = vmatpush1.bf16.msra.mxu0 0
      %1121 = vmatprep.subr.bf16.mxu0 0
      %1122 = vmatpush1.bf16.msra.mxu0 0
      %1123 = vmatprep.subr.bf16.mxu0 0
      %1124 = vmatpush1.bf16.msra.mxu0 0
      %1125 = vmatprep.subr.bf16.mxu0 0
      %1126 = vmatpush1.bf16.msra.mxu0 0
      %1127 = vmatprep.subr.bf16.mxu0 0
      %1128 = vmatpush1.bf16.msra.mxu0 0
      %1129 = vmatprep.subr.bf16.mxu0 0
      %1130 = vmatpush1.bf16.msra.mxu0 0
      %1131 = vmatprep.subr.bf16.mxu0 0
      %1132 = vmatpush1.bf16.msra.mxu0 0
      %1133 = vmatprep.subr.bf16.mxu0 0
      %1134 = vmatpush1.bf16.msra.mxu0 0
      %1135 = vmatprep.subr.bf16.mxu0 0
      %1136 = vmatpush1.bf16.msra.mxu0 0
      %1137 = vmatprep.mubr.bf16.mxu0 0
      %1138 = vmatmul.mubr.bf16.gmra.mrb[0].mxu0 %v1058
      %v1139 = vpop.f32.mrb[0].mxu0
      %v1140 = vadd.f32 0.0, %v1139
      %v1141 = vpop.f32.mrb[0].mxu0
      %v1142 = vadd.f32 0.0, %v1141
      %v1143 = vpop.f32.mrb[0].mxu0
      %v1144 = vadd.f32 0.0, %v1143
      %v1145 = vpop.f32.mrb[0].mxu0
      %v1146 = vadd.f32 0.0, %v1145
      %1147 = vmatprep.mubr.bf16.mxu0 0
      %1148 = vmatmul.mubr.bf16.gmra.mrb[0].mxu0 %v1061
      %v1149 = vpop.f32.mrb[0].mxu0
      %v1150 = vadd.f32 0.0, %v1149
      %v1151 = vpop.f32.mrb[0].mxu0
      %v1152 = vadd.f32 0.0, %v1151
      %v1153 = vpop.f32.mrb[0].mxu0
      %v1154 = vadd.f32 0.0, %v1153
      %v1155 = vpop.f32.mrb[0].mxu0
      %v1156 = vadd.f32 0.0, %v1155
      %1157 = vmatprep.mubr.bf16.mxu0 0
      %1158 = vmatmul.mubr.bf16.gmra.mrb[0].mxu0 %v1064
      %v1159 = vpop.f32.mrb[0].mxu0
      %v1160 = vadd.f32 0.0, %v1159
      %v1161 = vpop.f32.mrb[0].mxu0
      %v1162 = vadd.f32 0.0, %v1161
      %v1163 = vpop.f32.mrb[0].mxu0
      %v1164 = vadd.f32 0.0, %v1163
      %v1165 = vpop.f32.mrb[0].mxu0
      %v1166 = vadd.f32 0.0, %v1165
      %1167 = vmatprep.mubr.bf16.mxu0 0
      %1168 = vmatmul.mubr.bf16.gmra.mrb[0].mxu0 %v1067
      %v1169 = vpop.f32.mrb[0].mxu0
      %v1170 = vadd.f32 0.0, %v1169
      %v1171 = vpop.f32.mrb[0].mxu0
      %v1172 = vadd.f32 0.0, %v1171
      %v1173 = vpop.f32.mrb[0].mxu0
      %v1174 = vadd.f32 0.0, %v1173
      %v1175 = vpop.f32.mrb[0].mxu0
      %v1176 = vadd.f32 0.0, %v1175
      %1177 = vmatprep.mubr.bf16.mxu0 0
      %1178 = vmatmul.mubr.bf16.gmra.mrb[0].mxu0 %v1070
      %v1179 = vpop.f32.mrb[0].mxu0
      %v1180 = vadd.f32 0.0, %v1179
      %v1181 = vpop.f32.mrb[0].mxu0
      %v1182 = vadd.f32 0.0, %v1181
      %v1183 = vpop.f32.mrb[0].mxu0
      %v1184 = vadd.f32 0.0, %v1183
      %v1185 = vpop.f32.mrb[0].mxu0
      %v1186 = vadd.f32 0.0, %v1185
      %1187 = vmatprep.mubr.bf16.mxu0 0
      %1188 = vmatmul.mubr.bf16.gmra.mrb[0].mxu0 %v1073
      %v1189 = vpop.f32.mrb[0].mxu0
      %v1190 = vadd.f32 0.0, %v1189
      %v1191 = vpop.f32.mrb[0].mxu0
      %v1192 = vadd.f32 0.0, %v1191
      %v1193 = vpop.f32.mrb[0].mxu0
      %v1194 = vadd.f32 0.0, %v1193
      %v1195 = vpop.f32.mrb[0].mxu0
      %v1196 = vadd.f32 0.0, %v1195
      %1197 = vmatprep.mubr.bf16.mxu0 0
      %1198 = vmatmul.mubr.bf16.gmra.mrb[0].mxu0 %v1076
      %v1199 = vpop.f32.mrb[0].mxu0
      %v1200 = vadd.f32 0.0, %v1199
      %v1201 = vpop.f32.mrb[0].mxu0
      %v1202 = vadd.f32 0.0, %v1201
      %v1203 = vpop.f32.mrb[0].mxu0
      %v1204 = vadd.f32 0.0, %v1203
      %v1205 = vpop.f32.mrb[0].mxu0
      %v1206 = vadd.f32 0.0, %v1205
      %1207 = vmatprep.mubr.bf16.mxu0 0
      %1208 = vmatmul.mubr.bf16.gmra.mrb[0].mxu0 %v1079
      %v1209 = vpop.f32.mrb[0].mxu0
      %v1210 = vadd.f32 0.0, %v1209
      %v1211 = vpop.f32.mrb[0].mxu0
      %v1212 = vadd.f32 0.0, %v1211
      %v1213 = vpop.f32.mrb[0].mxu0
      %v1214 = vadd.f32 0.0, %v1213
      %v1215 = vpop.f32.mrb[0].mxu0
      %v1216 = vadd.f32 0.0, %v1215
      %1217 = vmatprep.mubr.bf16.mxu0 0
      %1218 = vmatmul.mubr.bf16.gmra.mrb[0].mxu0 %v1082
      %v1219 = vpop.f32.mrb[0].mxu0
      %v1220 = vadd.f32 0.0, %v1219
      %v1221 = vpop.f32.mrb[0].mxu0
      %v1222 = vadd.f32 0.0, %v1221
      %v1223 = vpop.f32.mrb[0].mxu0
      %v1224 = vadd.f32 0.0, %v1223
      %v1225 = vpop.f32.mrb[0].mxu0
      %v1226 = vadd.f32 0.0, %v1225
      %1227 = vmatprep.mubr.bf16.mxu0 0
      %1228 = vmatmul.mubr.bf16.gmra.mrb[0].mxu0 %v1085
      %v1229 = vpop.f32.mrb[0].mxu0
      %v1230 = vadd.f32 0.0, %v1229
      %v1231 = vpop.f32.mrb[0].mxu0
      %v1232 = vadd.f32 0.0, %v1231
      %v1233 = vpop.f32.mrb[0].mxu0
      %v1234 = vadd.f32 0.0, %v1233
      %v1235 = vpop.f32.mrb[0].mxu0
      %v1236 = vadd.f32 0.0, %v1235
      %1237 = vmatprep.mubr.bf16.mxu0 0
      %1238 = vmatmul.mubr.bf16.gmra.mrb[0].mxu0 %v1088
      %v1239 = vpop.f32.mrb[0].mxu0
      %v1240 = vadd.f32 0.0, %v1239
      %v1241 = vpop.f32.mrb[0].mxu0
      %v1242 = vadd.f32 0.0, %v1241
      %v1243 = vpop.f32.mrb[0].mxu0
      %v1244 = vadd.f32 0.0, %v1243
      %v1245 = vpop.f32.mrb[0].mxu0
      %v1246 = vadd.f32 0.0, %v1245
      %1247 = vmatprep.mubr.bf16.mxu0 0
      %1248 = vmatmul.mubr.bf16.gmra.mrb[0].mxu0 %v1091
      %v1249 = vpop.f32.mrb[0].mxu0
      %v1250 = vadd.f32 0.0, %v1249
      %v1251 = vpop.f32.mrb[0].mxu0
      %v1252 = vadd.f32 0.0, %v1251
      %v1253 = vpop.f32.mrb[0].mxu0
      %v1254 = vadd.f32 0.0, %v1253
      %v1255 = vpop.f32.mrb[0].mxu0
      %v1256 = vadd.f32 0.0, %v1255
      %1257 = vmatprep.mubr.bf16.mxu0 0
      %1258 = vmatmul.mubr.bf16.gmra.mrb[0].mxu0 %v1094
      %v1259 = vpop.f32.mrb[0].mxu0
      %v1260 = vadd.f32 0.0, %v1259
      %v1261 = vpop.f32.mrb[0].mxu0
      %v1262 = vadd.f32 0.0, %v1261
      %v1263 = vpop.f32.mrb[0].mxu0
      %v1264 = vadd.f32 0.0, %v1263
      %v1265 = vpop.f32.mrb[0].mxu0
      %v1266 = vadd.f32 0.0, %v1265
      %1267 = vmatprep.mubr.bf16.mxu0 0
      %1268 = vmatmul.mubr.bf16.gmra.mrb[0].mxu0 %v1097
      %v1269 = vpop.f32.mrb[0].mxu0
      %v1270 = vadd.f32 0.0, %v1269
      %v1271 = vpop.f32.mrb[0].mxu0
      %v1272 = vadd.f32 0.0, %v1271
      %v1273 = vpop.f32.mrb[0].mxu0
      %v1274 = vadd.f32 0.0, %v1273
      %v1275 = vpop.f32.mrb[0].mxu0
      %v1276 = vadd.f32 0.0, %v1275
      %1277 = vmatprep.mubr.bf16.mxu0 0
      %1278 = vmatmul.mubr.bf16.gmra.mrb[0].mxu0 %v1100
      %v1279 = vpop.f32.mrb[0].mxu0
      %v1280 = vadd.f32 0.0, %v1279
      %v1281 = vpop.f32.mrb[0].mxu0
      %v1282 = vadd.f32 0.0, %v1281
      %v1283 = vpop.f32.mrb[0].mxu0
      %v1284 = vadd.f32 0.0, %v1283
      %v1285 = vpop.f32.mrb[0].mxu0
      %v1286 = vadd.f32 0.0, %v1285
      %1287 = vmatprep.mubr.bf16.mxu0 0
      %1288 = vmatmul.mubr.bf16.gmra.mrb[0].mxu0 %v1103
      %v1289 = vpop.f32.mrb[0].mxu0
      %v1290 = vadd.f32 0.0, %v1289
      %v1291 = vpop.f32.mrb[0].mxu0
      %v1292 = vadd.f32 0.0, %v1291
      %v1293 = vpop.f32.mrb[0].mxu0
      %v1294 = vadd.f32 0.0, %v1293
      %v1295 = vpop.f32.mrb[0].mxu0
      %v1296 = vadd.f32 0.0, %v1295
      %1297 = vdwg.mxu0
      %v1298 = vmax.f32 %v867, %v869
      %1299 = vmax.xlane.f32.xlu0 %v1298
      %v1300 = vpop.xlane.xlu0 %1299
      %v1301 = vmax.f32 %v871, %v873
      %1302 = vmax.xlane.f32.xlu0 %v1301
      %v1303 = vpop.xlane.xlu0 %1302
      %v1304 = vmax.f32 %v877, %v879
      %1305 = vmax.xlane.f32.xlu0 %v1304
      %v1306 = vpop.xlane.xlu0 %1305
      %v1307 = vmax.f32 %v881, %v883
      %1308 = vmax.xlane.f32.xlu0 %v1307
      %v1309 = vpop.xlane.xlu0 %1308
      %v1310 = vmax.f32 %v887, %v889
      %1311 = vmax.xlane.f32.xlu0 %v1310
      %v1312 = vpop.xlane.xlu0 %1311
      %v1313 = vmax.f32 %v891, %v893
      %1314 = vmax.xlane.f32.xlu0 %v1313
      %v1315 = vpop.xlane.xlu0 %1314
      %v1316 = vmax.f32 %v897, %v899
      %1317 = vmax.xlane.f32.xlu0 %v1316
      %v1318 = vpop.xlane.xlu0 %1317
      %v1319 = vmax.f32 %v901, %v903
      %1320 = vmax.xlane.f32.xlu0 %v1319
      %v1321 = vpop.xlane.xlu0 %1320
      %v1322 = vmax.f32 %v907, %v909
      %1323 = vmax.xlane.f32.xlu0 %v1322
      %v1324 = vpop.xlane.xlu0 %1323
      %v1325 = vmax.f32 %v911, %v913
      %1326 = vmax.xlane.f32.xlu0 %v1325
      %v1327 = vpop.xlane.xlu0 %1326
      %v1328 = vmax.f32 %v917, %v919
      %1329 = vmax.xlane.f32.xlu0 %v1328
      %v1330 = vpop.xlane.xlu0 %1329
      %v1331 = vmax.f32 %v921, %v923
      %1332 = vmax.xlane.f32.xlu0 %v1331
      %v1333 = vpop.xlane.xlu0 %1332
      %v1334 = vmax.f32 %v927, %v929
      %1335 = vmax.xlane.f32.xlu0 %v1334
      %v1336 = vpop.xlane.xlu0 %1335
      %v1337 = vmax.f32 %v931, %v933
      %1338 = vmax.xlane.f32.xlu0 %v1337
      %v1339 = vpop.xlane.xlu0 %1338
      %v1340 = vmax.f32 %v937, %v939
      %1341 = vmax.xlane.f32.xlu0 %v1340
      %v1342 = vpop.xlane.xlu0 %1341
      %v1343 = vmax.f32 %v941, %v943
      %1344 = vmax.xlane.f32.xlu0 %v1343
      %v1345 = vpop.xlane.xlu0 %1344
      %v1346 = vmax.f32 %v947, %v949
      %1347 = vmax.xlane.f32.xlu0 %v1346
      %v1348 = vpop.xlane.xlu0 %1347
      %v1349 = vmax.f32 %v951, %v953
      %1350 = vmax.xlane.f32.xlu0 %v1349
      %v1351 = vpop.xlane.xlu0 %1350
      %v1352 = vmax.f32 %v957, %v959
      %1353 = vmax.xlane.f32.xlu0 %v1352
      %v1354 = vpop.xlane.xlu0 %1353
      %v1355 = vmax.f32 %v961, %v963
      %1356 = vmax.xlane.f32.xlu0 %v1355
      %v1357 = vpop.xlane.xlu0 %1356
      %v1358 = vmax.f32 %v967, %v969
      %1359 = vmax.xlane.f32.xlu0 %v1358
      %v1360 = vpop.xlane.xlu0 %1359
      %v1361 = vmax.f32 %v971, %v973
      %1362 = vmax.xlane.f32.xlu0 %v1361
      %v1363 = vpop.xlane.xlu0 %1362
      %v1364 = vmax.f32 %v977, %v979
      %1365 = vmax.xlane.f32.xlu0 %v1364
      %v1366 = vpop.xlane.xlu0 %1365
      %v1367 = vmax.f32 %v981, %v983
      %1368 = vmax.xlane.f32.xlu0 %v1367
      %v1369 = vpop.xlane.xlu0 %1368
      %v1370 = vmax.f32 %v987, %v989
      %1371 = vmax.xlane.f32.xlu0 %v1370
      %v1372 = vpop.xlane.xlu0 %1371
      %v1373 = vmax.f32 %v991, %v993
      %1374 = vmax.xlane.f32.xlu0 %v1373
      %v1375 = vpop.xlane.xlu0 %1374
      %v1376 = vmax.f32 %v997, %v999
      %1377 = vmax.xlane.f32.xlu0 %v1376
      %v1378 = vpop.xlane.xlu0 %1377
      %v1379 = vmax.f32 %v1001, %v1003
      %1380 = vmax.xlane.f32.xlu0 %v1379
      %v1381 = vpop.xlane.xlu0 %1380
      %v1382 = vmax.f32 %v1007, %v1009
      %1383 = vmax.xlane.f32.xlu0 %v1382
      %v1384 = vpop.xlane.xlu0 %1383
      %v1385 = vmax.f32 %v1011, %v1013
      %1386 = vmax.xlane.f32.xlu0 %v1385
      %v1387 = vpop.xlane.xlu0 %1386
      %v1388 = vmax.f32 %v1017, %v1019
      %1389 = vmax.xlane.f32.xlu0 %v1388
      %v1390 = vpop.xlane.xlu0 %1389
      %v1391 = vmax.f32 %v1021, %v1023
      %1392 = vmax.xlane.f32.xlu0 %v1391
      %v1393 = vpop.xlane.xlu0 %1392
      %v1394 = vmax.f32 %v1140, %v1142
      %1395 = vmax.xlane.f32.xlu0 %v1394
      %v1396 = vpop.xlane.xlu0 %1395
      %v1397 = vmax.f32 %v1144, %v1146
      %1398 = vmax.xlane.f32.xlu0 %v1397
      %v1399 = vpop.xlane.xlu0 %1398
      %v1400 = vmax.f32 %v1150, %v1152
      %1401 = vmax.xlane.f32.xlu0 %v1400
      %v1402 = vpop.xlane.xlu0 %1401
      %v1403 = vmax.f32 %v1154, %v1156
      %1404 = vmax.xlane.f32.xlu0 %v1403
      %v1405 = vpop.xlane.xlu0 %1404
      %v1406 = vmax.f32 %v1160, %v1162
      %1407 = vmax.xlane.f32.xlu0 %v1406
      %v1408 = vpop.xlane.xlu0 %1407
      %v1409 = vmax.f32 %v1164, %v1166
      %1410 = vmax.xlane.f32.xlu0 %v1409
      %v1411 = vpop.xlane.xlu0 %1410
      %v1412 = vmax.f32 %v1170, %v1172
      %1413 = vmax.xlane.f32.xlu0 %v1412
      %v1414 = vpop.xlane.xlu0 %1413
      %v1415 = vmax.f32 %v1174, %v1176
      %1416 = vmax.xlane.f32.xlu0 %v1415
      %v1417 = vpop.xlane.xlu0 %1416
      %v1418 = vmax.f32 %v1180, %v1182
      %1419 = vmax.xlane.f32.xlu0 %v1418
      %v1420 = vpop.xlane.xlu0 %1419
      %v1421 = vmax.f32 %v1184, %v1186
      %1422 = vmax.xlane.f32.xlu0 %v1421
      %v1423 = vpop.xlane.xlu0 %1422
      %v1424 = vmax.f32 %v1190, %v1192
      %1425 = vmax.xlane.f32.xlu0 %v1424
      %v1426 = vpop.xlane.xlu0 %1425
      %v1427 = vmax.f32 %v1194, %v1196
      %1428 = vmax.xlane.f32.xlu0 %v1427
      %v1429 = vpop.xlane.xlu0 %1428
      %v1430 = vmax.f32 %v1200, %v1202
      %1431 = vmax.xlane.f32.xlu0 %v1430
      %v1432 = vpop.xlane.xlu0 %1431
      %v1433 = vmax.f32 %v1204, %v1206
      %1434 = vmax.xlane.f32.xlu0 %v1433
      %v1435 = vpop.xlane.xlu0 %1434
      %v1436 = vmax.f32 %v1210, %v1212
      %1437 = vmax.xlane.f32.xlu0 %v1436
      %v1438 = vpop.xlane.xlu0 %1437
      %v1439 = vmax.f32 %v1214, %v1216
      %1440 = vmax.xlane.f32.xlu0 %v1439
      %v1441 = vpop.xlane.xlu0 %1440
      %v1442 = vmax.f32 %v1220, %v1222
      %1443 = vmax.xlane.f32.xlu0 %v1442
      %v1444 = vpop.xlane.xlu0 %1443
      %v1445 = vmax.f32 %v1224, %v1226
      %1446 = vmax.xlane.f32.xlu0 %v1445
      %v1447 = vpop.xlane.xlu0 %1446
      %v1448 = vmax.f32 %v1230, %v1232
      %1449 = vmax.xlane.f32.xlu0 %v1448
      %v1450 = vpop.xlane.xlu0 %1449
      %v1451 = vmax.f32 %v1234, %v1236
      %1452 = vmax.xlane.f32.xlu0 %v1451
      %v1453 = vpop.xlane.xlu0 %1452
      %v1454 = vmax.f32 %v1240, %v1242
      %1455 = vmax.xlane.f32.xlu0 %v1454
      %v1456 = vpop.xlane.xlu0 %1455
      %v1457 = vmax.f32 %v1244, %v1246
      %1458 = vmax.xlane.f32.xlu0 %v1457
      %v1459 = vpop.xlane.xlu0 %1458
      %v1460 = vmax.f32 %v1250, %v1252
      %1461 = vmax.xlane.f32.xlu0 %v1460
      %v1462 = vpop.xlane.xlu0 %1461
      %v1463 = vmax.f32 %v1254, %v1256
      %1464 = vmax.xlane.f32.xlu0 %v1463
      %v1465 = vpop.xlane.xlu0 %1464
      %v1466 = vmax.f32 %v1260, %v1262
      %1467 = vmax.xlane.f32.xlu0 %v1466
      %v1468 = vpop.xlane.xlu0 %1467
      %v1469 = vmax.f32 %v1264, %v1266
      %1470 = vmax.xlane.f32.xlu0 %v1469
      %v1471 = vpop.xlane.xlu0 %1470
      %v1472 = vmax.f32 %v1270, %v1272
      %1473 = vmax.xlane.f32.xlu0 %v1472
      %v1474 = vpop.xlane.xlu0 %1473
      %v1475 = vmax.f32 %v1274, %v1276
      %1476 = vmax.xlane.f32.xlu0 %v1475
      %v1477 = vpop.xlane.xlu0 %1476
      %v1478 = vmax.f32 %v1280, %v1282
      %1479 = vmax.xlane.f32.xlu0 %v1478
      %v1480 = vpop.xlane.xlu0 %1479
      %v1481 = vmax.f32 %v1284, %v1286
      %1482 = vmax.xlane.f32.xlu0 %v1481
      %v1483 = vpop.xlane.xlu0 %1482
      %v1484 = vmax.f32 %v1290, %v1292
      %1485 = vmax.xlane.f32.xlu0 %v1484
      %v1486 = vpop.xlane.xlu0 %1485
      %v1487 = vmax.f32 %v1294, %v1296
      %1488 = vmax.xlane.f32.xlu0 %v1487
      %v1489 = vpop.xlane.xlu0 %1488
      %v1490 = vsub.f32 %v867, %v1300
      %v1491 = vsub.f32 %v869, %v1300
      %v1492 = vsub.f32 %v871, %v1303
      %v1493 = vsub.f32 %v873, %v1303
      %v1494 = vsub.f32 %v877, %v1306
      %v1495 = vsub.f32 %v879, %v1306
      %v1496 = vsub.f32 %v881, %v1309
      %v1497 = vsub.f32 %v883, %v1309
      %v1498 = vsub.f32 %v887, %v1312
      %v1499 = vsub.f32 %v889, %v1312
      %v1500 = vsub.f32 %v891, %v1315
      %v1501 = vsub.f32 %v893, %v1315
      %v1502 = vsub.f32 %v897, %v1318
      %v1503 = vsub.f32 %v899, %v1318
      %v1504 = vsub.f32 %v901, %v1321
      %v1505 = vsub.f32 %v903, %v1321
      %v1506 = vsub.f32 %v907, %v1324
      %v1507 = vsub.f32 %v909, %v1324
      %v1508 = vsub.f32 %v911, %v1327
      %v1509 = vsub.f32 %v913, %v1327
      %v1510 = vsub.f32 %v917, %v1330
      %v1511 = vsub.f32 %v919, %v1330
      %v1512 = vsub.f32 %v921, %v1333
      %v1513 = vsub.f32 %v923, %v1333
      %v1514 = vsub.f32 %v927, %v1336
      %v1515 = vsub.f32 %v929, %v1336
      %v1516 = vsub.f32 %v931, %v1339
      %v1517 = vsub.f32 %v933, %v1339
      %v1518 = vsub.f32 %v937, %v1342
      %v1519 = vsub.f32 %v939, %v1342
      %v1520 = vsub.f32 %v941, %v1345
      %v1521 = vsub.f32 %v943, %v1345
      %v1522 = vsub.f32 %v947, %v1348
      %v1523 = vsub.f32 %v949, %v1348
      %v1524 = vsub.f32 %v951, %v1351
      %v1525 = vsub.f32 %v953, %v1351
      %v1526 = vsub.f32 %v957, %v1354
      %v1527 = vsub.f32 %v959, %v1354
      %v1528 = vsub.f32 %v961, %v1357
      %v1529 = vsub.f32 %v963, %v1357
      %v1530 = vsub.f32 %v967, %v1360
      %v1531 = vsub.f32 %v969, %v1360
      %v1532 = vsub.f32 %v971, %v1363
      %v1533 = vsub.f32 %v973, %v1363
      %v1534 = vsub.f32 %v977, %v1366
      %v1535 = vsub.f32 %v979, %v1366
      %v1536 = vsub.f32 %v981, %v1369
      %v1537 = vsub.f32 %v983, %v1369
      %v1538 = vsub.f32 %v987, %v1372
      %v1539 = vsub.f32 %v989, %v1372
      %v1540 = vsub.f32 %v991, %v1375
      %v1541 = vsub.f32 %v993, %v1375
      %v1542 = vsub.f32 %v997, %v1378
      %v1543 = vsub.f32 %v999, %v1378
      %v1544 = vsub.f32 %v1001, %v1381
      %v1545 = vsub.f32 %v1003, %v1381
      %v1546 = vsub.f32 %v1007, %v1384
      %v1547 = vsub.f32 %v1009, %v1384
      %v1548 = vsub.f32 %v1011, %v1387
      %v1549 = vsub.f32 %v1013, %v1387
      %v1550 = vsub.f32 %v1017, %v1390
      %v1551 = vsub.f32 %v1019, %v1390
      %v1552 = vsub.f32 %v1021, %v1393
      %v1553 = vsub.f32 %v1023, %v1393
      %v1554 = vsub.f32 %v1140, %v1396
      %v1555 = vsub.f32 %v1142, %v1396
      %v1556 = vsub.f32 %v1144, %v1399
      %v1557 = vsub.f32 %v1146, %v1399
      %v1558 = vsub.f32 %v1150, %v1402
      %v1559 = vsub.f32 %v1152, %v1402
      %v1560 = vsub.f32 %v1154, %v1405
      %v1561 = vsub.f32 %v1156, %v1405
      %v1562 = vsub.f32 %v1160, %v1408
      %v1563 = vsub.f32 %v1162, %v1408
      %v1564 = vsub.f32 %v1164, %v1411
      %v1565 = vsub.f32 %v1166, %v1411
      %v1566 = vsub.f32 %v1170, %v1414
      %v1567 = vsub.f32 %v1172, %v1414
      %v1568 = vsub.f32 %v1174, %v1417
      %v1569 = vsub.f32 %v1176, %v1417
      %v1570 = vsub.f32 %v1180, %v1420
      %v1571 = vsub.f32 %v1182, %v1420
      %v1572 = vsub.f32 %v1184, %v1423
      %v1573 = vsub.f32 %v1186, %v1423
      %v1574 = vsub.f32 %v1190, %v1426
      %v1575 = vsub.f32 %v1192, %v1426
      %v1576 = vsub.f32 %v1194, %v1429
      %v1577 = vsub.f32 %v1196, %v1429
      %v1578 = vsub.f32 %v1200, %v1432
      %v1579 = vsub.f32 %v1202, %v1432
      %v1580 = vsub.f32 %v1204, %v1435
      %v1581 = vsub.f32 %v1206, %v1435
      %v1582 = vsub.f32 %v1210, %v1438
      %v1583 = vsub.f32 %v1212, %v1438
      %v1584 = vsub.f32 %v1214, %v1441
      %v1585 = vsub.f32 %v1216, %v1441
      %v1586 = vsub.f32 %v1220, %v1444
      %v1587 = vsub.f32 %v1222, %v1444
      %v1588 = vsub.f32 %v1224, %v1447
      %v1589 = vsub.f32 %v1226, %v1447
      %v1590 = vsub.f32 %v1230, %v1450
      %v1591 = vsub.f32 %v1232, %v1450
      %v1592 = vsub.f32 %v1234, %v1453
      %v1593 = vsub.f32 %v1236, %v1453
      %v1594 = vsub.f32 %v1240, %v1456
      %v1595 = vsub.f32 %v1242, %v1456
      %v1596 = vsub.f32 %v1244, %v1459
      %v1597 = vsub.f32 %v1246, %v1459
      %v1598 = vsub.f32 %v1250, %v1462
      %v1599 = vsub.f32 %v1252, %v1462
      %v1600 = vsub.f32 %v1254, %v1465
      %v1601 = vsub.f32 %v1256, %v1465
      %v1602 = vsub.f32 %v1260, %v1468
      %v1603 = vsub.f32 %v1262, %v1468
      %v1604 = vsub.f32 %v1264, %v1471
      %v1605 = vsub.f32 %v1266, %v1471
      %v1606 = vsub.f32 %v1270, %v1474
      %v1607 = vsub.f32 %v1272, %v1474
      %v1608 = vsub.f32 %v1274, %v1477
      %v1609 = vsub.f32 %v1276, %v1477
      %v1610 = vsub.f32 %v1280, %v1480
      %v1611 = vsub.f32 %v1282, %v1480
      %v1612 = vsub.f32 %v1284, %v1483
      %v1613 = vsub.f32 %v1286, %v1483
      %v1614 = vsub.f32 %v1290, %v1486
      %v1615 = vsub.f32 %v1292, %v1486
      %v1616 = vsub.f32 %v1294, %v1489
      %v1617 = vsub.f32 %v1296, %v1489
      %v1618 = vmul.f32 %v1490, 1.442695
      %v1619 = vpow.pop %v1618
      %v1620 = vmul.f32 %v1491, 1.442695
      %v1621 = vpow.pop %v1620
      %v1622 = vmul.f32 %v1492, 1.442695
      %v1623 = vpow.pop %v1622
      %v1624 = vmul.f32 %v1493, 1.442695
      %v1625 = vpow.pop %v1624
      %v1626 = vmul.f32 %v1494, 1.442695
      %v1627 = vpow.pop %v1626
      %v1628 = vmul.f32 %v1495, 1.442695
      %v1629 = vpow.pop %v1628
      %v1630 = vmul.f32 %v1496, 1.442695
      %v1631 = vpow.pop %v1630
      %v1632 = vmul.f32 %v1497, 1.442695
      %v1633 = vpow.pop %v1632
      %v1634 = vmul.f32 %v1498, 1.442695
      %v1635 = vpow.pop %v1634
      %v1636 = vmul.f32 %v1499, 1.442695
      %v1637 = vpow.pop %v1636
      %v1638 = vmul.f32 %v1500, 1.442695
      %v1639 = vpow.pop %v1638
      %v1640 = vmul.f32 %v1501, 1.442695
      %v1641 = vpow.pop %v1640
      %v1642 = vmul.f32 %v1502, 1.442695
      %v1643 = vpow.pop %v1642
      %v1644 = vmul.f32 %v1503, 1.442695
      %v1645 = vpow.pop %v1644
      %v1646 = vmul.f32 %v1504, 1.442695
      %v1647 = vpow.pop %v1646
      %v1648 = vmul.f32 %v1505, 1.442695
      %v1649 = vpow.pop %v1648
      %v1650 = vmul.f32 %v1506, 1.442695
      %v1651 = vpow.pop %v1650
      %v1652 = vmul.f32 %v1507, 1.442695
      %v1653 = vpow.pop %v1652
      %v1654 = vmul.f32 %v1508, 1.442695
      %v1655 = vpow.pop %v1654
      %v1656 = vmul.f32 %v1509, 1.442695
      %v1657 = vpow.pop %v1656
      %v1658 = vmul.f32 %v1510, 1.442695
      %v1659 = vpow.pop %v1658
      %v1660 = vmul.f32 %v1511, 1.442695
      %v1661 = vpow.pop %v1660
      %v1662 = vmul.f32 %v1512, 1.442695
      %v1663 = vpow.pop %v1662
      %v1664 = vmul.f32 %v1513, 1.442695
      %v1665 = vpow.pop %v1664
      %v1666 = vmul.f32 %v1514, 1.442695
      %v1667 = vpow.pop %v1666
      %v1668 = vmul.f32 %v1515, 1.442695
      %v1669 = vpow.pop %v1668
      %v1670 = vmul.f32 %v1516, 1.442695
      %v1671 = vpow.pop %v1670
      %v1672 = vmul.f32 %v1517, 1.442695
      %v1673 = vpow.pop %v1672
      %v1674 = vmul.f32 %v1518, 1.442695
      %v1675 = vpow.pop %v1674
      %v1676 = vmul.f32 %v1519, 1.442695
      %v1677 = vpow.pop %v1676
      %v1678 = vmul.f32 %v1520, 1.442695
      %v1679 = vpow.pop %v1678
      %v1680 = vmul.f32 %v1521, 1.442695
      %v1681 = vpow.pop %v1680
      %v1682 = vmul.f32 %v1522, 1.442695
      %v1683 = vpow.pop %v1682
      %v1684 = vmul.f32 %v1523, 1.442695
      %v1685 = vpow.pop %v1684
      %v1686 = vmul.f32 %v1524, 1.442695
      %v1687 = vpow.pop %v1686
      %v1688 = vmul.f32 %v1525, 1.442695
      %v1689 = vpow.pop %v1688
      %v1690 = vmul.f32 %v1526, 1.442695
      %v1691 = vpow.pop %v1690
      %v1692 = vmul.f32 %v1527, 1.442695
      %v1693 = vpow.pop %v1692
      %v1694 = vmul.f32 %v1528, 1.442695
      %v1695 = vpow.pop %v1694
      %v1696 = vmul.f32 %v1529, 1.442695
      %v1697 = vpow.pop %v1696
      %v1698 = vmul.f32 %v1530, 1.442695
      %v1699 = vpow.pop %v1698
      %v1700 = vmul.f32 %v1531, 1.442695
      %v1701 = vpow.pop %v1700
      %v1702 = vmul.f32 %v1532, 1.442695
      %v1703 = vpow.pop %v1702
      %v1704 = vmul.f32 %v1533, 1.442695
      %v1705 = vpow.pop %v1704
      %v1706 = vmul.f32 %v1534, 1.442695
      %v1707 = vpow.pop %v1706
      %v1708 = vmul.f32 %v1535, 1.442695
      %v1709 = vpow.pop %v1708
      %v1710 = vmul.f32 %v1536, 1.442695
      %v1711 = vpow.pop %v1710
      %v1712 = vmul.f32 %v1537, 1.442695
      %v1713 = vpow.pop %v1712
      %v1714 = vmul.f32 %v1538, 1.442695
      %v1715 = vpow.pop %v1714
      %v1716 = vmul.f32 %v1539, 1.442695
      %v1717 = vpow.pop %v1716
      %v1718 = vmul.f32 %v1540, 1.442695
      %v1719 = vpow.pop %v1718
      %v1720 = vmul.f32 %v1541, 1.442695
      %v1721 = vpow.pop %v1720
      %v1722 = vmul.f32 %v1542, 1.442695
      %v1723 = vpow.pop %v1722
      %v1724 = vmul.f32 %v1543, 1.442695
      %v1725 = vpow.pop %v1724
      %v1726 = vmul.f32 %v1544, 1.442695
      %v1727 = vpow.pop %v1726
      %v1728 = vmul.f32 %v1545, 1.442695
      %v1729 = vpow.pop %v1728
      %v1730 = vmul.f32 %v1546, 1.442695
      %v1731 = vpow.pop %v1730
      %v1732 = vmul.f32 %v1547, 1.442695
      %v1733 = vpow.pop %v1732
      %v1734 = vmul.f32 %v1548, 1.442695
      %v1735 = vpow.pop %v1734
      %v1736 = vmul.f32 %v1549, 1.442695
      %v1737 = vpow.pop %v1736
      %v1738 = vmul.f32 %v1550, 1.442695
      %v1739 = vpow.pop %v1738
      %v1740 = vmul.f32 %v1551, 1.442695
      %v1741 = vpow.pop %v1740
      %v1742 = vmul.f32 %v1552, 1.442695
      %v1743 = vpow.pop %v1742
      %v1744 = vmul.f32 %v1553, 1.442695
      %v1745 = vpow.pop %v1744
      %v1746 = vmul.f32 %v1554, 1.442695
      %v1747 = vpow.pop %v1746
      %v1748 = vmul.f32 %v1555, 1.442695
      %v1749 = vpow.pop %v1748
      %v1750 = vmul.f32 %v1556, 1.442695
      %v1751 = vpow.pop %v1750
      %v1752 = vmul.f32 %v1557, 1.442695
      %v1753 = vpow.pop %v1752
      %v1754 = vmul.f32 %v1558, 1.442695
      %v1755 = vpow.pop %v1754
      %v1756 = vmul.f32 %v1559, 1.442695
      %v1757 = vpow.pop %v1756
      %v1758 = vmul.f32 %v1560, 1.442695
      %v1759 = vpow.pop %v1758
      %v1760 = vmul.f32 %v1561, 1.442695
      %v1761 = vpow.pop %v1760
      %v1762 = vmul.f32 %v1562, 1.442695
      %v1763 = vpow.pop %v1762
      %v1764 = vmul.f32 %v1563, 1.442695
      %v1765 = vpow.pop %v1764
      %v1766 = vmul.f32 %v1564, 1.442695
      %v1767 = vpow.pop %v1766
      %v1768 = vmul.f32 %v1565, 1.442695
      %v1769 = vpow.pop %v1768
      %v1770 = vmul.f32 %v1566, 1.442695
      %v1771 = vpow.pop %v1770
      %v1772 = vmul.f32 %v1567, 1.442695
      %v1773 = vpow.pop %v1772
      %v1774 = vmul.f32 %v1568, 1.442695
      %v1775 = vpow.pop %v1774
      %v1776 = vmul.f32 %v1569, 1.442695
      %v1777 = vpow.pop %v1776
      %v1778 = vmul.f32 %v1570, 1.442695
      %v1779 = vpow.pop %v1778
      %v1780 = vmul.f32 %v1571, 1.442695
      %v1781 = vpow.pop %v1780
      %v1782 = vmul.f32 %v1572, 1.442695
      %v1783 = vpow.pop %v1782
      %v1784 = vmul.f32 %v1573, 1.442695
      %v1785 = vpow.pop %v1784
      %v1786 = vmul.f32 %v1574, 1.442695
      %v1787 = vpow.pop %v1786
      %v1788 = vmul.f32 %v1575, 1.442695
      %v1789 = vpow.pop %v1788
      %v1790 = vmul.f32 %v1576, 1.442695
      %v1791 = vpow.pop %v1790
      %v1792 = vmul.f32 %v1577, 1.442695
      %v1793 = vpow.pop %v1792
      %v1794 = vmul.f32 %v1578, 1.442695
      %v1795 = vpow.pop %v1794
      %v1796 = vmul.f32 %v1579, 1.442695
      %v1797 = vpow.pop %v1796
      %v1798 = vmul.f32 %v1580, 1.442695
      %v1799 = vpow.pop %v1798
      %v1800 = vmul.f32 %v1581, 1.442695
      %v1801 = vpow.pop %v1800
      %v1802 = vmul.f32 %v1582, 1.442695
      %v1803 = vpow.pop %v1802
      %v1804 = vmul.f32 %v1583, 1.442695
      %v1805 = vpow.pop %v1804
      %v1806 = vmul.f32 %v1584, 1.442695
      %v1807 = vpow.pop %v1806
      %v1808 = vmul.f32 %v1585, 1.442695
      %v1809 = vpow.pop %v1808
      %v1810 = vmul.f32 %v1586, 1.442695
      %v1811 = vpow.pop %v1810
      %v1812 = vmul.f32 %v1587, 1.442695
      %v1813 = vpow.pop %v1812
      %v1814 = vmul.f32 %v1588, 1.442695
      %v1815 = vpow.pop %v1814
      %v1816 = vmul.f32 %v1589, 1.442695
      %v1817 = vpow.pop %v1816
      %v1818 = vmul.f32 %v1590, 1.442695
      %v1819 = vpow.pop %v1818
      %v1820 = vmul.f32 %v1591, 1.442695
      %v1821 = vpow.pop %v1820
      %v1822 = vmul.f32 %v1592, 1.442695
      %v1823 = vpow.pop %v1822
      %v1824 = vmul.f32 %v1593, 1.442695
      %v1825 = vpow.pop %v1824
      %v1826 = vmul.f32 %v1594, 1.442695
      %v1827 = vpow.pop %v1826
      %v1828 = vmul.f32 %v1595, 1.442695
      %v1829 = vpow.pop %v1828
      %v1830 = vmul.f32 %v1596, 1.442695
      %v1831 = vpow.pop %v1830
      %v1832 = vmul.f32 %v1597, 1.442695
      %v1833 = vpow.pop %v1832
      %v1834 = vmul.f32 %v1598, 1.442695
      %v1835 = vpow.pop %v1834
      %v1836 = vmul.f32 %v1599, 1.442695
      %v1837 = vpow.pop %v1836
      %v1838 = vmul.f32 %v1600, 1.442695
      %v1839 = vpow.pop %v1838
      %v1840 = vmul.f32 %v1601, 1.442695
      %v1841 = vpow.pop %v1840
      %v1842 = vmul.f32 %v1602, 1.442695
      %v1843 = vpow.pop %v1842
      %v1844 = vmul.f32 %v1603, 1.442695
      %v1845 = vpow.pop %v1844
      %v1846 = vmul.f32 %v1604, 1.442695
      %v1847 = vpow.pop %v1846
      %v1848 = vmul.f32 %v1605, 1.442695
      %v1849 = vpow.pop %v1848
      %v1850 = vmul.f32 %v1606, 1.442695
      %v1851 = vpow.pop %v1850
      %v1852 = vmul.f32 %v1607, 1.442695
      %v1853 = vpow.pop %v1852
      %v1854 = vmul.f32 %v1608, 1.442695
      %v1855 = vpow.pop %v1854
      %v1856 = vmul.f32 %v1609, 1.442695
      %v1857 = vpow.pop %v1856
      %v1858 = vmul.f32 %v1610, 1.442695
      %v1859 = vpow.pop %v1858
      %v1860 = vmul.f32 %v1611, 1.442695
      %v1861 = vpow.pop %v1860
      %v1862 = vmul.f32 %v1612, 1.442695
      %v1863 = vpow.pop %v1862
      %v1864 = vmul.f32 %v1613, 1.442695
      %v1865 = vpow.pop %v1864
      %v1866 = vmul.f32 %v1614, 1.442695
      %v1867 = vpow.pop %v1866
      %v1868 = vmul.f32 %v1615, 1.442695
      %v1869 = vpow.pop %v1868
      %v1870 = vmul.f32 %v1616, 1.442695
      %v1871 = vpow.pop %v1870
      %v1872 = vmul.f32 %v1617, 1.442695
      %v1873 = vpow.pop %v1872
      %v1874 = vadd.f32 %v1619, %v1621
      %1875 = vadd.xlane.f32.xlu0 %v1874
      %v1876 = vpop.xlane.xlu0 %1875
      %v1877 = vadd.f32 %v1623, %v1625
      %1878 = vadd.xlane.f32.xlu0 %v1877
      %v1879 = vpop.xlane.xlu0 %1878
      %v1880 = vadd.f32 %v1627, %v1629
      %1881 = vadd.xlane.f32.xlu0 %v1880
      %v1882 = vpop.xlane.xlu0 %1881
      %v1883 = vadd.f32 %v1631, %v1633
      %1884 = vadd.xlane.f32.xlu0 %v1883
      %v1885 = vpop.xlane.xlu0 %1884
      %v1886 = vadd.f32 %v1635, %v1637
      %1887 = vadd.xlane.f32.xlu0 %v1886
      %v1888 = vpop.xlane.xlu0 %1887
      %v1889 = vadd.f32 %v1639, %v1641
      %1890 = vadd.xlane.f32.xlu0 %v1889
      %v1891 = vpop.xlane.xlu0 %1890
      %v1892 = vadd.f32 %v1643, %v1645
      %1893 = vadd.xlane.f32.xlu0 %v1892
      %v1894 = vpop.xlane.xlu0 %1893
      %v1895 = vadd.f32 %v1647, %v1649
      %1896 = vadd.xlane.f32.xlu0 %v1895
      %v1897 = vpop.xlane.xlu0 %1896
      %v1898 = vadd.f32 %v1651, %v1653
      %1899 = vadd.xlane.f32.xlu0 %v1898
      %v1900 = vpop.xlane.xlu0 %1899
      %v1901 = vadd.f32 %v1655, %v1657
      %1902 = vadd.xlane.f32.xlu0 %v1901
      %v1903 = vpop.xlane.xlu0 %1902
      %v1904 = vadd.f32 %v1659, %v1661
      %1905 = vadd.xlane.f32.xlu0 %v1904
      %v1906 = vpop.xlane.xlu0 %1905
      %v1907 = vadd.f32 %v1663, %v1665
      %1908 = vadd.xlane.f32.xlu0 %v1907
      %v1909 = vpop.xlane.xlu0 %1908
      %v1910 = vadd.f32 %v1667, %v1669
      %1911 = vadd.xlane.f32.xlu0 %v1910
      %v1912 = vpop.xlane.xlu0 %1911
      %v1913 = vadd.f32 %v1671, %v1673
      %1914 = vadd.xlane.f32.xlu0 %v1913
      %v1915 = vpop.xlane.xlu0 %1914
      %v1916 = vadd.f32 %v1675, %v1677
      %1917 = vadd.xlane.f32.xlu0 %v1916
      %v1918 = vpop.xlane.xlu0 %1917
      %v1919 = vadd.f32 %v1679, %v1681
      %1920 = vadd.xlane.f32.xlu0 %v1919
      %v1921 = vpop.xlane.xlu0 %1920
      %v1922 = vadd.f32 %v1683, %v1685
      %1923 = vadd.xlane.f32.xlu0 %v1922
      %v1924 = vpop.xlane.xlu0 %1923
      %v1925 = vadd.f32 %v1687, %v1689
      %1926 = vadd.xlane.f32.xlu0 %v1925
      %v1927 = vpop.xlane.xlu0 %1926
      %v1928 = vadd.f32 %v1691, %v1693
      %1929 = vadd.xlane.f32.xlu0 %v1928
      %v1930 = vpop.xlane.xlu0 %1929
      %v1931 = vadd.f32 %v1695, %v1697
      %1932 = vadd.xlane.f32.xlu0 %v1931
      %v1933 = vpop.xlane.xlu0 %1932
      %v1934 = vadd.f32 %v1699, %v1701
      %1935 = vadd.xlane.f32.xlu0 %v1934
      %v1936 = vpop.xlane.xlu0 %1935
      %v1937 = vadd.f32 %v1703, %v1705
      %1938 = vadd.xlane.f32.xlu0 %v1937
      %v1939 = vpop.xlane.xlu0 %1938
      %v1940 = vadd.f32 %v1707, %v1709
      %1941 = vadd.xlane.f32.xlu0 %v1940
      %v1942 = vpop.xlane.xlu0 %1941
      %v1943 = vadd.f32 %v1711, %v1713
      %1944 = vadd.xlane.f32.xlu0 %v1943
      %v1945 = vpop.xlane.xlu0 %1944
      %v1946 = vadd.f32 %v1715, %v1717
      %1947 = vadd.xlane.f32.xlu0 %v1946
      %v1948 = vpop.xlane.xlu0 %1947
      %v1949 = vadd.f32 %v1719, %v1721
      %1950 = vadd.xlane.f32.xlu0 %v1949
      %v1951 = vpop.xlane.xlu0 %1950
      %v1952 = vadd.f32 %v1723, %v1725
      %1953 = vadd.xlane.f32.xlu0 %v1952
      %v1954 = vpop.xlane.xlu0 %1953
      %v1955 = vadd.f32 %v1727, %v1729
      %1956 = vadd.xlane.f32.xlu0 %v1955
      %v1957 = vpop.xlane.xlu0 %1956
      %v1958 = vadd.f32 %v1731, %v1733
      %1959 = vadd.xlane.f32.xlu0 %v1958
      %v1960 = vpop.xlane.xlu0 %1959
      %v1961 = vadd.f32 %v1735, %v1737
      %1962 = vadd.xlane.f32.xlu0 %v1961
      %v1963 = vpop.xlane.xlu0 %1962
      %v1964 = vadd.f32 %v1739, %v1741
      %1965 = vadd.xlane.f32.xlu0 %v1964
      %v1966 = vpop.xlane.xlu0 %1965
      %v1967 = vadd.f32 %v1743, %v1745
      %1968 = vadd.xlane.f32.xlu0 %v1967
      %v1969 = vpop.xlane.xlu0 %1968
      %v1970 = vadd.f32 %v1747, %v1749
      %1971 = vadd.xlane.f32.xlu0 %v1970
      %v1972 = vpop.xlane.xlu0 %1971
      %v1973 = vadd.f32 %v1751, %v1753
      %1974 = vadd.xlane.f32.xlu0 %v1973
      %v1975 = vpop.xlane.xlu0 %1974
      %v1976 = vadd.f32 %v1755, %v1757
      %1977 = vadd.xlane.f32.xlu0 %v1976
      %v1978 = vpop.xlane.xlu0 %1977
      %v1979 = vadd.f32 %v1759, %v1761
      %1980 = vadd.xlane.f32.xlu0 %v1979
      %v1981 = vpop.xlane.xlu0 %1980
      %v1982 = vadd.f32 %v1763, %v1765
      %1983 = vadd.xlane.f32.xlu0 %v1982
      %v1984 = vpop.xlane.xlu0 %1983
      %v1985 = vadd.f32 %v1767, %v1769
      %1986 = vadd.xlane.f32.xlu0 %v1985
      %v1987 = vpop.xlane.xlu0 %1986
      %v1988 = vadd.f32 %v1771, %v1773
      %1989 = vadd.xlane.f32.xlu0 %v1988
      %v1990 = vpop.xlane.xlu0 %1989
      %v1991 = vadd.f32 %v1775, %v1777
      %1992 = vadd.xlane.f32.xlu0 %v1991
      %v1993 = vpop.xlane.xlu0 %1992
      %v1994 = vadd.f32 %v1779, %v1781
      %1995 = vadd.xlane.f32.xlu0 %v1994
      %v1996 = vpop.xlane.xlu0 %1995
      %v1997 = vadd.f32 %v1783, %v1785
      %1998 = vadd.xlane.f32.xlu0 %v1997
      %v1999 = vpop.xlane.xlu0 %1998
      %v2000 = vadd.f32 %v1787, %v1789
      %2001 = vadd.xlane.f32.xlu0 %v2000
      %v2002 = vpop.xlane.xlu0 %2001
      %v2003 = vadd.f32 %v1791, %v1793
      %2004 = vadd.xlane.f32.xlu0 %v2003
      %v2005 = vpop.xlane.xlu0 %2004
      %v2006 = vadd.f32 %v1795, %v1797
      %2007 = vadd.xlane.f32.xlu0 %v2006
      %v2008 = vpop.xlane.xlu0 %2007
      %v2009 = vadd.f32 %v1799, %v1801
      %2010 = vadd.xlane.f32.xlu0 %v2009
      %v2011 = vpop.xlane.xlu0 %2010
      %v2012 = vadd.f32 %v1803, %v1805
      %2013 = vadd.xlane.f32.xlu0 %v2012
      %v2014 = vpop.xlane.xlu0 %2013
      %v2015 = vadd.f32 %v1807, %v1809
      %2016 = vadd.xlane.f32.xlu0 %v2015
      %v2017 = vpop.xlane.xlu0 %2016
      %v2018 = vadd.f32 %v1811, %v1813
      %2019 = vadd.xlane.f32.xlu0 %v2018
      %v2020 = vpop.xlane.xlu0 %2019
      %v2021 = vadd.f32 %v1815, %v1817
      %2022 = vadd.xlane.f32.xlu0 %v2021
      %v2023 = vpop.xlane.xlu0 %2022
      %v2024 = vadd.f32 %v1819, %v1821
      %2025 = vadd.xlane.f32.xlu0 %v2024
      %v2026 = vpop.xlane.xlu0 %2025
      %v2027 = vadd.f32 %v1823, %v1825
      %2028 = vadd.xlane.f32.xlu0 %v2027
      %v2029 = vpop.xlane.xlu0 %2028
      %v2030 = vadd.f32 %v1827, %v1829
      %2031 = vadd.xlane.f32.xlu0 %v2030
      %v2032 = vpop.xlane.xlu0 %2031
      %v2033 = vadd.f32 %v1831, %v1833
      %2034 = vadd.xlane.f32.xlu0 %v2033
      %v2035 = vpop.xlane.xlu0 %2034
      %v2036 = vadd.f32 %v1835, %v1837
      %2037 = vadd.xlane.f32.xlu0 %v2036
      %v2038 = vpop.xlane.xlu0 %2037
      %v2039 = vadd.f32 %v1839, %v1841
      %2040 = vadd.xlane.f32.xlu0 %v2039
      %v2041 = vpop.xlane.xlu0 %2040
      %v2042 = vadd.f32 %v1843, %v1845
      %2043 = vadd.xlane.f32.xlu0 %v2042
      %v2044 = vpop.xlane.xlu0 %2043
      %v2045 = vadd.f32 %v1847, %v1849
      %2046 = vadd.xlane.f32.xlu0 %v2045
      %v2047 = vpop.xlane.xlu0 %2046
      %v2048 = vadd.f32 %v1851, %v1853
      %2049 = vadd.xlane.f32.xlu0 %v2048
      %v2050 = vpop.xlane.xlu0 %2049
      %v2051 = vadd.f32 %v1855, %v1857
      %2052 = vadd.xlane.f32.xlu0 %v2051
      %v2053 = vpop.xlane.xlu0 %2052
      %v2054 = vadd.f32 %v1859, %v1861
      %2055 = vadd.xlane.f32.xlu0 %v2054
      %v2056 = vpop.xlane.xlu0 %2055
      %v2057 = vadd.f32 %v1863, %v1865
      %2058 = vadd.xlane.f32.xlu0 %v2057
      %v2059 = vpop.xlane.xlu0 %2058
      %v2060 = vadd.f32 %v1867, %v1869
      %2061 = vadd.xlane.f32.xlu0 %v2060
      %v2062 = vpop.xlane.xlu0 %2061
      %v2063 = vadd.f32 %v1871, %v1873
      %2064 = vadd.xlane.f32.xlu0 %v2063
      %v2065 = vpop.xlane.xlu0 %2064
      %v2066 = vpack.c.bf16 %v1623, %v1619
      %v2067 = vpack.c.bf16 %v1625, %v1621
      %v2068 = vpack.c.bf16 %v1631, %v1627
      %v2069 = vpack.c.bf16 %v1633, %v1629
      %v2070 = vpack.c.bf16 %v1639, %v1635
      %v2071 = vpack.c.bf16 %v1641, %v1637
      %v2072 = vpack.c.bf16 %v1647, %v1643
      %v2073 = vpack.c.bf16 %v1649, %v1645
      %v2074 = vpack.c.bf16 %v1655, %v1651
      %v2075 = vpack.c.bf16 %v1657, %v1653
      %v2076 = vpack.c.bf16 %v1663, %v1659
      %v2077 = vpack.c.bf16 %v1665, %v1661
      %v2078 = vpack.c.bf16 %v1671, %v1667
      %v2079 = vpack.c.bf16 %v1673, %v1669
      %v2080 = vpack.c.bf16 %v1679, %v1675
      %v2081 = vpack.c.bf16 %v1681, %v1677
      %v2082 = vpack.c.bf16 %v1687, %v1683
      %v2083 = vpack.c.bf16 %v1689, %v1685
      %v2084 = vpack.c.bf16 %v1695, %v1691
      %v2085 = vpack.c.bf16 %v1697, %v1693
      %v2086 = vpack.c.bf16 %v1703, %v1699
      %v2087 = vpack.c.bf16 %v1705, %v1701
      %v2088 = vpack.c.bf16 %v1711, %v1707
      %v2089 = vpack.c.bf16 %v1713, %v1709
      %v2090 = vpack.c.bf16 %v1719, %v1715
      %v2091 = vpack.c.bf16 %v1721, %v1717
      %v2092 = vpack.c.bf16 %v1727, %v1723
      %v2093 = vpack.c.bf16 %v1729, %v1725
      %v2094 = vpack.c.bf16 %v1735, %v1731
      %v2095 = vpack.c.bf16 %v1737, %v1733
      %v2096 = vpack.c.bf16 %v1743, %v1739
      %v2097 = vpack.c.bf16 %v1745, %v1741
      %v2098 = vpack.c.bf16 %v1751, %v1747
      %v2099 = vpack.c.bf16 %v1753, %v1749
      %v2100 = vpack.c.bf16 %v1759, %v1755
      %v2101 = vpack.c.bf16 %v1761, %v1757
      %v2102 = vpack.c.bf16 %v1767, %v1763
      %v2103 = vpack.c.bf16 %v1769, %v1765
      %v2104 = vpack.c.bf16 %v1775, %v1771
      %v2105 = vpack.c.bf16 %v1777, %v1773
      %v2106 = vpack.c.bf16 %v1783, %v1779
      %v2107 = vpack.c.bf16 %v1785, %v1781
      %v2108 = vpack.c.bf16 %v1791, %v1787
      %v2109 = vpack.c.bf16 %v1793, %v1789
      %v2110 = vpack.c.bf16 %v1799, %v1795
      %v2111 = vpack.c.bf16 %v1801, %v1797
      %v2112 = vpack.c.bf16 %v1807, %v1803
      %v2113 = vpack.c.bf16 %v1809, %v1805
      %v2114 = vpack.c.bf16 %v1815, %v1811
      %v2115 = vpack.c.bf16 %v1817, %v1813
      %v2116 = vpack.c.bf16 %v1823, %v1819
      %v2117 = vpack.c.bf16 %v1825, %v1821
      %v2118 = vpack.c.bf16 %v1831, %v1827
      %v2119 = vpack.c.bf16 %v1833, %v1829
      %v2120 = vpack.c.bf16 %v1839, %v1835
      %v2121 = vpack.c.bf16 %v1841, %v1837
      %v2122 = vpack.c.bf16 %v1847, %v1843
      %v2123 = vpack.c.bf16 %v1849, %v1845
      %v2124 = vpack.c.bf16 %v1855, %v1851
      %v2125 = vpack.c.bf16 %v1857, %v1853
      %v2126 = vpack.c.bf16 %v1863, %v1859
      %v2127 = vpack.c.bf16 %v1865, %v1861
      %v2128 = vpack.c.bf16 %v1871, %v1867
      %v2129 = vpack.c.bf16 %v1873, %v1869
      %2130 = vmatprep.subr.bf16.mxu0 %v2067
      %2131 = vmatpush1.bf16.xpose.msra.mxu0 %v2066
      %2132 = vmatprep.subr.bf16.mxu0 %v2069
      %2133 = vmatpush1.bf16.xpose.msra.mxu0 %v2068
      %2134 = vmatprep.subr.bf16.mxu0 %v2071
      %2135 = vmatpush1.bf16.xpose.msra.mxu0 %v2070
      %2136 = vmatprep.subr.bf16.mxu0 %v2073
      %2137 = vmatpush1.bf16.xpose.msra.mxu0 %v2072
      %2138 = vmatprep.subr.bf16.mxu0 %v2075
      %2139 = vmatpush1.bf16.xpose.msra.mxu0 %v2074
      %2140 = vmatprep.subr.bf16.mxu0 %v2077
      %2141 = vmatpush1.bf16.xpose.msra.mxu0 %v2076
      %2142 = vmatprep.subr.bf16.mxu0 %v2079
      %2143 = vmatpush1.bf16.xpose.msra.mxu0 %v2078
      %2144 = vmatprep.subr.bf16.mxu0 %v2081
      %2145 = vmatpush1.bf16.xpose.msra.mxu0 %v2080
      %2146 = vmatprep.subr.bf16.mxu0 %v2083
      %2147 = vmatpush1.bf16.xpose.msra.mxu0 %v2082
      %2148 = vmatprep.subr.bf16.mxu0 %v2085
      %2149 = vmatpush1.bf16.xpose.msra.mxu0 %v2084
      %2150 = vmatprep.subr.bf16.mxu0 %v2087
      %2151 = vmatpush1.bf16.xpose.msra.mxu0 %v2086
      %2152 = vmatprep.subr.bf16.mxu0 %v2089
      %2153 = vmatpush1.bf16.xpose.msra.mxu0 %v2088
      %2154 = vmatprep.subr.bf16.mxu0 %v2091
      %2155 = vmatpush1.bf16.xpose.msra.mxu0 %v2090
      %2156 = vmatprep.subr.bf16.mxu0 %v2093
      %2157 = vmatpush1.bf16.xpose.msra.mxu0 %v2092
      %2158 = vmatprep.subr.bf16.mxu0 %v2095
      %2159 = vmatpush1.bf16.xpose.msra.mxu0 %v2094
      %2160 = vmatprep.subr.bf16.mxu0 %v2097
      %2161 = vmatpush1.bf16.xpose.msra.mxu0 %v2096
      %2162 = vmatprep.mubr.bf16.mxu0 %v748
      %2163 = vmatmul.mubr.bf16.gmra.mrb[0].mxu0 %v747
      %v2164 = vpop.f32.mrb[0].mxu0
      %v2165 = vadd.f32 0.0, %v2164
      %v2166 = vpop.f32.mrb[0].mxu0
      %v2167 = vadd.f32 0.0, %v2166
      %v2168 = vpop.f32.mrb[0].mxu0
      %v2169 = vadd.f32 0.0, %v2168
      %v2170 = vpop.f32.mrb[0].mxu0
      %v2171 = vadd.f32 0.0, %v2170
      %2172 = vdwg.mxu0
      %2173 = vmatprep.subr.bf16.mxu0 %v2099
      %2174 = vmatpush1.bf16.xpose.msra.mxu0 %v2098
      %2175 = vmatprep.subr.bf16.mxu0 %v2101
      %2176 = vmatpush1.bf16.xpose.msra.mxu0 %v2100
      %2177 = vmatprep.subr.bf16.mxu0 %v2103
      %2178 = vmatpush1.bf16.xpose.msra.mxu0 %v2102
      %2179 = vmatprep.subr.bf16.mxu0 %v2105
      %2180 = vmatpush1.bf16.xpose.msra.mxu0 %v2104
      %2181 = vmatprep.subr.bf16.mxu0 %v2107
      %2182 = vmatpush1.bf16.xpose.msra.mxu0 %v2106
      %2183 = vmatprep.subr.bf16.mxu0 %v2109
      %2184 = vmatpush1.bf16.xpose.msra.mxu0 %v2108
      %2185 = vmatprep.subr.bf16.mxu0 %v2111
      %2186 = vmatpush1.bf16.xpose.msra.mxu0 %v2110
      %2187 = vmatprep.subr.bf16.mxu0 %v2113
      %2188 = vmatpush1.bf16.xpose.msra.mxu0 %v2112
      %2189 = vmatprep.subr.bf16.mxu0 %v2115
      %2190 = vmatpush1.bf16.xpose.msra.mxu0 %v2114
      %2191 = vmatprep.subr.bf16.mxu0 %v2117
      %2192 = vmatpush1.bf16.xpose.msra.mxu0 %v2116
      %2193 = vmatprep.subr.bf16.mxu0 %v2119
      %2194 = vmatpush1.bf16.xpose.msra.mxu0 %v2118
      %2195 = vmatprep.subr.bf16.mxu0 %v2121
      %2196 = vmatpush1.bf16.xpose.msra.mxu0 %v2120
      %2197 = vmatprep.subr.bf16.mxu0 %v2123
      %2198 = vmatpush1.bf16.xpose.msra.mxu0 %v2122
      %2199 = vmatprep.subr.bf16.mxu0 %v2125
      %2200 = vmatpush1.bf16.xpose.msra.mxu0 %v2124
      %2201 = vmatprep.subr.bf16.mxu0 %v2127
      %2202 = vmatpush1.bf16.xpose.msra.mxu0 %v2126
      %2203 = vmatprep.subr.bf16.mxu0 %v2129
      %2204 = vmatpush1.bf16.xpose.msra.mxu0 %v2128
      %2205 = vmatprep.mubr.bf16.mxu0 %v750
      %2206 = vmatmul.mubr.bf16.gmra.mrb[0].mxu0 %v749
      %v2207 = vpop.f32.mrb[0].mxu0
      %v2208 = vadd.f32 0.0, %v2207
      %v2209 = vpop.f32.mrb[0].mxu0
      %v2210 = vadd.f32 0.0, %v2209
      %v2211 = vpop.f32.mrb[0].mxu0
      %v2212 = vadd.f32 0.0, %v2211
      %v2213 = vpop.f32.mrb[0].mxu0
      %v2214 = vadd.f32 0.0, %v2213
      %2215 = vdwg.mxu0
      %v2216 = vrcp.pop %v1876
      %v2217 = vrcp.pop %v1879
      %v2218 = vrcp.pop %v1882
      %v2219 = vrcp.pop %v1885
      %v2220 = vrcp.pop %v1888
      %v2221 = vrcp.pop %v1891
      %v2222 = vrcp.pop %v1894
      %v2223 = vrcp.pop %v1897
      %v2224 = vrcp.pop %v1900
      %v2225 = vrcp.pop %v1903
      %v2226 = vrcp.pop %v1906
      %v2227 = vrcp.pop %v1909
      %v2228 = vrcp.pop %v1912
      %v2229 = vrcp.pop %v1915
      %v2230 = vrcp.pop %v1918
      %v2231 = vrcp.pop %v1921
      %v2232 = vrcp.pop %v1924
      %v2233 = vrcp.pop %v1927
      %v2234 = vrcp.pop %v1930
      %v2235 = vrcp.pop %v1933
      %v2236 = vrcp.pop %v1936
      %v2237 = vrcp.pop %v1939
      %v2238 = vrcp.pop %v1942
      %v2239 = vrcp.pop %v1945
      %v2240 = vrcp.pop %v1948
      %v2241 = vrcp.pop %v1951
      %v2242 = vrcp.pop %v1954
      %v2243 = vrcp.pop %v1957
      %v2244 = vrcp.pop %v1960
      %v2245 = vrcp.pop %v1963
      %v2246 = vrcp.pop %v1966
      %v2247 = vrcp.pop %v1969
      %v2248 = vrcp.pop %v1972
      %v2249 = vrcp.pop %v1975
      %v2250 = vrcp.pop %v1978
      %v2251 = vrcp.pop %v1981
      %v2252 = vrcp.pop %v1984
      %v2253 = vrcp.pop %v1987
      %v2254 = vrcp.pop %v1990
      %v2255 = vrcp.pop %v1993
      %v2256 = vrcp.pop %v1996
      %v2257 = vrcp.pop %v1999
      %v2258 = vrcp.pop %v2002
      %v2259 = vrcp.pop %v2005
      %v2260 = vrcp.pop %v2008
      %v2261 = vrcp.pop %v2011
      %v2262 = vrcp.pop %v2014
      %v2263 = vrcp.pop %v2017
      %v2264 = vrcp.pop %v2020
      %v2265 = vrcp.pop %v2023
      %v2266 = vrcp.pop %v2026
      %v2267 = vrcp.pop %v2029
      %v2268 = vrcp.pop %v2032
      %v2269 = vrcp.pop %v2035
      %v2270 = vrcp.pop %v2038
      %v2271 = vrcp.pop %v2041
      %v2272 = vrcp.pop %v2044
      %v2273 = vrcp.pop %v2047
      %v2274 = vrcp.pop %v2050
      %v2275 = vrcp.pop %v2053
      %v2276 = vrcp.pop %v2056
      %v2277 = vrcp.pop %v2059
      %v2278 = vrcp.pop %v2062
      %v2279 = vrcp.pop %v2065
      %v2344 = vlaneseq
      %v2345 = vand.u32 %v2344, 127
      %v2346 = vlaneseq
      %v2347 = vshrl.u32 %v2346, 7
      %v2348 = vsub.s32 %v2345, %v2347
      %v2349 = vrot.slane %v2216, %v2348
      %v2350 = vadd.s32 %v2345, 4294967288
      %v2351 = vlaneseq
      %v2352 = vshrl.u32 %v2351, 7
      %v2353 = vsub.s32 %v2350, %v2352
      %v2354 = vrot.slane %v2217, %v2353
      %vm2355 = vcmask 130112
      %v2356 = vsel %vm2355, %v2354, %v2349
      %v2357 = vadd.s32 %v2345, 4294967280
      %v2358 = vlaneseq
      %v2359 = vshrl.u32 %v2358, 7
      %v2360 = vsub.s32 %v2357, %v2359
      %v2361 = vrot.slane %v2218, %v2360
      %vm2362 = vcmask 195712
      %v2363 = vsel %vm2362, %v2361, %v2356
      %v2364 = vadd.s32 %v2345, 4294967272
      %v2365 = vlaneseq
      %v2366 = vshrl.u32 %v2365, 7
      %v2367 = vsub.s32 %v2364, %v2366
      %v2368 = vrot.slane %v2219, %v2367
      %vm2369 = vcmask 261312
      %v2370 = vsel %vm2369, %v2368, %v2363
      %v2371 = vadd.s32 %v2345, 4294967264
      %v2372 = vlaneseq
      %v2373 = vshrl.u32 %v2372, 7
      %v2374 = vsub.s32 %v2371, %v2373
      %v2375 = vrot.slane %v2220, %v2374
      %vm2376 = vcmask 326912
      %v2377 = vsel %vm2376, %v2375, %v2370
      %v2378 = vadd.s32 %v2345, 4294967256
      %v2379 = vlaneseq
      %v2380 = vshrl.u32 %v2379, 7
      %v2381 = vsub.s32 %v2378, %v2380
      %v2382 = vrot.slane %v2221, %v2381
      %vm2383 = vcmask 392512
      %v2384 = vsel %vm2383, %v2382, %v2377
      %v2385 = vadd.s32 %v2345, 4294967248
      %v2386 = vlaneseq
      %v2387 = vshrl.u32 %v2386, 7
      %v2388 = vsub.s32 %v2385, %v2387
      %v2389 = vrot.slane %v2222, %v2388
      %vm2390 = vcmask 458112
      %v2391 = vsel %vm2390, %v2389, %v2384
      %v2392 = vadd.s32 %v2345, 4294967240
      %v2393 = vlaneseq
      %v2394 = vshrl.u32 %v2393, 7
      %v2395 = vsub.s32 %v2392, %v2394
      %v2396 = vrot.slane %v2223, %v2395
      %vm2397 = vcmask 523712
      %v2398 = vsel %vm2397, %v2396, %v2391
      %v2399 = vadd.s32 %v2345, 4294967232
      %v2400 = vlaneseq
      %v2401 = vshrl.u32 %v2400, 7
      %v2402 = vsub.s32 %v2399, %v2401
      %v2403 = vrot.slane %v2224, %v2402
      %vm2404 = vcmask 589312
      %v2405 = vsel %vm2404, %v2403, %v2398
      %v2406 = vadd.s32 %v2345, 4294967224
      %v2407 = vlaneseq
      %v2408 = vshrl.u32 %v2407, 7
      %v2409 = vsub.s32 %v2406, %v2408
      %v2410 = vrot.slane %v2225, %v2409
      %vm2411 = vcmask 654912
      %v2412 = vsel %vm2411, %v2410, %v2405
      %v2413 = vadd.s32 %v2345, 4294967216
      %v2414 = vlaneseq
      %v2415 = vshrl.u32 %v2414, 7
      %v2416 = vsub.s32 %v2413, %v2415
      %v2417 = vrot.slane %v2226, %v2416
      %vm2418 = vcmask 720512
      %v2419 = vsel %vm2418, %v2417, %v2412
      %v2420 = vadd.s32 %v2345, 4294967208
      %v2421 = vlaneseq
      %v2422 = vshrl.u32 %v2421, 7
      %v2423 = vsub.s32 %v2420, %v2422
      %v2424 = vrot.slane %v2227, %v2423
      %vm2425 = vcmask 786112
      %v2426 = vsel %vm2425, %v2424, %v2419
      %v2427 = vadd.s32 %v2345, 4294967200
      %v2428 = vlaneseq
      %v2429 = vshrl.u32 %v2428, 7
      %v2430 = vsub.s32 %v2427, %v2429
      %v2431 = vrot.slane %v2228, %v2430
      %vm2432 = vcmask 851712
      %v2433 = vsel %vm2432, %v2431, %v2426
      %v2434 = vadd.s32 %v2345, 4294967192
      %v2435 = vlaneseq
      %v2436 = vshrl.u32 %v2435, 7
      %v2437 = vsub.s32 %v2434, %v2436
      %v2438 = vrot.slane %v2229, %v2437
      %vm2439 = vcmask 917312
      %v2440 = vsel %vm2439, %v2438, %v2433
      %v2441 = vadd.s32 %v2345, 4294967184
      %v2442 = vlaneseq
      %v2443 = vshrl.u32 %v2442, 7
      %v2444 = vsub.s32 %v2441, %v2443
      %v2445 = vrot.slane %v2230, %v2444
      %vm2446 = vcmask 982912
      %v2447 = vsel %vm2446, %v2445, %v2440
      %v2448 = vadd.s32 %v2345, 4294967176
      %v2449 = vlaneseq
      %v2450 = vshrl.u32 %v2449, 7
      %v2451 = vsub.s32 %v2448, %v2450
      %v2452 = vrot.slane %v2231, %v2451
      %vm2453 = vcmask 1048512
      %v2454 = vsel %vm2453, %v2452, %v2447
      %v2455 = vlaneseq
      %v2456 = vshrl.u32 %v2455, 7
      %v2457 = vsub.s32 %v2345, %v2456
      %v2458 = vrot.slane %v2232, %v2457
      %v2459 = vlaneseq
      %v2460 = vshrl.u32 %v2459, 7
      %v2461 = vsub.s32 %v2350, %v2460
      %v2462 = vrot.slane %v2233, %v2461
      %v2463 = vsel %vm2355, %v2462, %v2458
      %v2464 = vlaneseq
      %v2465 = vshrl.u32 %v2464, 7
      %v2466 = vsub.s32 %v2357, %v2465
      %v2467 = vrot.slane %v2234, %v2466
      %v2468 = vsel %vm2362, %v2467, %v2463
      %v2469 = vlaneseq
      %v2470 = vshrl.u32 %v2469, 7
      %v2471 = vsub.s32 %v2364, %v2470
      %v2472 = vrot.slane %v2235, %v2471
      %v2473 = vsel %vm2369, %v2472, %v2468
      %v2474 = vlaneseq
      %v2475 = vshrl.u32 %v2474, 7
      %v2476 = vsub.s32 %v2371, %v2475
      %v2477 = vrot.slane %v2236, %v2476
      %v2478 = vsel %vm2376, %v2477, %v2473
      %v2479 = vlaneseq
      %v2480 = vshrl.u32 %v2479, 7
      %v2481 = vsub.s32 %v2378, %v2480
      %v2482 = vrot.slane %v2237, %v2481
      %v2483 = vsel %vm2383, %v2482, %v2478
      %v2484 = vlaneseq
      %v2485 = vshrl.u32 %v2484, 7
      %v2486 = vsub.s32 %v2385, %v2485
      %v2487 = vrot.slane %v2238, %v2486
      %v2488 = vsel %vm2390, %v2487, %v2483
      %v2489 = vlaneseq
      %v2490 = vshrl.u32 %v2489, 7
      %v2491 = vsub.s32 %v2392, %v2490
      %v2492 = vrot.slane %v2239, %v2491
      %v2493 = vsel %vm2397, %v2492, %v2488
      %v2494 = vlaneseq
      %v2495 = vshrl.u32 %v2494, 7
      %v2496 = vsub.s32 %v2399, %v2495
      %v2497 = vrot.slane %v2240, %v2496
      %v2498 = vsel %vm2404, %v2497, %v2493
      %v2499 = vlaneseq
      %v2500 = vshrl.u32 %v2499, 7
      %v2501 = vsub.s32 %v2406, %v2500
      %v2502 = vrot.slane %v2241, %v2501
      %v2503 = vsel %vm2411, %v2502, %v2498
      %v2504 = vlaneseq
      %v2505 = vshrl.u32 %v2504, 7
      %v2506 = vsub.s32 %v2413, %v2505
      %v2507 = vrot.slane %v2242, %v2506
      %v2508 = vsel %vm2418, %v2507, %v2503
      %v2509 = vlaneseq
      %v2510 = vshrl.u32 %v2509, 7
      %v2511 = vsub.s32 %v2420, %v2510
      %v2512 = vrot.slane %v2243, %v2511
      %v2513 = vsel %vm2425, %v2512, %v2508
      %v2514 = vlaneseq
      %v2515 = vshrl.u32 %v2514, 7
      %v2516 = vsub.s32 %v2427, %v2515
      %v2517 = vrot.slane %v2244, %v2516
      %v2518 = vsel %vm2432, %v2517, %v2513
      %v2519 = vlaneseq
      %v2520 = vshrl.u32 %v2519, 7
      %v2521 = vsub.s32 %v2434, %v2520
      %v2522 = vrot.slane %v2245, %v2521
      %v2523 = vsel %vm2439, %v2522, %v2518
      %v2524 = vlaneseq
      %v2525 = vshrl.u32 %v2524, 7
      %v2526 = vsub.s32 %v2441, %v2525
      %v2527 = vrot.slane %v2246, %v2526
      %v2528 = vsel %vm2446, %v2527, %v2523
      %v2529 = vlaneseq
      %v2530 = vshrl.u32 %v2529, 7
      %v2531 = vsub.s32 %v2448, %v2530
      %v2532 = vrot.slane %v2247, %v2531
      %v2533 = vsel %vm2453, %v2532, %v2528
      %v2534 = vlaneseq
      %v2535 = vshrl.u32 %v2534, 7
      %v2536 = vsub.s32 %v2345, %v2535
      %v2537 = vrot.slane %v2248, %v2536
      %v2538 = vlaneseq
      %v2539 = vshrl.u32 %v2538, 7
      %v2540 = vsub.s32 %v2350, %v2539
      %v2541 = vrot.slane %v2249, %v2540
      %v2542 = vsel %vm2355, %v2541, %v2537
      %v2543 = vlaneseq
      %v2544 = vshrl.u32 %v2543, 7
      %v2545 = vsub.s32 %v2357, %v2544
      %v2546 = vrot.slane %v2250, %v2545
      %v2547 = vsel %vm2362, %v2546, %v2542
      %v2548 = vlaneseq
      %v2549 = vshrl.u32 %v2548, 7
      %v2550 = vsub.s32 %v2364, %v2549
      %v2551 = vrot.slane %v2251, %v2550
      %v2552 = vsel %vm2369, %v2551, %v2547
      %v2553 = vlaneseq
      %v2554 = vshrl.u32 %v2553, 7
      %v2555 = vsub.s32 %v2371, %v2554
      %v2556 = vrot.slane %v2252, %v2555
      %v2557 = vsel %vm2376, %v2556, %v2552
      %v2558 = vlaneseq
      %v2559 = vshrl.u32 %v2558, 7
      %v2560 = vsub.s32 %v2378, %v2559
      %v2561 = vrot.slane %v2253, %v2560
      %v2562 = vsel %vm2383, %v2561, %v2557
      %v2563 = vlaneseq
      %v2564 = vshrl.u32 %v2563, 7
      %v2565 = vsub.s32 %v2385, %v2564
      %v2566 = vrot.slane %v2254, %v2565
      %v2567 = vsel %vm2390, %v2566, %v2562
      %v2568 = vlaneseq
      %v2569 = vshrl.u32 %v2568, 7
      %v2570 = vsub.s32 %v2392, %v2569
      %v2571 = vrot.slane %v2255, %v2570
      %v2572 = vsel %vm2397, %v2571, %v2567
      %v2573 = vlaneseq
      %v2574 = vshrl.u32 %v2573, 7
      %v2575 = vsub.s32 %v2399, %v2574
      %v2576 = vrot.slane %v2256, %v2575
      %v2577 = vsel %vm2404, %v2576, %v2572
      %v2578 = vlaneseq
      %v2579 = vshrl.u32 %v2578, 7
      %v2580 = vsub.s32 %v2406, %v2579
      %v2581 = vrot.slane %v2257, %v2580
      %v2582 = vsel %vm2411, %v2581, %v2577
      %v2583 = vlaneseq
      %v2584 = vshrl.u32 %v2583, 7
      %v2585 = vsub.s32 %v2413, %v2584
      %v2586 = vrot.slane %v2258, %v2585
      %v2587 = vsel %vm2418, %v2586, %v2582
      %v2588 = vlaneseq
      %v2589 = vshrl.u32 %v2588, 7
      %v2590 = vsub.s32 %v2420, %v2589
      %v2591 = vrot.slane %v2259, %v2590
      %v2592 = vsel %vm2425, %v2591, %v2587
      %v2593 = vlaneseq
      %v2594 = vshrl.u32 %v2593, 7
      %v2595 = vsub.s32 %v2427, %v2594
      %v2596 = vrot.slane %v2260, %v2595
      %v2597 = vsel %vm2432, %v2596, %v2592
      %v2598 = vlaneseq
      %v2599 = vshrl.u32 %v2598, 7
      %v2600 = vsub.s32 %v2434, %v2599
      %v2601 = vrot.slane %v2261, %v2600
      %v2602 = vsel %vm2439, %v2601, %v2597
      %v2603 = vlaneseq
      %v2604 = vshrl.u32 %v2603, 7
      %v2605 = vsub.s32 %v2441, %v2604
      %v2606 = vrot.slane %v2262, %v2605
      %v2607 = vsel %vm2446, %v2606, %v2602
      %v2608 = vlaneseq
      %v2609 = vshrl.u32 %v2608, 7
      %v2610 = vsub.s32 %v2448, %v2609
      %v2611 = vrot.slane %v2263, %v2610
      %v2612 = vsel %vm2453, %v2611, %v2607
      %v2613 = vlaneseq
      %v2614 = vshrl.u32 %v2613, 7
      %v2615 = vsub.s32 %v2345, %v2614
      %v2616 = vrot.slane %v2264, %v2615
      %v2617 = vlaneseq
      %v2618 = vshrl.u32 %v2617, 7
      %v2619 = vsub.s32 %v2350, %v2618
      %v2620 = vrot.slane %v2265, %v2619
      %v2621 = vsel %vm2355, %v2620, %v2616
      %v2622 = vlaneseq
      %v2623 = vshrl.u32 %v2622, 7
      %v2624 = vsub.s32 %v2357, %v2623
      %v2625 = vrot.slane %v2266, %v2624
      %v2626 = vsel %vm2362, %v2625, %v2621
      %v2627 = vlaneseq
      %v2628 = vshrl.u32 %v2627, 7
      %v2629 = vsub.s32 %v2364, %v2628
      %v2630 = vrot.slane %v2267, %v2629
      %v2631 = vsel %vm2369, %v2630, %v2626
      %v2632 = vlaneseq
      %v2633 = vshrl.u32 %v2632, 7
      %v2634 = vsub.s32 %v2371, %v2633
      %v2635 = vrot.slane %v2268, %v2634
      %v2636 = vsel %vm2376, %v2635, %v2631
      %v2637 = vlaneseq
      %v2638 = vshrl.u32 %v2637, 7
      %v2639 = vsub.s32 %v2378, %v2638
      %v2640 = vrot.slane %v2269, %v2639
      %v2641 = vsel %vm2383, %v2640, %v2636
      %v2642 = vlaneseq
      %v2643 = vshrl.u32 %v2642, 7
      %v2644 = vsub.s32 %v2385, %v2643
      %v2645 = vrot.slane %v2270, %v2644
      %v2646 = vsel %vm2390, %v2645, %v2641
      %v2647 = vlaneseq
      %v2648 = vshrl.u32 %v2647, 7
      %v2649 = vsub.s32 %v2392, %v2648
      %v2650 = vrot.slane %v2271, %v2649
      %v2651 = vsel %vm2397, %v2650, %v2646
      %v2652 = vlaneseq
      %v2653 = vshrl.u32 %v2652, 7
      %v2654 = vsub.s32 %v2399, %v2653
      %v2655 = vrot.slane %v2272, %v2654
      %v2656 = vsel %vm2404, %v2655, %v2651
      %v2657 = vlaneseq
      %v2658 = vshrl.u32 %v2657, 7
      %v2659 = vsub.s32 %v2406, %v2658
      %v2660 = vrot.slane %v2273, %v2659
      %v2661 = vsel %vm2411, %v2660, %v2656
      %v2662 = vlaneseq
      %v2663 = vshrl.u32 %v2662, 7
      %v2664 = vsub.s32 %v2413, %v2663
      %v2665 = vrot.slane %v2274, %v2664
      %v2666 = vsel %vm2418, %v2665, %v2661
      %v2667 = vlaneseq
      %v2668 = vshrl.u32 %v2667, 7
      %v2669 = vsub.s32 %v2420, %v2668
      %v2670 = vrot.slane %v2275, %v2669
      %v2671 = vsel %vm2425, %v2670, %v2666
      %v2672 = vlaneseq
      %v2673 = vshrl.u32 %v2672, 7
      %v2674 = vsub.s32 %v2427, %v2673
      %v2675 = vrot.slane %v2276, %v2674
      %v2676 = vsel %vm2432, %v2675, %v2671
      %v2677 = vlaneseq
      %v2678 = vshrl.u32 %v2677, 7
      %v2679 = vsub.s32 %v2434, %v2678
      %v2680 = vrot.slane %v2277, %v2679
      %v2681 = vsel %vm2439, %v2680, %v2676
      %v2682 = vlaneseq
      %v2683 = vshrl.u32 %v2682, 7
      %v2684 = vsub.s32 %v2441, %v2683
      %v2685 = vrot.slane %v2278, %v2684
      %v2686 = vsel %vm2446, %v2685, %v2681
      %v2687 = vlaneseq
      %v2688 = vshrl.u32 %v2687, 7
      %v2689 = vsub.s32 %v2448, %v2688
      %v2690 = vrot.slane %v2279, %v2689
      %v2691 = vsel %vm2453, %v2690, %v2686
      %vm2692 = vcmask 1042434
      %v2693 = vsel %vm2692, %v2454, %v2454
      %vm2694 = vcmask 1043459
      %v2695 = vsel %vm2694, %v2454, %v2693
      %vm2696 = vcmask 1044484
      %v2697 = vsel %vm2696, %v2454, %v2695
      %vm2698 = vcmask 1045509
      %v2699 = vsel %vm2698, %v2454, %v2697
      %vm2700 = vcmask 1046534
      %v2701 = vsel %vm2700, %v2454, %v2699
      %vm2702 = vcmask 1047559
      %v2703 = vsel %vm2702, %v2454, %v2701
      %v2704 = vsel %vm2692, %v2533, %v2533
      %v2705 = vsel %vm2694, %v2533, %v2704
      %v2706 = vsel %vm2696, %v2533, %v2705
      %v2707 = vsel %vm2698, %v2533, %v2706
      %v2708 = vsel %vm2700, %v2533, %v2707
      %v2709 = vsel %vm2702, %v2533, %v2708
      %v2710 = vsel %vm2692, %v2612, %v2612
      %v2711 = vsel %vm2694, %v2612, %v2710
      %v2712 = vsel %vm2696, %v2612, %v2711
      %v2713 = vsel %vm2698, %v2612, %v2712
      %v2714 = vsel %vm2700, %v2612, %v2713
      %v2715 = vsel %vm2702, %v2612, %v2714
      %v2716 = vsel %vm2692, %v2691, %v2691
      %v2717 = vsel %vm2694, %v2691, %v2716
      %v2718 = vsel %vm2696, %v2691, %v2717
      %v2719 = vsel %vm2698, %v2691, %v2718
      %v2720 = vsel %vm2700, %v2691, %v2719
      %v2721 = vsel %vm2702, %v2691, %v2720
      %v2726 = vmul.f32 %v2165, %v2703
      %v2727 = vmul.f32 %v2167, %v2709
      %v2728 = vmul.f32 %v2169, %v2703
      %v2729 = vmul.f32 %v2171, %v2709
      %v2730 = vmul.f32 %v2208, %v2715
      %v2731 = vmul.f32 %v2210, %v2721
      %v2732 = vmul.f32 %v2212, %v2715
      %v2733 = vmul.f32 %v2214, %v2721
      %v2734 = vld [vmem:[%s4] sm:$0xf]
      %v2735 = vld [vmem:[%s4 + $0x4] sm:$0xf]
      %v2736 = vld [vmem:[%s4 + $0x8] sm:$0xf]
      %v2737 = vld [vmem:[%s4 + $0xc] sm:$0xf]
      %v2738 = vpack.c.bf16 %v2728, %v2726
      %v2739 = vpack.c.bf16 %v2729, %v2727
      %v2740 = vpack.c.bf16 %v2732, %v2730
      %v2741 = vpack.c.bf16 %v2733, %v2731
      %v2742 = vld [vmem:[%s5] sm:$0xff]
      %v2743 = vld [vmem:[%s5 + $0x8] sm:$0xff]
      %v2744 = vld [vmem:[%s5 + $0x10] sm:$0xff]
      %v2745 = vld [vmem:[%s5 + $0x18] sm:$0xff]
      %2747 = vset.pattern.permute.xlu0 0
      %2748 = vperm.xlu0 %2747, %v2742
      %v2749 = vpop.permute.xlu0 %2748
      %2752 = vset.pattern.permute.xlu0 0
      %2753 = vperm.xlu0 %2752, %v2743
      %v2754 = vpop.permute.xlu0 %2753
      %2757 = vset.pattern.permute.xlu0 0
      %2758 = vperm.xlu0 %2757, %v2744
      %v2759 = vpop.permute.xlu0 %2758
      %2762 = vset.pattern.permute.xlu0 0
      %2763 = vperm.xlu0 %2762, %v2745
      %v2764 = vpop.permute.xlu0 %2763
      %v2770 = vunpack.c.l.b16 %v2734
      %v2771 = vunpack.c.l.b16 %v2735
      %v2772 = vunpack.c.l.b16 %v2736
      %v2773 = vunpack.c.l.b16 %v2737
      %v2774 = vpack.c.b16 %v2771, %v2770
      %v2775 = vpack.c.b16 %v2773, %v2772
      %v2777 = vsel %vm627, %v2774, 0
      %v2780 = vsel %vm627, %v2775, 0
      %2782 = vmatprep.subr.bf16.mxu0 %v2739
      %2783 = vmatpush1.bf16.msra.mxu0 %v2738
      %2784 = vmatprep.subr.bf16.mxu0 %v2741
      %2785 = vmatpush1.bf16.msra.mxu0 %v2740
      %2786 = vmatprep.subr.bf16.mxu0 0
      %2787 = vmatpush1.bf16.msra.mxu0 0
      %2788 = vmatprep.subr.bf16.mxu0 0
      %2789 = vmatpush1.bf16.msra.mxu0 0
      %2790 = vmatprep.subr.bf16.mxu0 0
      %2791 = vmatpush1.bf16.msra.mxu0 0
      %2792 = vmatprep.subr.bf16.mxu0 0
      %2793 = vmatpush1.bf16.msra.mxu0 0
      %2794 = vmatprep.subr.bf16.mxu0 0
      %2795 = vmatpush1.bf16.msra.mxu0 0
      %2796 = vmatprep.subr.bf16.mxu0 0
      %2797 = vmatpush1.bf16.msra.mxu0 0
      %2798 = vmatprep.subr.bf16.mxu0 0
      %2799 = vmatpush1.bf16.msra.mxu0 0
      %2800 = vmatprep.subr.bf16.mxu0 0
      %2801 = vmatpush1.bf16.msra.mxu0 0
      %2802 = vmatprep.subr.bf16.mxu0 0
      %2803 = vmatpush1.bf16.msra.mxu0 0
      %2804 = vmatprep.subr.bf16.mxu0 0
      %2805 = vmatpush1.bf16.msra.mxu0 0
      %2806 = vmatprep.subr.bf16.mxu0 0
      %2807 = vmatpush1.bf16.msra.mxu0 0
      %2808 = vmatprep.subr.bf16.mxu0 0
      %2809 = vmatpush1.bf16.msra.mxu0 0
      %2810 = vmatprep.subr.bf16.mxu0 0
      %2811 = vmatpush1.bf16.msra.mxu0 0
      %2812 = vmatprep.subr.bf16.mxu0 0
      %2813 = vmatpush1.bf16.msra.mxu0 0
      %2814 = vmatprep.mubr.bf16.mxu0 0
      %2815 = vmatmul.mubr.bf16.gmra.mrb[0].mxu0 %v2777
      %v2816 = vpop.f32.mrb[0].mxu0
      %v2817 = vadd.f32 %v2749, %v2816
      %v2818 = vpop.f32.mrb[0].mxu0
      %v2819 = vadd.f32 %v2749, %v2818
      %v2820 = vpop.f32.mrb[0].mxu0
      %v2821 = vadd.f32 %v2754, %v2820
      %v2822 = vpop.f32.mrb[0].mxu0
      %v2823 = vadd.f32 %v2754, %v2822
      %2824 = vmatprep.mubr.bf16.mxu0 0
      %2825 = vmatmul.mubr.bf16.gmra.mrb[0].mxu0 %v2780
      %v2826 = vpop.f32.mrb[0].mxu0
      %v2827 = vadd.f32 %v2759, %v2826
      %v2828 = vpop.f32.mrb[0].mxu0
      %v2829 = vadd.f32 %v2759, %v2828
      %v2830 = vpop.f32.mrb[0].mxu0
      %v2831 = vadd.f32 %v2764, %v2830
      %v2832 = vpop.f32.mrb[0].mxu0
      %v2833 = vadd.f32 %v2764, %v2832
      %2834 = vdwg.mxu0
      %v2835 = vadd.f32 %v2817, %v501
      %v2836 = vadd.f32 %v2819, %v502
      %v2837 = vadd.f32 %v2821, %v503
      %v2838 = vadd.f32 %v2823, %v504
      %v2839 = vadd.f32 %v2827, %v505
      %v2840 = vadd.f32 %v2829, %v506
      %v2841 = vadd.f32 %v2831, %v507
      %v2842 = vadd.f32 %v2833, %v508
      %v2843 = vld [vmem:[%s6] sm:$0xff]
      %v2844 = vld [vmem:[%s6 + $0x8] sm:$0xff]
      %v2845 = vld [vmem:[%s6 + $0x10] sm:$0xff]
      %v2846 = vld [vmem:[%s6 + $0x18] sm:$0xff]
      %2848 = vset.pattern.permute.xlu0 0
      %2849 = vperm.xlu0 %2848, %v2843
      %v2850 = vpop.permute.xlu0 %2849
      %2853 = vset.pattern.permute.xlu0 0
      %2854 = vperm.xlu0 %2853, %v2844
      %v2855 = vpop.permute.xlu0 %2854
      %2858 = vset.pattern.permute.xlu0 0
      %2859 = vperm.xlu0 %2858, %v2845
      %v2860 = vpop.permute.xlu0 %2859
      %2863 = vset.pattern.permute.xlu0 0
      %2864 = vperm.xlu0 %2863, %v2846
      %v2865 = vpop.permute.xlu0 %2864
      %v2867 = vmul.f32 %v2835, %v2850
      %v2868 = vmul.f32 %v2836, %v2850
      %v2869 = vmul.f32 %v2837, %v2855
      %v2870 = vmul.f32 %v2838, %v2855
      %v2871 = vmul.f32 %v2839, %v2860
      %v2872 = vmul.f32 %v2840, %v2860
      %v2873 = vmul.f32 %v2841, %v2865
      %v2874 = vmul.f32 %v2842, %v2865
      %v2875 = vld [vmem:[%s7] sm:$0xff]
      %v2876 = vld [vmem:[%s7 + $0x8] sm:$0xff]
      %v2877 = vld [vmem:[%s7 + $0x10] sm:$0xff]
      %v2878 = vld [vmem:[%s7 + $0x18] sm:$0xff]
      %2880 = vset.pattern.permute.xlu0 0
      %2881 = vperm.xlu0 %2880, %v2875
      %v2882 = vpop.permute.xlu0 %2881
      %2885 = vset.pattern.permute.xlu0 0
      %2886 = vperm.xlu0 %2885, %v2876
      %v2887 = vpop.permute.xlu0 %2886
      %2890 = vset.pattern.permute.xlu0 0
      %2891 = vperm.xlu0 %2890, %v2877
      %v2892 = vpop.permute.xlu0 %2891
      %2895 = vset.pattern.permute.xlu0 0
      %2896 = vperm.xlu0 %2895, %v2878
      %v2897 = vpop.permute.xlu0 %2896
      %v2899 = vadd.f32 %v2867, %v2882
      %v2900 = vadd.f32 %v2868, %v2882
      %v2901 = vadd.f32 %v2869, %v2887
      %v2902 = vadd.f32 %v2870, %v2887
      %v2903 = vadd.f32 %v2871, %v2892
      %v2904 = vadd.f32 %v2872, %v2892
      %v2905 = vadd.f32 %v2873, %v2897
      %v2906 = vadd.f32 %v2874, %v2897
      %v2907 = vld [vmem:[%s10] sm:$0xf]
      %v2908 = vld [vmem:[%s10 + $0x4] sm:$0xf]
      %v2909 = vld [vmem:[%s10 + $0x8] sm:$0xf]
      %v2910 = vld [vmem:[%s10 + $0xc] sm:$0xf]
      %v2911 = vld [vmem:[%s10 + $0x10] sm:$0xf]
      %v2912 = vld [vmem:[%s10 + $0x14] sm:$0xf]
      %v2913 = vld [vmem:[%s10 + $0x18] sm:$0xf]
      %v2914 = vld [vmem:[%s10 + $0x1c] sm:$0xf]
      %v2915 = vpack.c.bf16 %v2901, %v2899
      %v2916 = vpack.c.bf16 %v2902, %v2900
      %v2917 = vpack.c.bf16 %v2905, %v2903
      %v2918 = vpack.c.bf16 %v2906, %v2904
      %v2919 = vld [vmem:[%s11] sm:$0xff]
      %v2920 = vld [vmem:[%s11 + $0x8] sm:$0xff]
      %v2921 = vld [vmem:[%s11 + $0x10] sm:$0xff]
      %v2922 = vld [vmem:[%s11 + $0x18] sm:$0xff]
      %v2923 = vld [vmem:[%s11 + $0x20] sm:$0xff]
      %v2924 = vld [vmem:[%s11 + $0x28] sm:$0xff]
      %v2925 = vld [vmem:[%s11 + $0x30] sm:$0xff]
      %v2926 = vld [vmem:[%s11 + $0x38] sm:$0xff]
      %2928 = vset.pattern.permute.xlu0 0
      %2929 = vperm.xlu0 %2928, %v2919
      %v2930 = vpop.permute.xlu0 %2929
      %2933 = vset.pattern.permute.xlu0 0
      %2934 = vperm.xlu0 %2933, %v2920
      %v2935 = vpop.permute.xlu0 %2934
      %2938 = vset.pattern.permute.xlu0 0
      %2939 = vperm.xlu0 %2938, %v2921
      %v2940 = vpop.permute.xlu0 %2939
      %2943 = vset.pattern.permute.xlu0 0
      %2944 = vperm.xlu0 %2943, %v2922
      %v2945 = vpop.permute.xlu0 %2944
      %2948 = vset.pattern.permute.xlu0 0
      %2949 = vperm.xlu0 %2948, %v2923
      %v2950 = vpop.permute.xlu0 %2949
      %2953 = vset.pattern.permute.xlu0 0
      %2954 = vperm.xlu0 %2953, %v2924
      %v2955 = vpop.permute.xlu0 %2954
      %2958 = vset.pattern.permute.xlu0 0
      %2959 = vperm.xlu0 %2958, %v2925
      %v2960 = vpop.permute.xlu0 %2959
      %2963 = vset.pattern.permute.xlu0 0
      %2964 = vperm.xlu0 %2963, %v2926
      %v2965 = vpop.permute.xlu0 %2964
      %v2975 = vunpack.c.l.b16 %v2907
      %v2976 = vunpack.c.l.b16 %v2908
      %v2977 = vunpack.c.l.b16 %v2909
      %v2978 = vunpack.c.l.b16 %v2910
      %v2979 = vunpack.c.l.b16 %v2911
      %v2980 = vunpack.c.l.b16 %v2912
      %v2981 = vunpack.c.l.b16 %v2913
      %v2982 = vunpack.c.l.b16 %v2914
      %v2983 = vpack.c.b16 %v2976, %v2975
      %v2984 = vpack.c.b16 %v2978, %v2977
      %v2985 = vpack.c.b16 %v2980, %v2979
      %v2986 = vpack.c.b16 %v2982, %v2981
      %v2988 = vsel %vm627, %v2983, 0
      %v2991 = vsel %vm627, %v2984, 0
      %v2994 = vsel %vm627, %v2985, 0
      %v2997 = vsel %vm627, %v2986, 0
      %2999 = vmatprep.subr.bf16.mxu0 %v2916
      %3000 = vmatpush1.bf16.msra.mxu0 %v2915
      %3001 = vmatprep.subr.bf16.mxu0 %v2918
      %3002 = vmatpush1.bf16.msra.mxu0 %v2917
      %3003 = vmatprep.subr.bf16.mxu0 0
      %3004 = vmatpush1.bf16.msra.mxu0 0
      %3005 = vmatprep.subr.bf16.mxu0 0
      %3006 = vmatpush1.bf16.msra.mxu0 0
      %3007 = vmatprep.subr.bf16.mxu0 0
      %3008 = vmatpush1.bf16.msra.mxu0 0
      %3009 = vmatprep.subr.bf16.mxu0 0
      %3010 = vmatpush1.bf16.msra.mxu0 0
      %3011 = vmatprep.subr.bf16.mxu0 0
      %3012 = vmatpush1.bf16.msra.mxu0 0
      %3013 = vmatprep.subr.bf16.mxu0 0
      %3014 = vmatpush1.bf16.msra.mxu0 0
      %3015 = vmatprep.subr.bf16.mxu0 0
      %3016 = vmatpush1.bf16.msra.mxu0 0
      %3017 = vmatprep.subr.bf16.mxu0 0
      %3018 = vmatpush1.bf16.msra.mxu0 0
      %3019 = vmatprep.subr.bf16.mxu0 0
      %3020 = vmatpush1.bf16.msra.mxu0 0
      %3021 = vmatprep.subr.bf16.mxu0 0
      %3022 = vmatpush1.bf16.msra.mxu0 0
      %3023 = vmatprep.subr.bf16.mxu0 0
      %3024 = vmatpush1.bf16.msra.mxu0 0
      %3025 = vmatprep.subr.bf16.mxu0 0
      %3026 = vmatpush1.bf16.msra.mxu0 0
      %3027 = vmatprep.subr.bf16.mxu0 0
      %3028 = vmatpush1.bf16.msra.mxu0 0
      %3029 = vmatprep.subr.bf16.mxu0 0
      %3030 = vmatpush1.bf16.msra.mxu0 0
      %3031 = vmatprep.mubr.bf16.mxu0 0
      %3032 = vmatmul.mubr.bf16.gmra.mrb[0].mxu0 %v2988
      %v3033 = vpop.f32.mrb[0].mxu0
      %v3034 = vadd.f32 %v2930, %v3033
      %v3035 = vpop.f32.mrb[0].mxu0
      %v3036 = vadd.f32 %v2930, %v3035
      %v3037 = vpop.f32.mrb[0].mxu0
      %v3038 = vadd.f32 %v2935, %v3037
      %v3039 = vpop.f32.mrb[0].mxu0
      %v3040 = vadd.f32 %v2935, %v3039
      %3041 = vmatprep.mubr.bf16.mxu0 0
      %3042 = vmatmul.mubr.bf16.gmra.mrb[0].mxu0 %v2991
      %v3043 = vpop.f32.mrb[0].mxu0
      %v3044 = vadd.f32 %v2940, %v3043
      %v3045 = vpop.f32.mrb[0].mxu0
      %v3046 = vadd.f32 %v2940, %v3045
      %v3047 = vpop.f32.mrb[0].mxu0
      %v3048 = vadd.f32 %v2945, %v3047
      %v3049 = vpop.f32.mrb[0].mxu0
      %v3050 = vadd.f32 %v2945, %v3049
      %3051 = vmatprep.mubr.bf16.mxu0 0
      %3052 = vmatmul.mubr.bf16.gmra.mrb[0].mxu0 %v2994
      %v3053 = vpop.f32.mrb[0].mxu0
      %v3054 = vadd.f32 %v2950, %v3053
      %v3055 = vpop.f32.mrb[0].mxu0
      %v3056 = vadd.f32 %v2950, %v3055
      %v3057 = vpop.f32.mrb[0].mxu0
      %v3058 = vadd.f32 %v2955, %v3057
      %v3059 = vpop.f32.mrb[0].mxu0
      %v3060 = vadd.f32 %v2955, %v3059
      %3061 = vmatprep.mubr.bf16.mxu0 0
      %3062 = vmatmul.mubr.bf16.gmra.mrb[0].mxu0 %v2997
      %v3063 = vpop.f32.mrb[0].mxu0
      %v3064 = vadd.f32 %v2960, %v3063
      %v3065 = vpop.f32.mrb[0].mxu0
      %v3066 = vadd.f32 %v2960, %v3065
      %v3067 = vpop.f32.mrb[0].mxu0
      %v3068 = vadd.f32 %v2965, %v3067
      %v3069 = vpop.f32.mrb[0].mxu0
      %v3070 = vadd.f32 %v2965, %v3069
      %3071 = vdwg.mxu0
      %v3072 = vmax.f32 %v3034, 0.0
      %v3073 = vmax.f32 %v3036, 0.0
      %v3074 = vmax.f32 %v3038, 0.0
      %v3075 = vmax.f32 %v3040, 0.0
      %v3076 = vmax.f32 %v3044, 0.0
      %v3077 = vmax.f32 %v3046, 0.0
      %v3078 = vmax.f32 %v3048, 0.0
      %v3079 = vmax.f32 %v3050, 0.0
      %v3080 = vmax.f32 %v3054, 0.0
      %v3081 = vmax.f32 %v3056, 0.0
      %v3082 = vmax.f32 %v3058, 0.0
      %v3083 = vmax.f32 %v3060, 0.0
      %v3084 = vmax.f32 %v3064, 0.0
      %v3085 = vmax.f32 %v3066, 0.0
      %v3086 = vmax.f32 %v3068, 0.0
      %v3087 = vmax.f32 %v3070, 0.0
      %v3088 = vld [vmem:[%s12] sm:$0xf]
      %v3089 = vld [vmem:[%s12 + $0x4] sm:$0xf]
      %v3090 = vld [vmem:[%s12 + $0x8] sm:$0xf]
      %v3091 = vld [vmem:[%s12 + $0xc] sm:$0xf]
      %v3092 = vpack.c.bf16 %v3074, %v3072
      %v3093 = vpack.c.bf16 %v3075, %v3073
      %v3094 = vpack.c.bf16 %v3078, %v3076
      %v3095 = vpack.c.bf16 %v3079, %v3077
      %v3096 = vpack.c.bf16 %v3082, %v3080
      %v3097 = vpack.c.bf16 %v3083, %v3081
      %v3098 = vpack.c.bf16 %v3086, %v3084
      %v3099 = vpack.c.bf16 %v3087, %v3085
      %v3100 = vld [vmem:[%s13] sm:$0xff]
      %v3101 = vld [vmem:[%s13 + $0x8] sm:$0xff]
      %v3102 = vld [vmem:[%s13 + $0x10] sm:$0xff]
      %v3103 = vld [vmem:[%s13 + $0x18] sm:$0xff]
      %3105 = vset.pattern.permute.xlu0 0
      %3106 = vperm.xlu0 %3105, %v3100
      %v3107 = vpop.permute.xlu0 %3106
      %3110 = vset.pattern.permute.xlu0 0
      %3111 = vperm.xlu0 %3110, %v3101
      %v3112 = vpop.permute.xlu0 %3111
      %3115 = vset.pattern.permute.xlu0 0
      %3116 = vperm.xlu0 %3115, %v3102
      %v3117 = vpop.permute.xlu0 %3116
      %3120 = vset.pattern.permute.xlu0 0
      %3121 = vperm.xlu0 %3120, %v3103
      %v3122 = vpop.permute.xlu0 %3121
      %v3128 = vunpack.c.l.b16 %v3088
      %v3129 = vunpack.c.l.b16 %v3089
      %v3130 = vunpack.c.l.b16 %v3090
      %v3131 = vunpack.c.l.b16 %v3091
      %v3132 = vpack.c.b16 %v3129, %v3128
      %v3133 = vpack.c.b16 %v3131, %v3130
      %vm3134 = vcmask 523264
      %v3136 = vsel %vm3134, %v3132, 0
      %v3139 = vsel %vm3134, %v3133, 0
      %3141 = vmatprep.subr.bf16.mxu0 %v3093
      %3142 = vmatpush1.bf16.msra.mxu0 %v3092
      %3143 = vmatprep.subr.bf16.mxu0 %v3095
      %3144 = vmatpush1.bf16.msra.mxu0 %v3094
      %3145 = vmatprep.subr.bf16.mxu0 %v3097
      %3146 = vmatpush1.bf16.msra.mxu0 %v3096
      %3147 = vmatprep.subr.bf16.mxu0 %v3099
      %3148 = vmatpush1.bf16.msra.mxu0 %v3098
      %3149 = vmatprep.subr.bf16.mxu0 0
      %3150 = vmatpush1.bf16.msra.mxu0 0
      %3151 = vmatprep.subr.bf16.mxu0 0
      %3152 = vmatpush1.bf16.msra.mxu0 0
      %3153 = vmatprep.subr.bf16.mxu0 0
      %3154 = vmatpush1.bf16.msra.mxu0 0
      %3155 = vmatprep.subr.bf16.mxu0 0
      %3156 = vmatpush1.bf16.msra.mxu0 0
      %3157 = vmatprep.subr.bf16.mxu0 0
      %3158 = vmatpush1.bf16.msra.mxu0 0
      %3159 = vmatprep.subr.bf16.mxu0 0
      %3160 = vmatpush1.bf16.msra.mxu0 0
      %3161 = vmatprep.subr.bf16.mxu0 0
      %3162 = vmatpush1.bf16.msra.mxu0 0
      %3163 = vmatprep.subr.bf16.mxu0 0
      %3164 = vmatpush1.bf16.msra.mxu0 0
      %3165 = vmatprep.subr.bf16.mxu0 0
      %3166 = vmatpush1.bf16.msra.mxu0 0
      %3167 = vmatprep.subr.bf16.mxu0 0
      %3168 = vmatpush1.bf16.msra.mxu0 0
      %3169 = vmatprep.subr.bf16.mxu0 0
      %3170 = vmatpush1.bf16.msra.mxu0 0
      %3171 = vmatprep.subr.bf16.mxu0 0
      %3172 = vmatpush1.bf16.msra.mxu0 0
      %3173 = vmatprep.mubr.bf16.mxu0 0
      %3174 = vmatmul.mubr.bf16.gmra.mrb[0].mxu0 %v3136
      %v3175 = vpop.f32.mrb[0].mxu0
      %v3176 = vadd.f32 %v3107, %v3175
      %v3177 = vpop.f32.mrb[0].mxu0
      %v3178 = vadd.f32 %v3107, %v3177
      %v3179 = vpop.f32.mrb[0].mxu0
      %v3180 = vadd.f32 %v3112, %v3179
      %v3181 = vpop.f32.mrb[0].mxu0
      %v3182 = vadd.f32 %v3112, %v3181
      %3183 = vmatprep.mubr.bf16.mxu0 0
      %3184 = vmatmul.mubr.bf16.gmra.mrb[0].mxu0 %v3139
      %v3185 = vpop.f32.mrb[0].mxu0
      %v3186 = vadd.f32 %v3117, %v3185
      %v3187 = vpop.f32.mrb[0].mxu0
      %v3188 = vadd.f32 %v3117, %v3187
      %v3189 = vpop.f32.mrb[0].mxu0
      %v3190 = vadd.f32 %v3122, %v3189
      %v3191 = vpop.f32.mrb[0].mxu0
      %v3192 = vadd.f32 %v3122, %v3191
      %3193 = vdwg.mxu0
      %v3194 = vld [vmem:[%s8] sm:$0xff]
      %v3195 = vld [vmem:[%s8 + $0x8] sm:$0xff]
      %v3196 = vld [vmem:[%s8 + $0x10] sm:$0xff]
      %v3197 = vld [vmem:[%s8 + $0x18] sm:$0xff]
      %3199 = vset.pattern.permute.xlu0 0
      %3200 = vperm.xlu0 %3199, %v3194
      %v3201 = vpop.permute.xlu0 %3200
      %3204 = vset.pattern.permute.xlu0 0
      %3205 = vperm.xlu0 %3204, %v3195
      %v3206 = vpop.permute.xlu0 %3205
      %3209 = vset.pattern.permute.xlu0 0
      %3210 = vperm.xlu0 %3209, %v3196
      %v3211 = vpop.permute.xlu0 %3210
      %3214 = vset.pattern.permute.xlu0 0
      %3215 = vperm.xlu0 %3214, %v3197
      %v3216 = vpop.permute.xlu0 %3215
      %v3218 = vmul.f32 %v2835, %v3201
      %v3219 = vmul.f32 %v2836, %v3201
      %v3220 = vmul.f32 %v2837, %v3206
      %v3221 = vmul.f32 %v2838, %v3206
      %v3222 = vmul.f32 %v2839, %v3211
      %v3223 = vmul.f32 %v2840, %v3211
      %v3224 = vmul.f32 %v2841, %v3216
      %v3225 = vmul.f32 %v2842, %v3216
      %v3226 = vld [vmem:[%s9] sm:$0xff]
      %v3227 = vld [vmem:[%s9 + $0x8] sm:$0xff]
      %v3228 = vld [vmem:[%s9 + $0x10] sm:$0xff]
      %v3229 = vld [vmem:[%s9 + $0x18] sm:$0xff]
      %3231 = vset.pattern.permute.xlu0 0
      %3232 = vperm.xlu0 %3231, %v3226
      %v3233 = vpop.permute.xlu0 %3232
      %3236 = vset.pattern.permute.xlu0 0
      %3237 = vperm.xlu0 %3236, %v3227
      %v3238 = vpop.permute.xlu0 %3237
      %3241 = vset.pattern.permute.xlu0 0
      %3242 = vperm.xlu0 %3241, %v3228
      %v3243 = vpop.permute.xlu0 %3242
      %3246 = vset.pattern.permute.xlu0 0
      %3247 = vperm.xlu0 %3246, %v3229
      %v3248 = vpop.permute.xlu0 %3247
      %v3250 = vadd.f32 %v3218, %v3233
      %v3251 = vadd.f32 %v3219, %v3233
      %v3252 = vadd.f32 %v3220, %v3238
      %v3253 = vadd.f32 %v3221, %v3238
      %v3254 = vadd.f32 %v3222, %v3243
      %v3255 = vadd.f32 %v3223, %v3243
      %v3256 = vadd.f32 %v3224, %v3248
      %v3257 = vadd.f32 %v3225, %v3248
      %v3258 = vadd.f32 %v3176, %v3250
      %v3259 = vadd.f32 %v3178, %v3251
      %v3260 = vadd.f32 %v3180, %v3252
      %v3261 = vadd.f32 %v3182, %v3253
      %v3262 = vadd.f32 %v3186, %v3254
      %v3263 = vadd.f32 %v3188, %v3255
      %v3264 = vadd.f32 %v3190, %v3256
      %v3265 = vadd.f32 %v3192, %v3257
      %3266 = vst [vmem:[%s467] sm:$0xff] %v3258
      %3267 = vst [vmem:[%s467 + $0x8] sm:$0xff] %v3259
      %3268 = vst [vmem:[%s467 + $0x10] sm:$0xff] %v3260
      %3269 = vst [vmem:[%s467 + $0x18] sm:$0xff] %v3261
      %3270 = vst [vmem:[%s467 + $0x20] sm:$0xff] %v3262
      %3271 = vst [vmem:[%s467 + $0x28] sm:$0xff] %v3263
      %3272 = vst [vmem:[%s467 + $0x30] sm:$0xff] %v3264
      %3273 = vst [vmem:[%s467 + $0x38] sm:$0xff] %v3265
      %p3274 = scmp.lt.s32.totalorder %s25, 1
      %s3275 = scalar_select %p3274, %s25, 1
      %s3276 = smul.addr %s3275, 8
      %s3277 = smul.addr %s3276, 8
      %s3278 = scalar_lea.vmem %s14, %s3277
      // Predicated region
      $region77: #{memory_attention_forward.1} parent=75 // pred_check
        %p3279 = pneg %p342
      $region78: #{memory_attention_forward.1} parent=75 // pred_check_branch
        %3281 = sbr.rel (%p3279) target = $region80
      $region79: #{memory_attention_forward.1} parent=75 // pred_region
        _
      $region80: #{memory_attention_forward.1} parent=75 // pred_fallthru
        _
    $region76: #{memory_attention_forward.1} parent=5 // pred_fallthru
      _
    %p3282 = scmp.le.s32.totalorder 2, %s20
    // Predicated region
    $region81: #{memory_attention_forward.1} parent=5 // pred_check
      %p3283 = pneg %p3282
    $region82: #{memory_attention_forward.1} parent=5 // pred_check_branch
      %3285 = sbr.rel (%p3283) target = $region84
    $region83: #{memory_attention_forward.1} parent=5 // pred_region
      %s3286 = ssub.s32 %s20, 2
      // Predicated region
      $region85: #{memory_attention_forward.1} parent=83 // pred_check
        %p3287 = pneg %p348
      $region86: #{memory_attention_forward.1} parent=83 // pred_check_branch
        %3289 = sbr.rel (%p3287) target = $region88
      $region87: #{memory_attention_forward.1} parent=83 // pred_region
        %p3290 = scmp.lt.s32.totalorder %s26, 1
        %s3291 = scalar_select %p3290, %s26, 1
        %s3292 = smul.addr %s3291, 8
        %s3293 = smul.addr %s3292, 8
        %s3294 = scalar_lea.vmem %s14, %s3293
      $region88: #{memory_attention_forward.1} parent=83 // pred_fallthru
        _
    $region84: #{memory_attention_forward.1} parent=5 // pred_fallthru
      _
  $region6: #{memory_attention_forward.1} parent=0 // loop_footer
    %s24 = sadd.s32 1, %s20
  $region7: #{memory_attention_forward.1} parent=0 // loop_footer_branch
    %19 = sbr.rel target = $region3
  $region8: #{memory_attention_forward.1} parent=0 // loop_exit
    _

</llo_original>
